<compile_context>
chip_gen: v5e
topology: v5e:2x2
jax: 0.10.0
libtpu: 0.0.40
codegen_flags: <defaults>
</compile_context>

<pallas_src>
import jax
import jax.numpy as jnp
import numpy as np
from jax.experimental import pallas as pl
from jax.experimental.pallas import tpu as pltpu

VIEW_H, VIEW_W = 16, 16
DEPTH = 6
POSE = 12
CELL = 128
LK = VIEW_H * VIEW_W          # 256 key/value positions
LQ = DEPTH * VIEW_H * VIEW_W  # 1536 query positions
TQ = 512                      # query tile (LQ // TQ = 3 tiles)


# ---------------------------------------------------------------------------
# Pallas kernels
# ---------------------------------------------------------------------------
def prep_kernel(code_o_ref, kw1_ref, kb1_ref, kw2_ref, kb2_ref,
                wk_ref, bk_ref, codeq_ref, w1c_ref, b1_ref,
                kproj_ref, codeh_ref):
    """One-shot constant preamble:
       K = (emb_net_k(code_o)) @ Wk + bk                (256, 128), bf16
       code_h = code_q @ W1_code + b1                   (1536, 256), f32
    """
    h = jnp.maximum(
        jnp.dot(code_o_ref[...], kw1_ref[...], preferred_element_type=jnp.float32)
        + kb1_ref[...], 0.0)
    emb_o = jnp.dot(h, kw2_ref[...], preferred_element_type=jnp.float32) + kb2_ref[...]
    kproj = jnp.dot(emb_o, wk_ref[...], preferred_element_type=jnp.float32) + bk_ref[...]
    kproj_ref[...] = kproj.astype(kproj_ref.dtype)
    codeh_ref[...] = (jnp.dot(codeq_ref[...], w1c_ref[...],
                              preferred_element_type=jnp.float32) + b1_ref[...])


def cstrn_kernel(poseh_ref, codeh_ref, kproj_ref, vc_ref,
                 wpack_ref, wvo_ref, cpack_ref, out_ref):
    """Per (batch b, query-tile q, observation n) step:
       fused [Q | act-hidden] projection -> act mask -> single-head attention
       (q_w2, Wo, scale and constant projections all folded offline),
       accumulated over n into the resident output block; sigmoid fusion ('ocm')
       applied on the last observation."""
    n = pl.program_id(2)

    # ---- emb_net_q layer 1 (code part + bias precomputed, pose part precomputed) ----
    h1 = jnp.maximum(codeh_ref[...] + poseh_ref[...], 0.0)            # (TQ, 256) f32

    # ---- fused projection: [q_pre_scaled | act_hidden_pre] = h1 @ [Wq'|A1'] + b ----
    proj = jnp.dot(h1.astype(jnp.bfloat16), wpack_ref[...],
                   preferred_element_type=jnp.float32)                 # (TQ, 192)
    proj = proj + cpack_ref[0:1, :192]
    q = proj[:, :CELL]                                                 # (TQ, 128), 1/sqrt(128) folded in
    ah = jnp.maximum(proj[:, CELL:], 0.0)                              # (TQ, 64)

    # ---- act_net mask: sigmoid(ah @ aw2 + ab2) ----
    aw2 = cpack_ref[3:4, :64]                                          # (1, 64)
    ab2 = cpack_ref[4:5, 0:1]                                          # (1, 1)
    mask = jax.nn.sigmoid(jnp.sum(ah * aw2, axis=-1, keepdims=True) + ab2)   # (TQ, 1)

    # ---- single-head attention (K precomputed, Wo folded into V) ----
    scores = jax.lax.dot_general(q.astype(jnp.bfloat16), kproj_ref[...],
                                 (((1,), (1,)), ((), ())),
                                 preferred_element_type=jnp.float32)   # (TQ, LK)
    scores = scores - jnp.max(scores, axis=-1, keepdims=True)
    p = jnp.exp(scores)
    psum = jnp.sum(p, axis=-1, keepdims=True)

    vp = jnp.dot(vc_ref[...], wvo_ref[...],
                 preferred_element_type=jnp.float32)                   # (LK, 128)
    vp = vp + cpack_ref[1:2, :CELL]                                    # + bvo
    attn = jnp.dot(p.astype(jnp.bfloat16), vp.astype(jnp.bfloat16),
                   preferred_element_type=jnp.float32)                 # (TQ, 128)
    attn = attn * pl.reciprocal(psum, approx=True) + cpack_ref[2:3, :CELL]   # /denom + bo

    contrib = mask * attn

    @pl.when(n == 0)
    def _():
        out_ref[...] = contrib

    @pl.when(n > 0)
    def _():
        out_ref[...] += contrib

    @pl.when(n == pl.num_programs(2) - 1)
    def _():
        out_ref[...] = jax.nn.sigmoid(out_ref[...])   # fusion_type == 'ocm'


# ---------------------------------------------------------------------------
# Glue (coordinate grids, pose transform, parameter setup)
# ---------------------------------------------------------------------------
def make_codes():
    ho = jnp.linspace(-1.0, 1.0, VIEW_H)
    wo = jnp.linspace(-1.0, 1.0, VIEW_W)
    hg, wg = jnp.meshgrid(ho, wo, indexing="ij")
    code_o = jnp.stack([hg, wg], axis=-1).reshape(-1, 2).astype(jnp.float32)   # (256, 2)

    dq = jnp.linspace(0.0, 1.0, DEPTH)
    dg, hg2, wg2 = jnp.meshgrid(dq, ho, wo, indexing="ij")
    code_q = jnp.stack([dg, hg2, wg2], axis=-1).reshape(-1, 3).astype(jnp.float32)  # (1536, 3)
    return code_o, code_q


def transform_pose(pose_o, pose_q):
    # TODO(synk): 4x4 affine inverse has no clean Pallas equivalent; kept as JAX glue
    # (matches the torch.no_grad() pose preprocessing).
    B, N, _ = pose_o.shape
    aff = jnp.array([0.0, 0.0, 0.0, 1.0], jnp.float32)
    mtx_o = jnp.concatenate([pose_o, jnp.broadcast_to(aff, (B, N, 4))], axis=2)
    mtx_o = mtx_o.reshape(B, N, 4, 4)
    mtx_q = jnp.concatenate([pose_q, jnp.broadcast_to(aff, (B, 1, 4))], axis=2)
    mtx_q = jnp.broadcast_to(mtx_q.reshape(B, 1, 4, 4), (B, N, 4, 4))
    mtx_t = jnp.matmul(jnp.linalg.inv(mtx_o), mtx_q)
    return mtx_t.reshape(B, N, 16)[..., :12]


def make_params(key):
    ks = jax.random.split(key, 10)

    def lin(k, fin, fout):
        kw, kb = jax.random.split(k)
        w = jax.random.normal(kw, (fin, fout), jnp.float32) / jnp.sqrt(float(fin))
        b = jax.random.normal(kb, (1, fout), jnp.float32) * 0.01
        return w, b

    p = {}
    p["k_w1"], p["k_b1"] = lin(ks[0], 2, 128)         # emb_net_k
    p["k_w2"], p["k_b2"] = lin(ks[1], 128, CELL)
    p["q_w1"], p["q_b1"] = lin(ks[2], 3 + POSE, 256)  # emb_net_q
    p["q_w2"], p["q_b2"] = lin(ks[3], 256, CELL)
    p["a_w1"], p["a_b1"] = lin(ks[4], CELL, 64)       # act_net
    p["a_w2"], p["a_b2"] = lin(ks[5], 64, 1)
    p["wq"], p["bq"] = lin(ks[6], CELL, CELL)         # MHA (num_heads=1)
    p["wk"], p["bk"] = lin(ks[7], CELL, CELL)
    p["wv"], p["bv"] = lin(ks[8], CELL, CELL)
    p["wo"], p["bo"] = lin(ks[9], CELL, CELL)
    return p


# ---------------------------------------------------------------------------
# Wrapper
# ---------------------------------------------------------------------------
def cstrn_forward(view_cell, pose_o, pose_q, params):
    B, N = pose_o.shape[0], pose_o.shape[1]
    code_o, code_q = make_codes()

    w1p = params["q_w1"][:POSE]    # (12, 256)  pose part of Linear(15,256)
    w1c = params["q_w1"][POSE:]    # (3, 256)   code part of Linear(15,256)

    # ---- constant preamble (one-shot Pallas kernel): K projection + code_h ----
    vmem = pl.BlockSpec(memory_space=pltpu.MemorySpace.VMEM)
    kproj, code_h = pl.pallas_call(
        prep_kernel,
        out_shape=(jax.ShapeDtypeStruct((LK, CELL), jnp.bfloat16),
                   jax.ShapeDtypeStruct((LQ, 256), jnp.float32)),
        in_specs=[vmem] * 10,
        out_specs=(vmem, vmem),
    )(code_o, params["k_w1"], params["k_b1"], params["k_w2"], params["k_b2"],
      params["wk"], params["bk"], code_q, w1c, params["q_b1"])

    # ---- offline weight folds (tiny matmuls, done once in the wrapper) ----
    scale = 1.0 / float(np.sqrt(CELL))
    with jax.default_matmul_precision("highest"):
        wq_fold = (params["q_w2"] @ params["wq"]) * scale              # (256, 128)
        bq_fold = (params["q_b2"] @ params["wq"] + params["bq"]) * scale
        a1_fold = params["q_w2"] @ params["a_w1"]                      # (256, 64)
        ab1_fold = params["q_b2"] @ params["a_w1"] + params["a_b1"]
        wvo = params["wv"] @ params["wo"]                              # (128, 128)
        bvo = params["bv"] @ params["wo"]                              # (1, 128)

        pose_trans = transform_pose(pose_o, pose_q)                    # (B, N, 12)
        pose_h = jnp.einsum("bnp,pf->bnf", pose_trans, w1p)            # (B, N, 256)
    pose_h = pose_h.reshape(B, N, 1, 256)

    w_pack = jnp.concatenate([wq_fold, a1_fold], axis=1).astype(jnp.bfloat16)   # (256, 192)
    wvo_bf = wvo.astype(jnp.bfloat16)

    # small constants packed into one (8, 256) row block
    cpack = jnp.zeros((8, 256), jnp.float32)
    cpack = cpack.at[0, :192].set(jnp.concatenate([bq_fold[0], ab1_fold[0]]))
    cpack = cpack.at[1, :CELL].set(bvo[0])
    cpack = cpack.at[2, :CELL].set(params["bo"][0])
    cpack = cpack.at[3, :64].set(params["a_w2"][:, 0])
    cpack = cpack.at[4, 0].set(params["a_b2"][0, 0])

    # NCHW -> (B, N, HW, C), bf16 (matmul operand / halves DMA traffic)
    vc = view_cell.transpose(0, 2, 3, 1).reshape(B, N, LK, CELL).astype(jnp.bfloat16)

    nq = LQ // TQ
    const2 = lambda b, q, n: (0, 0)
    in_specs = [
        pl.BlockSpec((None, None, 1, 256), lambda b, q, n: (b, n, 0, 0)),    # pose_h
        pl.BlockSpec((TQ, 256), lambda b, q, n: (q, 0)),                     # code_h
        pl.BlockSpec((LK, CELL), const2),                                    # K (bf16)
        pl.BlockSpec((None, None, LK, CELL), lambda b, q, n: (b, n, 0, 0)),  # view_cell (bf16)
        pl.BlockSpec((256, 192), const2),                                    # [Wq'|A1'] (bf16)
        pl.BlockSpec((CELL, CELL), const2),                                  # Wvo (bf16)
        pl.BlockSpec((8, 256), const2),                                      # packed small biases
    ]
    out_spec = pl.BlockSpec((None, TQ, CELL), lambda b, q, n: (b, q, 0))

    fused = pl.pallas_call(
        cstrn_kernel,
        out_shape=jax.ShapeDtypeStruct((B, LQ, CELL), jnp.float32),
        grid_spec=pltpu.PrefetchScalarGridSpec(
            num_scalar_prefetch=0,
            grid=(B, nq, N),
            in_specs=in_specs,
            out_specs=out_spec,
        ),
        compiler_params=pltpu.CompilerParams(
            dimension_semantics=("parallel", "parallel", "arbitrary"),
            vmem_limit_bytes=32 * 1024 * 1024,
        ),
    )(pose_h, code_h, kproj, vc, w_pack, wvo_bf, cpack)

    # (B, LQ, C) -> (B, C, LQ) -> (B, C, D, H, W)   (matches PyTorch output)
    return fused.transpose(0, 2, 1).reshape(B, CELL, DEPTH, VIEW_H, VIEW_W)


# ---------------------------------------------------------------------------
# Pure-JAX reference (mirrors the PyTorch forward)
# ---------------------------------------------------------------------------
def reference_forward(view_cell, pose_o, pose_q, params):
    B, N = pose_o.shape[0], pose_o.shape[1]
    code_o, code_q = make_codes()
    with jax.default_matmul_precision("highest"):
        emb_o = jax.nn.relu(code_o @ params["k_w1"] + params["k_b1"])
        emb_o = emb_o @ params["k_w2"] + params["k_b2"]                          # (LK, C)

        pose_trans = transform_pose(pose_o, pose_q).reshape(B * N, POSE)
        pose_tile = jnp.repeat(pose_trans[:, None, :], LQ, axis=1)
        x = jnp.concatenate(
            [pose_tile, jnp.broadcast_to(code_q, (B * N, LQ, 3))], axis=2)       # (BN,LQ,15)
        h = jax.nn.relu(x @ params["q_w1"] + params["q_b1"])
        emb_q = h @ params["q_w2"] + params["q_b2"]                              # (BN,LQ,C)

        ah = jax.nn.relu(emb_q @ params["a_w1"] + params["a_b1"])
        mask = jax.nn.sigmoid(ah @ params["a_w2"] + params["a_b2"])              # (BN,LQ,1)

        vc = view_cell.transpose(0, 2, 3, 1).reshape(B * N, LK, CELL)
        q = emb_q @ params["wq"] + params["bq"]
        k = emb_o @ params["wk"] + params["bk"]
        v = vc @ params["wv"] + params["bv"]
        scores = jnp.einsum("bqc,kc->bqk", q, k) / jnp.sqrt(float(CELL))
        p = jax.nn.softmax(scores, axis=-1)
        attn = jnp.einsum("bqk,bkc->bqc", p, v) @ params["wo"] + params["bo"]

        out = (mask * attn).reshape(B, N, LQ, CELL).sum(axis=1)
        out = jax.nn.sigmoid(out)                                                # 'ocm' fusion
    return out.transpose(0, 2, 1).reshape(B, CELL, DEPTH, VIEW_H, VIEW_W)


# ---------------------------------------------------------------------------
if __name__ == "__main__":
    key = jax.random.PRNGKey(0)
    B, N = 2, 2

    params = make_params(jax.random.fold_in(key, 1))

    kv, kp1, kp2 = jax.random.split(jax.random.fold_in(key, 2), 3)
    view_cell = jax.random.normal(kv, (B * N, CELL, VIEW_H, VIEW_W), jnp.float32)

    def rand_pose(k, lead):
        kr, kt = jax.random.split(k)
        A = jax.random.normal(kr, lead + (3, 3), jnp.float32)
        Q, _ = jnp.linalg.qr(A)
        t = jax.random.normal(kt, lead + (3, 1), jnp.float32) * 0.5
        return jnp.concatenate([Q, t], axis=-1).reshape(lead + (12,))

    pose_o = rand_pose(kp1, (B, N))   # (2, 2, 12)
    pose_q = rand_pose(kp2, (B, 1))   # (2, 1, 12)

    out = cstrn_forward(view_cell, pose_o, pose_q, params)
    out = jax.block_until_ready(out)
    assert out.shape == (B, CELL, DEPTH, VIEW_H, VIEW_W)

    ref = reference_forward(view_cell, pose_o, pose_q, params)
    np.testing.assert_allclose(np.asarray(out), np.asarray(ref), atol=3e-2, rtol=3e-2)

    print("KERNEL_OK")
</pallas_src>

<mosaic_0001>
module attributes {stable_mosaic.version = 11 : i64} {
  func.func @prep_kernel(%arg0: memref<256x2xf32, #tpu.memory_space<vmem>>, %arg1: memref<2x128xf32, #tpu.memory_space<vmem>>, %arg2: memref<1x128xf32, #tpu.memory_space<vmem>>, %arg3: memref<128x128xf32, #tpu.memory_space<vmem>>, %arg4: memref<1x128xf32, #tpu.memory_space<vmem>>, %arg5: memref<128x128xf32, #tpu.memory_space<vmem>>, %arg6: memref<1x128xf32, #tpu.memory_space<vmem>>, %arg7: memref<1536x3xf32, #tpu.memory_space<vmem>>, %arg8: memref<3x256xf32, #tpu.memory_space<vmem>>, %arg9: memref<1x256xf32, #tpu.memory_space<vmem>>, %arg10: memref<256x128xbf16, #tpu.memory_space<vmem>>, %arg11: memref<1536x256xf32, #tpu.memory_space<vmem>>) attributes {dimension_semantics = [], scalar_prefetch = 0 : i64, scratch_operands = 0 : i64, tpu.core_type = #tpu.core_type<tc>} {
    %c0 = arith.constant 0 : index
    %c0_0 = arith.constant 0 : index
    %0 = vector.load %arg0[%c0, %c0_0] : memref<256x2xf32, #tpu.memory_space<vmem>>, vector<256x2xf32>
    %c0_1 = arith.constant 0 : index
    %c0_2 = arith.constant 0 : index
    %1 = vector.load %arg1[%c0_1, %c0_2] : memref<2x128xf32, #tpu.memory_space<vmem>>, vector<2x128xf32>
    %cst = arith.constant dense<0.000000e+00> : vector<256x128xf32>
    %2 = tpu.matmul %0, %1, %cst {dimension_numbers = #tpu.dot_dimension_numbers<[1], [0], [0], [1], [0, 0, 1, 1], [], []>} : vector<256x2xf32>, vector<2x128xf32>, vector<256x128xf32> -> vector<256x128xf32>
    %c0_3 = arith.constant 0 : index
    %c0_4 = arith.constant 0 : index
    %3 = vector.load %arg2[%c0_3, %c0_4] : memref<1x128xf32, #tpu.memory_space<vmem>>, vector<1x128xf32>
    %4 = vector.broadcast %3 : vector<1x128xf32> to vector<256x128xf32>
    %5 = arith.addf %2, %4 : vector<256x128xf32>
    %cst_5 = arith.constant 0.000000e+00 : f32
    %6 = vector.broadcast %cst_5 : f32 to vector<256x128xf32>
    %7 = arith.maximumf %5, %6 : vector<256x128xf32>
    %c0_6 = arith.constant 0 : index
    %c0_7 = arith.constant 0 : index
    %8 = vector.load %arg3[%c0_6, %c0_7] : memref<128x128xf32, #tpu.memory_space<vmem>>, vector<128x128xf32>
    %cst_8 = arith.constant dense<0.000000e+00> : vector<256x128xf32>
    %9 = tpu.matmul %7, %8, %cst_8 {dimension_numbers = #tpu.dot_dimension_numbers<[1], [0], [0], [1], [0, 0, 1, 1], [], []>} : vector<256x128xf32>, vector<128x128xf32>, vector<256x128xf32> -> vector<256x128xf32>
    %c0_9 = arith.constant 0 : index
    %c0_10 = arith.constant 0 : index
    %10 = vector.load %arg4[%c0_9, %c0_10] : memref<1x128xf32, #tpu.memory_space<vmem>>, vector<1x128xf32>
    %11 = vector.broadcast %10 : vector<1x128xf32> to vector<256x128xf32>
    %12 = arith.addf %9, %11 : vector<256x128xf32>
    %c0_11 = arith.constant 0 : index
    %c0_12 = arith.constant 0 : index
    %13 = vector.load %arg5[%c0_11, %c0_12] : memref<128x128xf32, #tpu.memory_space<vmem>>, vector<128x128xf32>
    %cst_13 = arith.constant dense<0.000000e+00> : vector<256x128xf32>
    %14 = tpu.matmul %12, %13, %cst_13 {dimension_numbers = #tpu.dot_dimension_numbers<[1], [0], [0], [1], [0, 0, 1, 1], [], []>} : vector<256x128xf32>, vector<128x128xf32>, vector<256x128xf32> -> vector<256x128xf32>
    %c0_14 = arith.constant 0 : index
    %c0_15 = arith.constant 0 : index
    %15 = vector.load %arg6[%c0_14, %c0_15] : memref<1x128xf32, #tpu.memory_space<vmem>>, vector<1x128xf32>
    %16 = vector.broadcast %15 : vector<1x128xf32> to vector<256x128xf32>
    %17 = arith.addf %14, %16 : vector<256x128xf32>
    %18 = arith.truncf %17 : vector<256x128xf32> to vector<256x128xbf16>
    %c0_16 = arith.constant 0 : index
    %c0_17 = arith.constant 0 : index
    %19 = vector.load %arg10[%c0_16, %c0_17] : memref<256x128xbf16, #tpu.memory_space<vmem>>, vector<256x128xbf16>
    tpu.vector_store %arg10[%c0_16, %c0_17], %18 {strides = array<i32>} : memref<256x128xbf16, #tpu.memory_space<vmem>>, vector<256x128xbf16>,
    %c0_18 = arith.constant 0 : index
    %c0_19 = arith.constant 0 : index
    %20 = vector.load %arg7[%c0_18, %c0_19] : memref<1536x3xf32, #tpu.memory_space<vmem>>, vector<1536x3xf32>
    %c0_20 = arith.constant 0 : index
    %c0_21 = arith.constant 0 : index
    %21 = vector.load %arg8[%c0_20, %c0_21] : memref<3x256xf32, #tpu.memory_space<vmem>>, vector<3x256xf32>
    %cst_22 = arith.constant dense<0.000000e+00> : vector<1536x256xf32>
    %22 = tpu.matmul %20, %21, %cst_22 {dimension_numbers = #tpu.dot_dimension_numbers<[1], [0], [0], [1], [0, 0, 1, 1], [], []>} : vector<1536x3xf32>, vector<3x256xf32>, vector<1536x256xf32> -> vector<1536x256xf32>
    %c0_23 = arith.constant 0 : index
    %c0_24 = arith.constant 0 : index
    %23 = vector.load %arg9[%c0_23, %c0_24] : memref<1x256xf32, #tpu.memory_space<vmem>>, vector<1x256xf32>
    %24 = vector.broadcast %23 : vector<1x256xf32> to vector<1536x256xf32>
    %25 = arith.addf %22, %24 : vector<1536x256xf32>
    %c0_25 = arith.constant 0 : index
    %c0_26 = arith.constant 0 : index
    %26 = vector.load %arg11[%c0_25, %c0_26] : memref<1536x256xf32, #tpu.memory_space<vmem>>, vector<1536x256xf32>
    tpu.vector_store %arg11[%c0_25, %c0_26], %25 {strides = array<i32>} : memref<1536x256xf32, #tpu.memory_space<vmem>>, vector<1536x256xf32>,
    return
  }
}

</mosaic_0001>

<llo_original>
// kernel: tpu_custom_call.1
$region0: #{tpu_custom_call.1}
  #allocation0 [shape = 'u32[]', space=smem, size = 0x4, offset = 0x4, fixed_abs, tag = 'smem constant byte address 0x4 - core index']
  #allocation1 [shape = 'u32[72,128]{1,0:T(1,128)}', space=vmem, size = 0x9000, scoped, tag = 'internal scratch']
  %s0 = inlined_call_operand.vmem [shape: f32[256,2], index: 0, kind: input, shape index: {}]
  %s1 = inlined_call_operand.hbm [shape: f32[2,128], index: 1, kind: input, shape index: {}]
  %s2 = inlined_call_operand.hbm [shape: f32[1,128], index: 2, kind: input, shape index: {}]
  %s3 = inlined_call_operand.hbm [shape: f32[128,128], index: 3, kind: input, shape index: {}]
  %s4 = inlined_call_operand.hbm [shape: f32[1,128], index: 4, kind: input, shape index: {}]
  %s5 = inlined_call_operand.hbm [shape: f32[128,128], index: 5, kind: input, shape index: {}]
  %s6 = inlined_call_operand.hbm [shape: f32[1,128], index: 6, kind: input, shape index: {}]
  %s7 = inlined_call_operand.vmem [shape: f32[1536,3], index: 7, kind: input, shape index: {}]
  %s8 = inlined_call_operand.hbm [shape: f32[3,256], index: 8, kind: input, shape index: {}]
  %s9 = inlined_call_operand.hbm [shape: f32[1,256], index: 9, kind: input, shape index: {}]
  %s10 = inlined_call_operand.hbm [shape: bf16[256,128], index: 10, kind: output, shape index: {0}]
  %s11 = inlined_call_operand.hbm [shape: f32[1536,256], index: 11, kind: output, shape index: {1}]
  %12 = xla_tuple %s10, %s11
  %s13 = sld [smem:[#allocation0]]
  $region90: #{tpu_custom_call.1} parent=0
    _
  %s15 = ssub.s32 1, %s13
  %s16 = scalar_select 0, %s15, %s13
  $region1: #{tpu_custom_call.1} parent=0
    #allocation2 [shape = 'u8[1024]{0}', space=vmem, size = 0x400, scoped, tag = 'input window, operand 1, single buffered']
    #allocation3 [shape = 's32[1]{0}', space=sflag, size = 0x4, scoped, tag = 'scoped memory for tpu_custom_call.1']
    #allocation4 [shape = 's32[1]{0}', space=sflag, size = 0x4, scoped, tag = 'scoped memory for tpu_custom_call.1']
    #allocation5 [shape = 'u8[512]{0}', space=vmem, size = 0x400, scoped, tag = 'input window, operand 2, single buffered']
    #allocation6 [shape = 's32[1]{0}', space=sflag, size = 0x4, scoped, tag = 'scoped memory for tpu_custom_call.1']
    #allocation7 [shape = 'u8[65536]{0}', space=vmem, size = 0x10000, scoped, tag = 'input window, operand 3, single buffered']
    #allocation8 [shape = 'u8[512]{0}', space=vmem, size = 0x400, scoped, tag = 'input window, operand 4, single buffered']
    #allocation9 [shape = 's32[1]{0}', space=sflag, size = 0x4, scoped, tag = 'scoped memory for tpu_custom_call.1']
    #allocation10 [shape = 'u8[65536]{0}', space=vmem, size = 0x10000, scoped, tag = 'input window, operand 5, single buffered']
    #allocation11 [shape = 'u8[512]{0}', space=vmem, size = 0x400, scoped, tag = 'input window, operand 6, single buffered']
    #allocation12 [shape = 's32[1]{0}', space=sflag, size = 0x4, scoped, tag = 'scoped memory for tpu_custom_call.1']
    #allocation13 [shape = 'u8[4096]{0}', space=vmem, size = 0x1000, scoped, tag = 'input window, operand 8, single buffered']
    #allocation14 [shape = 'u8[1024]{0}', space=vmem, size = 0x400, scoped, tag = 'input window, operand 9, single buffered']
    #allocation15 [shape = 's32[1]{0}', space=sflag, size = 0x4, scoped, tag = 'scoped memory for tpu_custom_call.1']
    #allocation16 [shape = 'u8[65536]{0}', space=vmem, size = 0x10000, scoped, tag = 'output window, operand 0, single buffered']
    #allocation17 [shape = 'u8[1572864]{0}', space=vmem, size = 0x180000, scoped, tag = 'output window, operand 1, single buffered']
    #allocation18 [shape = 's32[1]{0}', space=sflag, size = 0x4, scoped, tag = 'scoped memory for tpu_custom_call.1']
    %17 = vsyncpa [#allocation3], 0
    %18 = vsyncpa [#allocation6], 0
    %19 = vsyncpa [#allocation9], 0
    %20 = vsyncpa [#allocation12], 0
    %21 = vsyncpa [#allocation15], 0
    %22 = vsyncpa [#allocation4], 0
    %23 = vsyncpa [#allocation18], 0
    // Predicated region
    $region2: #{tpu_custom_call.1} parent=1 // pred_check
      _
    $region3: #{tpu_custom_call.1} parent=1 // pred_check_branch
      %25 = sbr.rel (0) target = $region5
    $region4: #{tpu_custom_call.1} parent=1 // pred_region
      _
    $region5: #{tpu_custom_call.1} parent=1 // pred_fallthru
      _
    // Predicated region
    $region6: #{tpu_custom_call.1} parent=1 // pred_check
      _
    $region7: #{tpu_custom_call.1} parent=1 // pred_check_branch
      %27 = sbr.rel (0) target = $region9
    $region8: #{tpu_custom_call.1} parent=1 // pred_region
      %29 = vsyncadd [#allocation3], 0
      %s31 = sshll.u32 %s1, 4
      %s32 = int_to_ptr.hbm [resolvable:$true] %s31
      %s33 = sshll.u32 [#allocation2], 4
      %s34 = int_to_ptr.vmem [resolvable:$true] %s33
      %36 = dma.hbm_to_vmem [thread:$0]  %s32, 32, %s34, [#allocation3]
    $region9: #{tpu_custom_call.1} parent=1 // pred_fallthru
      _
    // Predicated region
    $region10: #{tpu_custom_call.1} parent=1 // pred_check
      _
    $region11: #{tpu_custom_call.1} parent=1 // pred_check_branch
      %38 = sbr.rel (0) target = $region13
    $region12: #{tpu_custom_call.1} parent=1 // pred_region
      %40 = vsyncadd [#allocation6], 0
      %s42 = sshll.u32 %s2, 4
      %s43 = int_to_ptr.hbm [resolvable:$true] %s42
      %s44 = sshll.u32 [#allocation5], 4
      %s45 = int_to_ptr.vmem [resolvable:$true] %s44
      %47 = dma.hbm_to_vmem [thread:$0]  %s43, 16, %s45, [#allocation6]
    $region13: #{tpu_custom_call.1} parent=1 // pred_fallthru
      _
    // Predicated region
    $region14: #{tpu_custom_call.1} parent=1 // pred_check
      _
    $region15: #{tpu_custom_call.1} parent=1 // pred_check_branch
      %49 = sbr.rel (0) target = $region17
    $region16: #{tpu_custom_call.1} parent=1 // pred_region
      %51 = vsyncadd [#allocation6], 0
      %s52 = sshll.u32 %s3, 4
      %s53 = int_to_ptr.hbm [resolvable:$true] %s52
      %s54 = sshll.u32 [#allocation7], 4
      %s55 = int_to_ptr.vmem [resolvable:$true] %s54
      %60 = dma.hbm_to_vmem [thread:$0]  %s53, 2048, %s55, [#allocation6], 128, 128, 8
    $region17: #{tpu_custom_call.1} parent=1 // pred_fallthru
      _
    // Predicated region
    $region18: #{tpu_custom_call.1} parent=1 // pred_check
      _
    $region19: #{tpu_custom_call.1} parent=1 // pred_check_branch
      %62 = sbr.rel (0) target = $region21
    $region20: #{tpu_custom_call.1} parent=1 // pred_region
      %64 = vsyncadd [#allocation9], 0
      %s66 = sshll.u32 %s4, 4
      %s67 = int_to_ptr.hbm [resolvable:$true] %s66
      %s68 = sshll.u32 [#allocation8], 4
      %s69 = int_to_ptr.vmem [resolvable:$true] %s68
      %71 = dma.hbm_to_vmem [thread:$0]  %s67, 16, %s69, [#allocation9]
    $region21: #{tpu_custom_call.1} parent=1 // pred_fallthru
      _
    // Predicated region
    $region22: #{tpu_custom_call.1} parent=1 // pred_check
      _
    $region23: #{tpu_custom_call.1} parent=1 // pred_check_branch
      %73 = sbr.rel (0) target = $region25
    $region24: #{tpu_custom_call.1} parent=1 // pred_region
      %75 = vsyncadd [#allocation9], 0
      %s76 = sshll.u32 %s5, 4
      %s77 = int_to_ptr.hbm [resolvable:$true] %s76
      %s78 = sshll.u32 [#allocation10], 4
      %s79 = int_to_ptr.vmem [resolvable:$true] %s78
      %84 = dma.hbm_to_vmem [thread:$0]  %s77, 2048, %s79, [#allocation9], 128, 128, 8
    $region25: #{tpu_custom_call.1} parent=1 // pred_fallthru
      _
    // Predicated region
    $region26: #{tpu_custom_call.1} parent=1 // pred_check
      _
    $region27: #{tpu_custom_call.1} parent=1 // pred_check_branch
      %86 = sbr.rel (0) target = $region29
    $region28: #{tpu_custom_call.1} parent=1 // pred_region
      %88 = vsyncadd [#allocation12], 0
      %s90 = sshll.u32 %s6, 4
      %s91 = int_to_ptr.hbm [resolvable:$true] %s90
      %s92 = sshll.u32 [#allocation11], 4
      %s93 = int_to_ptr.vmem [resolvable:$true] %s92
      %95 = dma.hbm_to_vmem [thread:$0]  %s91, 16, %s93, [#allocation12]
    $region29: #{tpu_custom_call.1} parent=1 // pred_fallthru
      _
    // Predicated region
    $region30: #{tpu_custom_call.1} parent=1 // pred_check
      _
    $region31: #{tpu_custom_call.1} parent=1 // pred_check_branch
      %97 = sbr.rel (0) target = $region33
    $region32: #{tpu_custom_call.1} parent=1 // pred_region
      _
    $region33: #{tpu_custom_call.1} parent=1 // pred_fallthru
      _
    // Predicated region
    $region34: #{tpu_custom_call.1} parent=1 // pred_check
      _
    $region35: #{tpu_custom_call.1} parent=1 // pred_check_branch
      %99 = sbr.rel (0) target = $region37
    $region36: #{tpu_custom_call.1} parent=1 // pred_region
      %101 = vsyncadd [#allocation12], 0
      %s103 = sshll.u32 %s8, 4
      %s104 = int_to_ptr.hbm [resolvable:$true] %s103
      %s105 = sshll.u32 [#allocation13], 4
      %s106 = int_to_ptr.vmem [resolvable:$true] %s105
      %108 = dma.hbm_to_vmem [thread:$0]  %s104, 128, %s106, [#allocation12]
    $region37: #{tpu_custom_call.1} parent=1 // pred_fallthru
      _
    // Predicated region
    $region38: #{tpu_custom_call.1} parent=1 // pred_check
      _
    $region39: #{tpu_custom_call.1} parent=1 // pred_check_branch
      %110 = sbr.rel (0) target = $region41
    $region40: #{tpu_custom_call.1} parent=1 // pred_region
      %112 = vsyncadd [#allocation15], 0
      %s114 = sshll.u32 %s9, 4
      %s115 = int_to_ptr.hbm [resolvable:$true] %s114
      %s116 = sshll.u32 [#allocation14], 4
      %s117 = int_to_ptr.vmem [resolvable:$true] %s116
      %119 = dma.hbm_to_vmem [thread:$0]  %s115, 32, %s117, [#allocation15]
    $region41: #{tpu_custom_call.1} parent=1 // pred_fallthru
      _
    // Predicated region
    $region42: #{tpu_custom_call.1} parent=1 // pred_check
      _
    $region43: #{tpu_custom_call.1} parent=1 // pred_check_branch
      %121 = sbr.rel (0) target = $region45
    $region44: #{tpu_custom_call.1} parent=1 // pred_region
      %123 = dma.done [#allocation3], 32
    $region45: #{tpu_custom_call.1} parent=1 // pred_fallthru
      _
    // Predicated region
    $region46: #{tpu_custom_call.1} parent=1 // pred_check
      _
    $region47: #{tpu_custom_call.1} parent=1 // pred_check_branch
      %125 = sbr.rel (0) target = $region49
    $region48: #{tpu_custom_call.1} parent=1 // pred_region
      %127 = dma.done [#allocation6], 16
    $region49: #{tpu_custom_call.1} parent=1 // pred_fallthru
      _
    // Predicated region
    $region50: #{tpu_custom_call.1} parent=1 // pred_check
      _
    $region51: #{tpu_custom_call.1} parent=1 // pred_check_branch
      %129 = sbr.rel (0) target = $region53
    $region52: #{tpu_custom_call.1} parent=1 // pred_region
      %131 = dma.done [#allocation6], 2048
    $region53: #{tpu_custom_call.1} parent=1 // pred_fallthru
      _
    // Predicated region
    $region54: #{tpu_custom_call.1} parent=1 // pred_check
      _
    $region55: #{tpu_custom_call.1} parent=1 // pred_check_branch
      %133 = sbr.rel (0) target = $region57
    $region56: #{tpu_custom_call.1} parent=1 // pred_region
      %135 = dma.done [#allocation9], 16
    $region57: #{tpu_custom_call.1} parent=1 // pred_fallthru
      _
    // Predicated region
    $region58: #{tpu_custom_call.1} parent=1 // pred_check
      _
    $region59: #{tpu_custom_call.1} parent=1 // pred_check_branch
      %137 = sbr.rel (0) target = $region61
    $region60: #{tpu_custom_call.1} parent=1 // pred_region
      %139 = dma.done [#allocation9], 2048
    $region61: #{tpu_custom_call.1} parent=1 // pred_fallthru
      _
    // Predicated region
    $region62: #{tpu_custom_call.1} parent=1 // pred_check
      _
    $region63: #{tpu_custom_call.1} parent=1 // pred_check_branch
      %141 = sbr.rel (0) target = $region65
    $region64: #{tpu_custom_call.1} parent=1 // pred_region
      %143 = dma.done [#allocation12], 16
    $region65: #{tpu_custom_call.1} parent=1 // pred_fallthru
      _
    // Predicated region
    $region66: #{tpu_custom_call.1} parent=1 // pred_check
      _
    $region67: #{tpu_custom_call.1} parent=1 // pred_check_branch
      %145 = sbr.rel (0) target = $region69
    $region68: #{tpu_custom_call.1} parent=1 // pred_region
      %147 = dma.done [#allocation12], 128
    $region69: #{tpu_custom_call.1} parent=1 // pred_fallthru
      _
    // Predicated region
    $region70: #{tpu_custom_call.1} parent=1 // pred_check
      _
    $region71: #{tpu_custom_call.1} parent=1 // pred_check_branch
      %149 = sbr.rel (0) target = $region73
    $region72: #{tpu_custom_call.1} parent=1 // pred_region
      %151 = dma.done [#allocation15], 32
    $region73: #{tpu_custom_call.1} parent=1 // pred_fallthru
      _
    %v152 = vld [vmem:[%s0] sm:$0xff]
    %v153 = vld [vmem:[%s0 + $0x8] sm:$0xff]
    %v154 = vld [vmem:[%s0 + $0x10] sm:$0xff]
    %v155 = vld [vmem:[%s0 + $0x18] sm:$0xff]
    %v156 = vld [vmem:[%s0 + $0x20] sm:$0xff]
    %v157 = vld [vmem:[%s0 + $0x28] sm:$0xff]
    %v158 = vld [vmem:[%s0 + $0x30] sm:$0xff]
    %v159 = vld [vmem:[%s0 + $0x38] sm:$0xff]
    %v160 = vld [vmem:[%s0 + $0x40] sm:$0xff]
    %v161 = vld [vmem:[%s0 + $0x48] sm:$0xff]
    %v162 = vld [vmem:[%s0 + $0x50] sm:$0xff]
    %v163 = vld [vmem:[%s0 + $0x58] sm:$0xff]
    %v164 = vld [vmem:[%s0 + $0x60] sm:$0xff]
    %v165 = vld [vmem:[%s0 + $0x68] sm:$0xff]
    %v166 = vld [vmem:[%s0 + $0x70] sm:$0xff]
    %v167 = vld [vmem:[%s0 + $0x78] sm:$0xff]
    %v168 = vld [vmem:[%s0 + $0x80] sm:$0xff]
    %v169 = vld [vmem:[%s0 + $0x88] sm:$0xff]
    %v170 = vld [vmem:[%s0 + $0x90] sm:$0xff]
    %v171 = vld [vmem:[%s0 + $0x98] sm:$0xff]
    %v172 = vld [vmem:[%s0 + $0xa0] sm:$0xff]
    %v173 = vld [vmem:[%s0 + $0xa8] sm:$0xff]
    %v174 = vld [vmem:[%s0 + $0xb0] sm:$0xff]
    %v175 = vld [vmem:[%s0 + $0xb8] sm:$0xff]
    %v176 = vld [vmem:[%s0 + $0xc0] sm:$0xff]
    %v177 = vld [vmem:[%s0 + $0xc8] sm:$0xff]
    %v178 = vld [vmem:[%s0 + $0xd0] sm:$0xff]
    %v179 = vld [vmem:[%s0 + $0xd8] sm:$0xff]
    %v180 = vld [vmem:[%s0 + $0xe0] sm:$0xff]
    %v181 = vld [vmem:[%s0 + $0xe8] sm:$0xff]
    %v182 = vld [vmem:[%s0 + $0xf0] sm:$0xff]
    %v183 = vld [vmem:[%s0 + $0xf8] sm:$0xff]
    %v184 = vld [vmem:[#allocation2] sm:$0x3]
    %v185 = vld [vmem:[#allocation5] sm:$0x1]
    %v187 = vperm.slane %v185, 0
    %vm189 = vcmask 15360
    %v191 = vsel %vm189, %v152, 0
    %v194 = vsel %vm189, %v153, 0
    %v197 = vsel %vm189, %v154, 0
    %v200 = vsel %vm189, %v155, 0
    %v203 = vsel %vm189, %v156, 0
    %v206 = vsel %vm189, %v157, 0
    %v209 = vsel %vm189, %v158, 0
    %v212 = vsel %vm189, %v159, 0
    %v215 = vsel %vm189, %v160, 0
    %v218 = vsel %vm189, %v161, 0
    %v221 = vsel %vm189, %v162, 0
    %v224 = vsel %vm189, %v163, 0
    %v227 = vsel %vm189, %v164, 0
    %v230 = vsel %vm189, %v165, 0
    %v233 = vsel %vm189, %v166, 0
    %v236 = vsel %vm189, %v167, 0
    %v239 = vsel %vm189, %v168, 0
    %v242 = vsel %vm189, %v169, 0
    %v245 = vsel %vm189, %v170, 0
    %v248 = vsel %vm189, %v171, 0
    %v251 = vsel %vm189, %v172, 0
    %v254 = vsel %vm189, %v173, 0
    %v257 = vsel %vm189, %v174, 0
    %v260 = vsel %vm189, %v175, 0
    %v263 = vsel %vm189, %v176, 0
    %v266 = vsel %vm189, %v177, 0
    %v269 = vsel %vm189, %v178, 0
    %v272 = vsel %vm189, %v179, 0
    %v275 = vsel %vm189, %v180, 0
    %v278 = vsel %vm189, %v181, 0
    %v281 = vsel %vm189, %v182, 0
    %v284 = vsel %vm189, %v183, 0
    %vm286 = vcmask 1041408
    %v288 = vsel %vm286, %v184, 0
    %290 = vmatpush.msra.mxu0 0.0
    %291 = vmatpush.msra.mxu0 0.0
    %292 = vmatpush.msra.mxu0 0.0
    %293 = vmatpush.msra.mxu0 0.0
    %294 = vmatpush.msra.mxu0 0.0
    %295 = vmatpush.msra.mxu0 0.0
    %296 = vmatpush.msra.mxu0 0.0
    %297 = vmatpush.msra.mxu0 0.0
    %298 = vmatpush.msra.mxu0 0.0
    %299 = vmatpush.msra.mxu0 0.0
    %300 = vmatpush.msra.mxu0 0.0
    %301 = vmatpush.msra.mxu0 0.0
    %302 = vmatpush.msra.mxu0 0.0
    %303 = vmatpush.msra.mxu0 0.0
    %304 = vmatpush.msra.mxu0 0.0
    %305 = vmatpush.msra.mxu0 %v288
    %306 = vmatmul.f32.gmra.mxu0 %v191
    %v307 = vpop.f32.mrf.mxu0
    %v308 = vadd.f32 %v187, %v307
    %309 = vmatmul.f32.gmra.mxu0 %v194
    %v310 = vpop.f32.mrf.mxu0
    %v311 = vadd.f32 %v187, %v310
    %312 = vmatmul.f32.gmra.mxu0 %v197
    %v313 = vpop.f32.mrf.mxu0
    %v314 = vadd.f32 %v187, %v313
    %315 = vmatmul.f32.gmra.mxu0 %v200
    %v316 = vpop.f32.mrf.mxu0
    %v317 = vadd.f32 %v187, %v316
    %318 = vmatmul.f32.gmra.mxu0 %v203
    %v319 = vpop.f32.mrf.mxu0
    %v320 = vadd.f32 %v187, %v319
    %321 = vmatmul.f32.gmra.mxu0 %v206
    %v322 = vpop.f32.mrf.mxu0
    %v323 = vadd.f32 %v187, %v322
    %324 = vmatmul.f32.gmra.mxu0 %v209
    %v325 = vpop.f32.mrf.mxu0
    %v326 = vadd.f32 %v187, %v325
    %327 = vmatmul.f32.gmra.mxu0 %v212
    %v328 = vpop.f32.mrf.mxu0
    %v329 = vadd.f32 %v187, %v328
    %330 = vmatmul.f32.gmra.mxu0 %v215
    %v331 = vpop.f32.mrf.mxu0
    %v332 = vadd.f32 %v187, %v331
    %333 = vmatmul.f32.gmra.mxu0 %v218
    %v334 = vpop.f32.mrf.mxu0
    %v335 = vadd.f32 %v187, %v334
    %336 = vmatmul.f32.gmra.mxu0 %v221
    %v337 = vpop.f32.mrf.mxu0
    %v338 = vadd.f32 %v187, %v337
    %339 = vmatmul.f32.gmra.mxu0 %v224
    %v340 = vpop.f32.mrf.mxu0
    %v341 = vadd.f32 %v187, %v340
    %342 = vmatmul.f32.gmra.mxu0 %v227
    %v343 = vpop.f32.mrf.mxu0
    %v344 = vadd.f32 %v187, %v343
    %345 = vmatmul.f32.gmra.mxu0 %v230
    %v346 = vpop.f32.mrf.mxu0
    %v347 = vadd.f32 %v187, %v346
    %348 = vmatmul.f32.gmra.mxu0 %v233
    %v349 = vpop.f32.mrf.mxu0
    %v350 = vadd.f32 %v187, %v349
    %351 = vmatmul.f32.gmra.mxu0 %v236
    %v352 = vpop.f32.mrf.mxu0
    %v353 = vadd.f32 %v187, %v352
    %354 = vmatmul.f32.gmra.mxu0 %v239
    %v355 = vpop.f32.mrf.mxu0
    %v356 = vadd.f32 %v187, %v355
    %357 = vmatmul.f32.gmra.mxu0 %v242
    %v358 = vpop.f32.mrf.mxu0
    %v359 = vadd.f32 %v187, %v358
    %360 = vmatmul.f32.gmra.mxu0 %v245
    %v361 = vpop.f32.mrf.mxu0
    %v362 = vadd.f32 %v187, %v361
    %363 = vmatmul.f32.gmra.mxu0 %v248
    %v364 = vpop.f32.mrf.mxu0
    %v365 = vadd.f32 %v187, %v364
    %366 = vmatmul.f32.gmra.mxu0 %v251
    %v367 = vpop.f32.mrf.mxu0
    %v368 = vadd.f32 %v187, %v367
    %369 = vmatmul.f32.gmra.mxu0 %v254
    %v370 = vpop.f32.mrf.mxu0
    %v371 = vadd.f32 %v187, %v370
    %372 = vmatmul.f32.gmra.mxu0 %v257
    %v373 = vpop.f32.mrf.mxu0
    %v374 = vadd.f32 %v187, %v373
    %375 = vmatmul.f32.gmra.mxu0 %v260
    %v376 = vpop.f32.mrf.mxu0
    %v377 = vadd.f32 %v187, %v376
    %378 = vmatmul.f32.gmra.mxu0 %v263
    %v379 = vpop.f32.mrf.mxu0
    %v380 = vadd.f32 %v187, %v379
    %381 = vmatmul.f32.gmra.mxu0 %v266
    %v382 = vpop.f32.mrf.mxu0
    %v383 = vadd.f32 %v187, %v382
    %384 = vmatmul.f32.gmra.mxu0 %v269
    %v385 = vpop.f32.mrf.mxu0
    %v386 = vadd.f32 %v187, %v385
    %387 = vmatmul.f32.gmra.mxu0 %v272
    %v388 = vpop.f32.mrf.mxu0
    %v389 = vadd.f32 %v187, %v388
    %390 = vmatmul.f32.gmra.mxu0 %v275
    %v391 = vpop.f32.mrf.mxu0
    %v392 = vadd.f32 %v187, %v391
    %393 = vmatmul.f32.gmra.mxu0 %v278
    %v394 = vpop.f32.mrf.mxu0
    %v395 = vadd.f32 %v187, %v394
    %396 = vmatmul.f32.gmra.mxu0 %v281
    %v397 = vpop.f32.mrf.mxu0
    %v398 = vadd.f32 %v187, %v397
    %399 = vmatmul.f32.gmra.mxu0 %v284
    %v400 = vpop.f32.mrf.mxu0
    %v401 = vadd.f32 %v187, %v400
    %402 = vdwg.mxu0
    %v403 = vmax.f32 %v308, 0.0
    %v404 = vmax.f32 %v311, 0.0
    %v405 = vmax.f32 %v314, 0.0
    %v406 = vmax.f32 %v317, 0.0
    %v407 = vmax.f32 %v320, 0.0
    %v408 = vmax.f32 %v323, 0.0
    %v409 = vmax.f32 %v326, 0.0
    %v410 = vmax.f32 %v329, 0.0
    %v411 = vmax.f32 %v332, 0.0
    %v412 = vmax.f32 %v335, 0.0
    %v413 = vmax.f32 %v338, 0.0
    %v414 = vmax.f32 %v341, 0.0
    %v415 = vmax.f32 %v344, 0.0
    %v416 = vmax.f32 %v347, 0.0
    %v417 = vmax.f32 %v350, 0.0
    %v418 = vmax.f32 %v353, 0.0
    %v419 = vmax.f32 %v356, 0.0
    %v420 = vmax.f32 %v359, 0.0
    %v421 = vmax.f32 %v362, 0.0
    %v422 = vmax.f32 %v365, 0.0
    %v423 = vmax.f32 %v368, 0.0
    %v424 = vmax.f32 %v371, 0.0
    %v425 = vmax.f32 %v374, 0.0
    %v426 = vmax.f32 %v377, 0.0
    %v427 = vmax.f32 %v380, 0.0
    %v428 = vmax.f32 %v383, 0.0
    %v429 = vmax.f32 %v386, 0.0
    %v430 = vmax.f32 %v389, 0.0
    %v431 = vmax.f32 %v392, 0.0
    %v432 = vmax.f32 %v395, 0.0
    %v433 = vmax.f32 %v398, 0.0
    %v434 = vmax.f32 %v401, 0.0
    %v435 = vld [vmem:[#allocation7] sm:$0xff]
    %v436 = vld [vmem:[#allocation7 + $0x8] sm:$0xff]
    %v437 = vld [vmem:[#allocation7 + $0x10] sm:$0xff]
    %v438 = vld [vmem:[#allocation7 + $0x18] sm:$0xff]
    %v439 = vld [vmem:[#allocation7 + $0x20] sm:$0xff]
    %v440 = vld [vmem:[#allocation7 + $0x28] sm:$0xff]
    %v441 = vld [vmem:[#allocation7 + $0x30] sm:$0xff]
    %v442 = vld [vmem:[#allocation7 + $0x38] sm:$0xff]
    %v443 = vld [vmem:[#allocation7 + $0x40] sm:$0xff]
    %v444 = vld [vmem:[#allocation7 + $0x48] sm:$0xff]
    %v445 = vld [vmem:[#allocation7 + $0x50] sm:$0xff]
    %v446 = vld [vmem:[#allocation7 + $0x58] sm:$0xff]
    %v447 = vld [vmem:[#allocation7 + $0x60] sm:$0xff]
    %v448 = vld [vmem:[#allocation7 + $0x68] sm:$0xff]
    %v449 = vld [vmem:[#allocation7 + $0x70] sm:$0xff]
    %v450 = vld [vmem:[#allocation7 + $0x78] sm:$0xff]
    %v451 = vld [vmem:[#allocation8] sm:$0x1]
    %v453 = vperm.slane %v451, 0
    %455 = vmatpush.msra.mxu0 %v450
    %456 = vmatpush.msra.mxu0 %v449
    %457 = vmatpush.msra.mxu0 %v448
    %458 = vmatpush.msra.mxu0 %v447
    %459 = vmatpush.msra.mxu0 %v446
    %460 = vmatpush.msra.mxu0 %v445
    %461 = vmatpush.msra.mxu0 %v444
    %462 = vmatpush.msra.mxu0 %v443
    %463 = vmatpush.msra.mxu0 %v442
    %464 = vmatpush.msra.mxu0 %v441
    %465 = vmatpush.msra.mxu0 %v440
    %466 = vmatpush.msra.mxu0 %v439
    %467 = vmatpush.msra.mxu0 %v438
    %468 = vmatpush.msra.mxu0 %v437
    %469 = vmatpush.msra.mxu0 %v436
    %470 = vmatpush.msra.mxu0 %v435
    %471 = vmatmul.f32.gmra.mxu0 %v403
    %v472 = vpop.f32.mrf.mxu0
    %v473 = vadd.f32 %v453, %v472
    %474 = vmatmul.f32.gmra.mxu0 %v404
    %v475 = vpop.f32.mrf.mxu0
    %v476 = vadd.f32 %v453, %v475
    %477 = vmatmul.f32.gmra.mxu0 %v405
    %v478 = vpop.f32.mrf.mxu0
    %v479 = vadd.f32 %v453, %v478
    %480 = vmatmul.f32.gmra.mxu0 %v406
    %v481 = vpop.f32.mrf.mxu0
    %v482 = vadd.f32 %v453, %v481
    %483 = vmatmul.f32.gmra.mxu0 %v407
    %v484 = vpop.f32.mrf.mxu0
    %v485 = vadd.f32 %v453, %v484
    %486 = vmatmul.f32.gmra.mxu0 %v408
    %v487 = vpop.f32.mrf.mxu0
    %v488 = vadd.f32 %v453, %v487
    %489 = vmatmul.f32.gmra.mxu0 %v409
    %v490 = vpop.f32.mrf.mxu0
    %v491 = vadd.f32 %v453, %v490
    %492 = vmatmul.f32.gmra.mxu0 %v410
    %v493 = vpop.f32.mrf.mxu0
    %v494 = vadd.f32 %v453, %v493
    %495 = vmatmul.f32.gmra.mxu0 %v411
    %v496 = vpop.f32.mrf.mxu0
    %v497 = vadd.f32 %v453, %v496
    %498 = vmatmul.f32.gmra.mxu0 %v412
    %v499 = vpop.f32.mrf.mxu0
    %v500 = vadd.f32 %v453, %v499
    %501 = vmatmul.f32.gmra.mxu0 %v413
    %v502 = vpop.f32.mrf.mxu0
    %v503 = vadd.f32 %v453, %v502
    %504 = vmatmul.f32.gmra.mxu0 %v414
    %v505 = vpop.f32.mrf.mxu0
    %v506 = vadd.f32 %v453, %v505
    %507 = vmatmul.f32.gmra.mxu0 %v415
    %v508 = vpop.f32.mrf.mxu0
    %v509 = vadd.f32 %v453, %v508
    %510 = vmatmul.f32.gmra.mxu0 %v416
    %v511 = vpop.f32.mrf.mxu0
    %v512 = vadd.f32 %v453, %v511
    %513 = vmatmul.f32.gmra.mxu0 %v417
    %v514 = vpop.f32.mrf.mxu0
    %v515 = vadd.f32 %v453, %v514
    %516 = vmatmul.f32.gmra.mxu0 %v418
    %v517 = vpop.f32.mrf.mxu0
    %v518 = vadd.f32 %v453, %v517
    %519 = vmatmul.f32.gmra.mxu0 %v419
    %v520 = vpop.f32.mrf.mxu0
    %v521 = vadd.f32 %v453, %v520
    %522 = vmatmul.f32.gmra.mxu0 %v420
    %v523 = vpop.f32.mrf.mxu0
    %v524 = vadd.f32 %v453, %v523
    %525 = vmatmul.f32.gmra.mxu0 %v421
    %v526 = vpop.f32.mrf.mxu0
    %v527 = vadd.f32 %v453, %v526
    %528 = vmatmul.f32.gmra.mxu0 %v422
    %v529 = vpop.f32.mrf.mxu0
    %v530 = vadd.f32 %v453, %v529
    %531 = vmatmul.f32.gmra.mxu0 %v423
    %v532 = vpop.f32.mrf.mxu0
    %v533 = vadd.f32 %v453, %v532
    %534 = vmatmul.f32.gmra.mxu0 %v424
    %v535 = vpop.f32.mrf.mxu0
    %v536 = vadd.f32 %v453, %v535
    %537 = vmatmul.f32.gmra.mxu0 %v425
    %v538 = vpop.f32.mrf.mxu0
    %v539 = vadd.f32 %v453, %v538
    %540 = vmatmul.f32.gmra.mxu0 %v426
    %v541 = vpop.f32.mrf.mxu0
    %v542 = vadd.f32 %v453, %v541
    %543 = vmatmul.f32.gmra.mxu0 %v427
    %v544 = vpop.f32.mrf.mxu0
    %v545 = vadd.f32 %v453, %v544
    %546 = vmatmul.f32.gmra.mxu0 %v428
    %v547 = vpop.f32.mrf.mxu0
    %v548 = vadd.f32 %v453, %v547
    %549 = vmatmul.f32.gmra.mxu0 %v429
    %v550 = vpop.f32.mrf.mxu0
    %v551 = vadd.f32 %v453, %v550
    %552 = vmatmul.f32.gmra.mxu0 %v430
    %v553 = vpop.f32.mrf.mxu0
    %v554 = vadd.f32 %v453, %v553
    %555 = vmatmul.f32.gmra.mxu0 %v431
    %v556 = vpop.f32.mrf.mxu0
    %v557 = vadd.f32 %v453, %v556
    %558 = vmatmul.f32.gmra.mxu0 %v432
    %v559 = vpop.f32.mrf.mxu0
    %v560 = vadd.f32 %v453, %v559
    %561 = vmatmul.f32.gmra.mxu0 %v433
    %v562 = vpop.f32.mrf.mxu0
    %v563 = vadd.f32 %v453, %v562
    %564 = vmatmul.f32.gmra.mxu0 %v434
    %v565 = vpop.f32.mrf.mxu0
    %v566 = vadd.f32 %v453, %v565
    %567 = vdwg.mxu0
    %v568 = vld [vmem:[#allocation10] sm:$0xff]
    %v569 = vld [vmem:[#allocation10 + $0x8] sm:$0xff]
    %v570 = vld [vmem:[#allocation10 + $0x10] sm:$0xff]
    %v571 = vld [vmem:[#allocation10 + $0x18] sm:$0xff]
    %v572 = vld [vmem:[#allocation10 + $0x20] sm:$0xff]
    %v573 = vld [vmem:[#allocation10 + $0x28] sm:$0xff]
    %v574 = vld [vmem:[#allocation10 + $0x30] sm:$0xff]
    %v575 = vld [vmem:[#allocation10 + $0x38] sm:$0xff]
    %v576 = vld [vmem:[#allocation10 + $0x40] sm:$0xff]
    %v577 = vld [vmem:[#allocation10 + $0x48] sm:$0xff]
    %v578 = vld [vmem:[#allocation10 + $0x50] sm:$0xff]
    %v579 = vld [vmem:[#allocation10 + $0x58] sm:$0xff]
    %v580 = vld [vmem:[#allocation10 + $0x60] sm:$0xff]
    %v581 = vld [vmem:[#allocation10 + $0x68] sm:$0xff]
    %v582 = vld [vmem:[#allocation10 + $0x70] sm:$0xff]
    %v583 = vld [vmem:[#allocation10 + $0x78] sm:$0xff]
    %v584 = vld [vmem:[#allocation11] sm:$0x1]
    %v586 = vperm.slane %v584, 0
    %588 = vmatpush.msra.mxu0 %v583
    %589 = vmatpush.msra.mxu0 %v582
    %590 = vmatpush.msra.mxu0 %v581
    %591 = vmatpush.msra.mxu0 %v580
    %592 = vmatpush.msra.mxu0 %v579
    %593 = vmatpush.msra.mxu0 %v578
    %594 = vmatpush.msra.mxu0 %v577
    %595 = vmatpush.msra.mxu0 %v576
    %596 = vmatpush.msra.mxu0 %v575
    %597 = vmatpush.msra.mxu0 %v574
    %598 = vmatpush.msra.mxu0 %v573
    %599 = vmatpush.msra.mxu0 %v572
    %600 = vmatpush.msra.mxu0 %v571
    %601 = vmatpush.msra.mxu0 %v570
    %602 = vmatpush.msra.mxu0 %v569
    %603 = vmatpush.msra.mxu0 %v568
    %604 = vmatmul.f32.gmra.mxu0 %v473
    %v605 = vpop.f32.mrf.mxu0
    %v606 = vadd.f32 %v586, %v605
    %607 = vmatmul.f32.gmra.mxu0 %v476
    %v608 = vpop.f32.mrf.mxu0
    %v609 = vadd.f32 %v586, %v608
    %610 = vmatmul.f32.gmra.mxu0 %v479
    %v611 = vpop.f32.mrf.mxu0
    %v612 = vadd.f32 %v586, %v611
    %613 = vmatmul.f32.gmra.mxu0 %v482
    %v614 = vpop.f32.mrf.mxu0
    %v615 = vadd.f32 %v586, %v614
    %616 = vmatmul.f32.gmra.mxu0 %v485
    %v617 = vpop.f32.mrf.mxu0
    %v618 = vadd.f32 %v586, %v617
    %619 = vmatmul.f32.gmra.mxu0 %v488
    %v620 = vpop.f32.mrf.mxu0
    %v621 = vadd.f32 %v586, %v620
    %622 = vmatmul.f32.gmra.mxu0 %v491
    %v623 = vpop.f32.mrf.mxu0
    %v624 = vadd.f32 %v586, %v623
    %625 = vmatmul.f32.gmra.mxu0 %v494
    %v626 = vpop.f32.mrf.mxu0
    %v627 = vadd.f32 %v586, %v626
    %628 = vmatmul.f32.gmra.mxu0 %v497
    %v629 = vpop.f32.mrf.mxu0
    %v630 = vadd.f32 %v586, %v629
    %631 = vmatmul.f32.gmra.mxu0 %v500
    %v632 = vpop.f32.mrf.mxu0
    %v633 = vadd.f32 %v586, %v632
    %634 = vmatmul.f32.gmra.mxu0 %v503
    %v635 = vpop.f32.mrf.mxu0
    %v636 = vadd.f32 %v586, %v635
    %637 = vmatmul.f32.gmra.mxu0 %v506
    %v638 = vpop.f32.mrf.mxu0
    %v639 = vadd.f32 %v586, %v638
    %640 = vmatmul.f32.gmra.mxu0 %v509
    %v641 = vpop.f32.mrf.mxu0
    %v642 = vadd.f32 %v586, %v641
    %643 = vmatmul.f32.gmra.mxu0 %v512
    %v644 = vpop.f32.mrf.mxu0
    %v645 = vadd.f32 %v586, %v644
    %646 = vmatmul.f32.gmra.mxu0 %v515
    %v647 = vpop.f32.mrf.mxu0
    %v648 = vadd.f32 %v586, %v647
    %649 = vmatmul.f32.gmra.mxu0 %v518
    %v650 = vpop.f32.mrf.mxu0
    %v651 = vadd.f32 %v586, %v650
    %652 = vmatmul.f32.gmra.mxu0 %v521
    %v653 = vpop.f32.mrf.mxu0
    %v654 = vadd.f32 %v586, %v653
    %655 = vmatmul.f32.gmra.mxu0 %v524
    %v656 = vpop.f32.mrf.mxu0
    %v657 = vadd.f32 %v586, %v656
    %658 = vmatmul.f32.gmra.mxu0 %v527
    %v659 = vpop.f32.mrf.mxu0
    %v660 = vadd.f32 %v586, %v659
    %661 = vmatmul.f32.gmra.mxu0 %v530
    %v662 = vpop.f32.mrf.mxu0
    %v663 = vadd.f32 %v586, %v662
    %664 = vmatmul.f32.gmra.mxu0 %v533
    %v665 = vpop.f32.mrf.mxu0
    %v666 = vadd.f32 %v586, %v665
    %667 = vmatmul.f32.gmra.mxu0 %v536
    %v668 = vpop.f32.mrf.mxu0
    %v669 = vadd.f32 %v586, %v668
    %670 = vmatmul.f32.gmra.mxu0 %v539
    %v671 = vpop.f32.mrf.mxu0
    %v672 = vadd.f32 %v586, %v671
    %673 = vmatmul.f32.gmra.mxu0 %v542
    %v674 = vpop.f32.mrf.mxu0
    %v675 = vadd.f32 %v586, %v674
    %676 = vmatmul.f32.gmra.mxu0 %v545
    %v677 = vpop.f32.mrf.mxu0
    %v678 = vadd.f32 %v586, %v677
    %679 = vmatmul.f32.gmra.mxu0 %v548
    %v680 = vpop.f32.mrf.mxu0
    %v681 = vadd.f32 %v586, %v680
    %682 = vmatmul.f32.gmra.mxu0 %v551
    %v683 = vpop.f32.mrf.mxu0
    %v684 = vadd.f32 %v586, %v683
    %685 = vmatmul.f32.gmra.mxu0 %v554
    %v686 = vpop.f32.mrf.mxu0
    %v687 = vadd.f32 %v586, %v686
    %688 = vmatmul.f32.gmra.mxu0 %v557
    %v689 = vpop.f32.mrf.mxu0
    %v690 = vadd.f32 %v586, %v689
    %691 = vmatmul.f32.gmra.mxu0 %v560
    %v692 = vpop.f32.mrf.mxu0
    %v693 = vadd.f32 %v586, %v692
    %694 = vmatmul.f32.gmra.mxu0 %v563
    %v695 = vpop.f32.mrf.mxu0
    %v696 = vadd.f32 %v586, %v695
    %697 = vmatmul.f32.gmra.mxu0 %v566
    %v698 = vpop.f32.mrf.mxu0
    %v699 = vadd.f32 %v586, %v698
    %700 = vdwg.mxu0
    %v701 = vpack.c.bf16 %v606, %v606
    %v702 = vpack.c.bf16 %v609, %v609
    %v703 = vpack.c.bf16 %v612, %v612
    %v704 = vpack.c.bf16 %v615, %v615
    %v705 = vpack.c.bf16 %v618, %v618
    %v706 = vpack.c.bf16 %v621, %v621
    %v707 = vpack.c.bf16 %v624, %v624
    %v708 = vpack.c.bf16 %v627, %v627
    %v709 = vpack.c.bf16 %v630, %v630
    %v710 = vpack.c.bf16 %v633, %v633
    %v711 = vpack.c.bf16 %v636, %v636
    %v712 = vpack.c.bf16 %v639, %v639
    %v713 = vpack.c.bf16 %v642, %v642
    %v714 = vpack.c.bf16 %v645, %v645
    %v715 = vpack.c.bf16 %v648, %v648
    %v716 = vpack.c.bf16 %v651, %v651
    %v717 = vpack.c.bf16 %v654, %v654
    %v718 = vpack.c.bf16 %v657, %v657
    %v719 = vpack.c.bf16 %v660, %v660
    %v720 = vpack.c.bf16 %v663, %v663
    %v721 = vpack.c.bf16 %v666, %v666
    %v722 = vpack.c.bf16 %v669, %v669
    %v723 = vpack.c.bf16 %v672, %v672
    %v724 = vpack.c.bf16 %v675, %v675
    %v725 = vpack.c.bf16 %v678, %v678
    %v726 = vpack.c.bf16 %v681, %v681
    %v727 = vpack.c.bf16 %v684, %v684
    %v728 = vpack.c.bf16 %v687, %v687
    %v729 = vpack.c.bf16 %v690, %v690
    %v730 = vpack.c.bf16 %v693, %v693
    %v731 = vpack.c.bf16 %v696, %v696
    %v732 = vpack.c.bf16 %v699, %v699
    %733 = vst [vmem:[#allocation16] sm:$0xf] %v701
    %734 = vst [vmem:[#allocation16 + $0x4] sm:$0xf] %v702
    %735 = vst [vmem:[#allocation16 + $0x8] sm:$0xf] %v703
    %736 = vst [vmem:[#allocation16 + $0xc] sm:$0xf] %v704
    %737 = vst [vmem:[#allocation16 + $0x10] sm:$0xf] %v705
    %738 = vst [vmem:[#allocation16 + $0x14] sm:$0xf] %v706
    %739 = vst [vmem:[#allocation16 + $0x18] sm:$0xf] %v707
    %740 = vst [vmem:[#allocation16 + $0x1c] sm:$0xf] %v708
    %741 = vst [vmem:[#allocation16 + $0x20] sm:$0xf] %v709
    %742 = vst [vmem:[#allocation16 + $0x24] sm:$0xf] %v710
    %743 = vst [vmem:[#allocation16 + $0x28] sm:$0xf] %v711
    %744 = vst [vmem:[#allocation16 + $0x2c] sm:$0xf] %v712
    %745 = vst [vmem:[#allocation16 + $0x30] sm:$0xf] %v713
    %746 = vst [vmem:[#allocation16 + $0x34] sm:$0xf] %v714
    %747 = vst [vmem:[#allocation16 + $0x38] sm:$0xf] %v715
    %748 = vst [vmem:[#allocation16 + $0x3c] sm:$0xf] %v716
    %749 = vst [vmem:[#allocation16 + $0x40] sm:$0xf] %v717
    %750 = vst [vmem:[#allocation16 + $0x44] sm:$0xf] %v718
    %751 = vst [vmem:[#allocation16 + $0x48] sm:$0xf] %v719
    %752 = vst [vmem:[#allocation16 + $0x4c] sm:$0xf] %v720
    %753 = vst [vmem:[#allocation16 + $0x50] sm:$0xf] %v721
    %754 = vst [vmem:[#allocation16 + $0x54] sm:$0xf] %v722
    %755 = vst [vmem:[#allocation16 + $0x58] sm:$0xf] %v723
    %756 = vst [vmem:[#allocation16 + $0x5c] sm:$0xf] %v724
    %757 = vst [vmem:[#allocation16 + $0x60] sm:$0xf] %v725
    %758 = vst [vmem:[#allocation16 + $0x64] sm:$0xf] %v726
    %759 = vst [vmem:[#allocation16 + $0x68] sm:$0xf] %v727
    %760 = vst [vmem:[#allocation16 + $0x6c] sm:$0xf] %v728
    %761 = vst [vmem:[#allocation16 + $0x70] sm:$0xf] %v729
    %762 = vst [vmem:[#allocation16 + $0x74] sm:$0xf] %v730
    %763 = vst [vmem:[#allocation16 + $0x78] sm:$0xf] %v731
    %764 = vst [vmem:[#allocation16 + $0x7c] sm:$0xf] %v732
    %v765 = vld [vmem:[%s7] sm:$0xff]
    %v766 = vld [vmem:[%s7 + $0x8] sm:$0xff]
    %v767 = vld [vmem:[%s7 + $0x10] sm:$0xff]
    %v768 = vld [vmem:[%s7 + $0x18] sm:$0xff]
    %v769 = vld [vmem:[%s7 + $0x20] sm:$0xff]
    %v770 = vld [vmem:[%s7 + $0x28] sm:$0xff]
    %v771 = vld [vmem:[%s7 + $0x30] sm:$0xff]
    %v772 = vld [vmem:[%s7 + $0x38] sm:$0xff]
    %v773 = vld [vmem:[%s7 + $0x40] sm:$0xff]
    %v774 = vld [vmem:[%s7 + $0x48] sm:$0xff]
    %v775 = vld [vmem:[%s7 + $0x50] sm:$0xff]
    %v776 = vld [vmem:[%s7 + $0x58] sm:$0xff]
    %v777 = vld [vmem:[%s7 + $0x60] sm:$0xff]
    %v778 = vld [vmem:[%s7 + $0x68] sm:$0xff]
    %v779 = vld [vmem:[%s7 + $0x70] sm:$0xff]
    %v780 = vld [vmem:[%s7 + $0x78] sm:$0xff]
    %v781 = vld [vmem:[%s7 + $0x80] sm:$0xff]
    %v782 = vld [vmem:[%s7 + $0x88] sm:$0xff]
    %v783 = vld [vmem:[%s7 + $0x90] sm:$0xff]
    %v784 = vld [vmem:[%s7 + $0x98] sm:$0xff]
    %v785 = vld [vmem:[%s7 + $0xa0] sm:$0xff]
    %v786 = vld [vmem:[%s7 + $0xa8] sm:$0xff]
    %v787 = vld [vmem:[%s7 + $0xb0] sm:$0xff]
    %v788 = vld [vmem:[%s7 + $0xb8] sm:$0xff]
    %v789 = vld [vmem:[%s7 + $0xc0] sm:$0xff]
    %v790 = vld [vmem:[%s7 + $0xc8] sm:$0xff]
    %v791 = vld [vmem:[%s7 + $0xd0] sm:$0xff]
    %v792 = vld [vmem:[%s7 + $0xd8] sm:$0xff]
    %v793 = vld [vmem:[%s7 + $0xe0] sm:$0xff]
    %v794 = vld [vmem:[%s7 + $0xe8] sm:$0xff]
    %v795 = vld [vmem:[%s7 + $0xf0] sm:$0xff]
    %v796 = vld [vmem:[%s7 + $0xf8] sm:$0xff]
    %v797 = vld [vmem:[%s7 + $0x100] sm:$0xff]
    %v798 = vld [vmem:[%s7 + $0x108] sm:$0xff]
    %v799 = vld [vmem:[%s7 + $0x110] sm:$0xff]
    %v800 = vld [vmem:[%s7 + $0x118] sm:$0xff]
    %v801 = vld [vmem:[%s7 + $0x120] sm:$0xff]
    %v802 = vld [vmem:[%s7 + $0x128] sm:$0xff]
    %v803 = vld [vmem:[%s7 + $0x130] sm:$0xff]
    %v804 = vld [vmem:[%s7 + $0x138] sm:$0xff]
    %v805 = vld [vmem:[%s7 + $0x140] sm:$0xff]
    %v806 = vld [vmem:[%s7 + $0x148] sm:$0xff]
    %v807 = vld [vmem:[%s7 + $0x150] sm:$0xff]
    %v808 = vld [vmem:[%s7 + $0x158] sm:$0xff]
    %v809 = vld [vmem:[%s7 + $0x160] sm:$0xff]
    %v810 = vld [vmem:[%s7 + $0x168] sm:$0xff]
    %v811 = vld [vmem:[%s7 + $0x170] sm:$0xff]
    %v812 = vld [vmem:[%s7 + $0x178] sm:$0xff]
    %v813 = vld [vmem:[%s7 + $0x180] sm:$0xff]
    %v814 = vld [vmem:[%s7 + $0x188] sm:$0xff]
    %v815 = vld [vmem:[%s7 + $0x190] sm:$0xff]
    %v816 = vld [vmem:[%s7 + $0x198] sm:$0xff]
    %v817 = vld [vmem:[%s7 + $0x1a0] sm:$0xff]
    %v818 = vld [vmem:[%s7 + $0x1a8] sm:$0xff]
    %v819 = vld [vmem:[%s7 + $0x1b0] sm:$0xff]
    %v820 = vld [vmem:[%s7 + $0x1b8] sm:$0xff]
    %v821 = vld [vmem:[%s7 + $0x1c0] sm:$0xff]
    %v822 = vld [vmem:[%s7 + $0x1c8] sm:$0xff]
    %v823 = vld [vmem:[%s7 + $0x1d0] sm:$0xff]
    %v824 = vld [vmem:[%s7 + $0x1d8] sm:$0xff]
    %v825 = vld [vmem:[%s7 + $0x1e0] sm:$0xff]
    %v826 = vld [vmem:[%s7 + $0x1e8] sm:$0xff]
    %v827 = vld [vmem:[%s7 + $0x1f0] sm:$0xff]
    %v828 = vld [vmem:[%s7 + $0x1f8] sm:$0xff]
    %v829 = vld [vmem:[%s7 + $0x200] sm:$0xff]
    %v830 = vld [vmem:[%s7 + $0x208] sm:$0xff]
    %v831 = vld [vmem:[%s7 + $0x210] sm:$0xff]
    %v832 = vld [vmem:[%s7 + $0x218] sm:$0xff]
    %v833 = vld [vmem:[%s7 + $0x220] sm:$0xff]
    %v834 = vld [vmem:[%s7 + $0x228] sm:$0xff]
    %v835 = vld [vmem:[%s7 + $0x230] sm:$0xff]
    %v836 = vld [vmem:[%s7 + $0x238] sm:$0xff]
    %v837 = vld [vmem:[%s7 + $0x240] sm:$0xff]
    %v838 = vld [vmem:[%s7 + $0x248] sm:$0xff]
    %v839 = vld [vmem:[%s7 + $0x250] sm:$0xff]
    %v840 = vld [vmem:[%s7 + $0x258] sm:$0xff]
    %v841 = vld [vmem:[%s7 + $0x260] sm:$0xff]
    %v842 = vld [vmem:[%s7 + $0x268] sm:$0xff]
    %v843 = vld [vmem:[%s7 + $0x270] sm:$0xff]
    %v844 = vld [vmem:[%s7 + $0x278] sm:$0xff]
    %v845 = vld [vmem:[%s7 + $0x280] sm:$0xff]
    %v846 = vld [vmem:[%s7 + $0x288] sm:$0xff]
    %v847 = vld [vmem:[%s7 + $0x290] sm:$0xff]
    %v848 = vld [vmem:[%s7 + $0x298] sm:$0xff]
    %v849 = vld [vmem:[%s7 + $0x2a0] sm:$0xff]
    %v850 = vld [vmem:[%s7 + $0x2a8] sm:$0xff]
    %v851 = vld [vmem:[%s7 + $0x2b0] sm:$0xff]
    %v852 = vld [vmem:[%s7 + $0x2b8] sm:$0xff]
    %v853 = vld [vmem:[%s7 + $0x2c0] sm:$0xff]
    %v854 = vld [vmem:[%s7 + $0x2c8] sm:$0xff]
    %v855 = vld [vmem:[%s7 + $0x2d0] sm:$0xff]
    %v856 = vld [vmem:[%s7 + $0x2d8] sm:$0xff]
    %v857 = vld [vmem:[%s7 + $0x2e0] sm:$0xff]
    %v858 = vld [vmem:[%s7 + $0x2e8] sm:$0xff]
    %v859 = vld [vmem:[%s7 + $0x2f0] sm:$0xff]
    %v860 = vld [vmem:[%s7 + $0x2f8] sm:$0xff]
    %v861 = vld [vmem:[%s7 + $0x300] sm:$0xff]
    %v862 = vld [vmem:[%s7 + $0x308] sm:$0xff]
    %v863 = vld [vmem:[%s7 + $0x310] sm:$0xff]
    %v864 = vld [vmem:[%s7 + $0x318] sm:$0xff]
    %v865 = vld [vmem:[%s7 + $0x320] sm:$0xff]
    %v866 = vld [vmem:[%s7 + $0x328] sm:$0xff]
    %v867 = vld [vmem:[%s7 + $0x330] sm:$0xff]
    %v868 = vld [vmem:[%s7 + $0x338] sm:$0xff]
    %v869 = vld [vmem:[%s7 + $0x340] sm:$0xff]
    %v870 = vld [vmem:[%s7 + $0x348] sm:$0xff]
    %v871 = vld [vmem:[%s7 + $0x350] sm:$0xff]
    %v872 = vld [vmem:[%s7 + $0x358] sm:$0xff]
    %v873 = vld [vmem:[%s7 + $0x360] sm:$0xff]
    %v874 = vld [vmem:[%s7 + $0x368] sm:$0xff]
    %v875 = vld [vmem:[%s7 + $0x370] sm:$0xff]
    %v876 = vld [vmem:[%s7 + $0x378] sm:$0xff]
    %v877 = vld [vmem:[%s7 + $0x380] sm:$0xff]
    %v878 = vld [vmem:[%s7 + $0x388] sm:$0xff]
    %v879 = vld [vmem:[%s7 + $0x390] sm:$0xff]
    %v880 = vld [vmem:[%s7 + $0x398] sm:$0xff]
    %v881 = vld [vmem:[%s7 + $0x3a0] sm:$0xff]
    %v882 = vld [vmem:[%s7 + $0x3a8] sm:$0xff]
    %v883 = vld [vmem:[%s7 + $0x3b0] sm:$0xff]
    %v884 = vld [vmem:[%s7 + $0x3b8] sm:$0xff]
    %v885 = vld [vmem:[%s7 + $0x3c0] sm:$0xff]
    %v886 = vld [vmem:[%s7 + $0x3c8] sm:$0xff]
    %v887 = vld [vmem:[%s7 + $0x3d0] sm:$0xff]
    %v888 = vld [vmem:[%s7 + $0x3d8] sm:$0xff]
    %v889 = vld [vmem:[%s7 + $0x3e0] sm:$0xff]
    %v890 = vld [vmem:[%s7 + $0x3e8] sm:$0xff]
    %v891 = vld [vmem:[%s7 + $0x3f0] sm:$0xff]
    %v892 = vld [vmem:[%s7 + $0x3f8] sm:$0xff]
    %v893 = vld [vmem:[%s7 + $0x400] sm:$0xff]
    %v894 = vld [vmem:[%s7 + $0x408] sm:$0xff]
    %v895 = vld [vmem:[%s7 + $0x410] sm:$0xff]
    %v896 = vld [vmem:[%s7 + $0x418] sm:$0xff]
    %v897 = vld [vmem:[%s7 + $0x420] sm:$0xff]
    %v898 = vld [vmem:[%s7 + $0x428] sm:$0xff]
    %v899 = vld [vmem:[%s7 + $0x430] sm:$0xff]
    %v900 = vld [vmem:[%s7 + $0x438] sm:$0xff]
    %v901 = vld [vmem:[%s7 + $0x440] sm:$0xff]
    %v902 = vld [vmem:[%s7 + $0x448] sm:$0xff]
    %v903 = vld [vmem:[%s7 + $0x450] sm:$0xff]
    %v904 = vld [vmem:[%s7 + $0x458] sm:$0xff]
    %v905 = vld [vmem:[%s7 + $0x460] sm:$0xff]
    %v906 = vld [vmem:[%s7 + $0x468] sm:$0xff]
    %v907 = vld [vmem:[%s7 + $0x470] sm:$0xff]
    %v908 = vld [vmem:[%s7 + $0x478] sm:$0xff]
    %v909 = vld [vmem:[%s7 + $0x480] sm:$0xff]
    %v910 = vld [vmem:[%s7 + $0x488] sm:$0xff]
    %v911 = vld [vmem:[%s7 + $0x490] sm:$0xff]
    %v912 = vld [vmem:[%s7 + $0x498] sm:$0xff]
    %v913 = vld [vmem:[%s7 + $0x4a0] sm:$0xff]
    %v914 = vld [vmem:[%s7 + $0x4a8] sm:$0xff]
    %v915 = vld [vmem:[%s7 + $0x4b0] sm:$0xff]
    %v916 = vld [vmem:[%s7 + $0x4b8] sm:$0xff]
    %v917 = vld [vmem:[%s7 + $0x4c0] sm:$0xff]
    %v918 = vld [vmem:[%s7 + $0x4c8] sm:$0xff]
    %v919 = vld [vmem:[%s7 + $0x4d0] sm:$0xff]
    %v920 = vld [vmem:[%s7 + $0x4d8] sm:$0xff]
    %v921 = vld [vmem:[%s7 + $0x4e0] sm:$0xff]
    %v922 = vld [vmem:[%s7 + $0x4e8] sm:$0xff]
    %v923 = vld [vmem:[%s7 + $0x4f0] sm:$0xff]
    %v924 = vld [vmem:[%s7 + $0x4f8] sm:$0xff]
    %v925 = vld [vmem:[%s7 + $0x500] sm:$0xff]
    %v926 = vld [vmem:[%s7 + $0x508] sm:$0xff]
    %v927 = vld [vmem:[%s7 + $0x510] sm:$0xff]
    %v928 = vld [vmem:[%s7 + $0x518] sm:$0xff]
    %v929 = vld [vmem:[%s7 + $0x520] sm:$0xff]
    %v930 = vld [vmem:[%s7 + $0x528] sm:$0xff]
    %v931 = vld [vmem:[%s7 + $0x530] sm:$0xff]
    %v932 = vld [vmem:[%s7 + $0x538] sm:$0xff]
    %v933 = vld [vmem:[%s7 + $0x540] sm:$0xff]
    %v934 = vld [vmem:[%s7 + $0x548] sm:$0xff]
    %v935 = vld [vmem:[%s7 + $0x550] sm:$0xff]
    %v936 = vld [vmem:[%s7 + $0x558] sm:$0xff]
    %v937 = vld [vmem:[%s7 + $0x560] sm:$0xff]
    %v938 = vld [vmem:[%s7 + $0x568] sm:$0xff]
    %v939 = vld [vmem:[%s7 + $0x570] sm:$0xff]
    %v940 = vld [vmem:[%s7 + $0x578] sm:$0xff]
    %v941 = vld [vmem:[%s7 + $0x580] sm:$0xff]
    %v942 = vld [vmem:[%s7 + $0x588] sm:$0xff]
    %v943 = vld [vmem:[%s7 + $0x590] sm:$0xff]
    %v944 = vld [vmem:[%s7 + $0x598] sm:$0xff]
    %v945 = vld [vmem:[%s7 + $0x5a0] sm:$0xff]
    %v946 = vld [vmem:[%s7 + $0x5a8] sm:$0xff]
    %v947 = vld [vmem:[%s7 + $0x5b0] sm:$0xff]
    %v948 = vld [vmem:[%s7 + $0x5b8] sm:$0xff]
    %v949 = vld [vmem:[%s7 + $0x5c0] sm:$0xff]
    %v950 = vld [vmem:[%s7 + $0x5c8] sm:$0xff]
    %v951 = vld [vmem:[%s7 + $0x5d0] sm:$0xff]
    %v952 = vld [vmem:[%s7 + $0x5d8] sm:$0xff]
    %v953 = vld [vmem:[%s7 + $0x5e0] sm:$0xff]
    %v954 = vld [vmem:[%s7 + $0x5e8] sm:$0xff]
    %v955 = vld [vmem:[%s7 + $0x5f0] sm:$0xff]
    %v956 = vld [vmem:[%s7 + $0x5f8] sm:$0xff]
    %v957 = vld [vmem:[#allocation13] sm:$0x77]
    %v958 = vld [vmem:[#allocation14] sm:$0x3]
    %v960 = vperm.slane %v958, 0
    %v961 = vperm.slane %v958, 1
    %965 = vst [vmem:[#allocation1] ss:$2 sm:$0xff] %v957
    %v966 = vld.sshfl [vmem:[#allocation1] sm:$0xff pattern:$0x75316420]
    %v967 = vld.sshfl [vmem:[#allocation1 + $0x8] sm:$0xff pattern:$0x75316420]
    %vm968 = vcmask 23552
    %v970 = vsel %vm968, %v765, 0
    %v973 = vsel %vm968, %v766, 0
    %v976 = vsel %vm968, %v767, 0
    %v979 = vsel %vm968, %v768, 0
    %v982 = vsel %vm968, %v769, 0
    %v985 = vsel %vm968, %v770, 0
    %v988 = vsel %vm968, %v771, 0
    %v991 = vsel %vm968, %v772, 0
    %v994 = vsel %vm968, %v773, 0
    %v997 = vsel %vm968, %v774, 0
    %v1000 = vsel %vm968, %v775, 0
    %v1003 = vsel %vm968, %v776, 0
    %v1006 = vsel %vm968, %v777, 0
    %v1009 = vsel %vm968, %v778, 0
    %v1012 = vsel %vm968, %v779, 0
    %v1015 = vsel %vm968, %v780, 0
    %v1018 = vsel %vm968, %v781, 0
    %v1021 = vsel %vm968, %v782, 0
    %v1024 = vsel %vm968, %v783, 0
    %v1027 = vsel %vm968, %v784, 0
    %v1030 = vsel %vm968, %v785, 0
    %v1033 = vsel %vm968, %v786, 0
    %v1036 = vsel %vm968, %v787, 0
    %v1039 = vsel %vm968, %v788, 0
    %v1042 = vsel %vm968, %v789, 0
    %v1045 = vsel %vm968, %v790, 0
    %v1048 = vsel %vm968, %v791, 0
    %v1051 = vsel %vm968, %v792, 0
    %v1054 = vsel %vm968, %v793, 0
    %v1057 = vsel %vm968, %v794, 0
    %v1060 = vsel %vm968, %v795, 0
    %v1063 = vsel %vm968, %v796, 0
    %v1066 = vsel %vm968, %v797, 0
    %v1069 = vsel %vm968, %v798, 0
    %v1072 = vsel %vm968, %v799, 0
    %v1075 = vsel %vm968, %v800, 0
    %v1078 = vsel %vm968, %v801, 0
    %v1081 = vsel %vm968, %v802, 0
    %v1084 = vsel %vm968, %v803, 0
    %v1087 = vsel %vm968, %v804, 0
    %v1090 = vsel %vm968, %v805, 0
    %v1093 = vsel %vm968, %v806, 0
    %v1096 = vsel %vm968, %v807, 0
    %v1099 = vsel %vm968, %v808, 0
    %v1102 = vsel %vm968, %v809, 0
    %v1105 = vsel %vm968, %v810, 0
    %v1108 = vsel %vm968, %v811, 0
    %v1111 = vsel %vm968, %v812, 0
    %v1114 = vsel %vm968, %v813, 0
    %v1117 = vsel %vm968, %v814, 0
    %v1120 = vsel %vm968, %v815, 0
    %v1123 = vsel %vm968, %v816, 0
    %v1126 = vsel %vm968, %v817, 0
    %v1129 = vsel %vm968, %v818, 0
    %v1132 = vsel %vm968, %v819, 0
    %v1135 = vsel %vm968, %v820, 0
    %v1138 = vsel %vm968, %v821, 0
    %v1141 = vsel %vm968, %v822, 0
    %v1144 = vsel %vm968, %v823, 0
    %v1147 = vsel %vm968, %v824, 0
    %v1150 = vsel %vm968, %v825, 0
    %v1153 = vsel %vm968, %v826, 0
    %v1156 = vsel %vm968, %v827, 0
    %v1159 = vsel %vm968, %v828, 0
    %v1162 = vsel %vm968, %v829, 0
    %v1165 = vsel %vm968, %v830, 0
    %v1168 = vsel %vm968, %v831, 0
    %v1171 = vsel %vm968, %v832, 0
    %v1174 = vsel %vm968, %v833, 0
    %v1177 = vsel %vm968, %v834, 0
    %v1180 = vsel %vm968, %v835, 0
    %v1183 = vsel %vm968, %v836, 0
    %v1186 = vsel %vm968, %v837, 0
    %v1189 = vsel %vm968, %v838, 0
    %v1192 = vsel %vm968, %v839, 0
    %v1195 = vsel %vm968, %v840, 0
    %v1198 = vsel %vm968, %v841, 0
    %v1201 = vsel %vm968, %v842, 0
    %v1204 = vsel %vm968, %v843, 0
    %v1207 = vsel %vm968, %v844, 0
    %v1210 = vsel %vm968, %v845, 0
    %v1213 = vsel %vm968, %v846, 0
    %v1216 = vsel %vm968, %v847, 0
    %v1219 = vsel %vm968, %v848, 0
    %v1222 = vsel %vm968, %v849, 0
    %v1225 = vsel %vm968, %v850, 0
    %v1228 = vsel %vm968, %v851, 0
    %v1231 = vsel %vm968, %v852, 0
    %v1234 = vsel %vm968, %v853, 0
    %v1237 = vsel %vm968, %v854, 0
    %v1240 = vsel %vm968, %v855, 0
    %v1243 = vsel %vm968, %v856, 0
    %v1246 = vsel %vm968, %v857, 0
    %v1249 = vsel %vm968, %v858, 0
    %v1252 = vsel %vm968, %v859, 0
    %v1255 = vsel %vm968, %v860, 0
    %v1258 = vsel %vm968, %v861, 0
    %v1261 = vsel %vm968, %v862, 0
    %v1264 = vsel %vm968, %v863, 0
    %v1267 = vsel %vm968, %v864, 0
    %v1270 = vsel %vm968, %v865, 0
    %v1273 = vsel %vm968, %v866, 0
    %v1276 = vsel %vm968, %v867, 0
    %v1279 = vsel %vm968, %v868, 0
    %v1282 = vsel %vm968, %v869, 0
    %v1285 = vsel %vm968, %v870, 0
    %v1288 = vsel %vm968, %v871, 0
    %v1291 = vsel %vm968, %v872, 0
    %v1294 = vsel %vm968, %v873, 0
    %v1297 = vsel %vm968, %v874, 0
    %v1300 = vsel %vm968, %v875, 0
    %v1303 = vsel %vm968, %v876, 0
    %v1306 = vsel %vm968, %v877, 0
    %v1309 = vsel %vm968, %v878, 0
    %v1312 = vsel %vm968, %v879, 0
    %v1315 = vsel %vm968, %v880, 0
    %v1318 = vsel %vm968, %v881, 0
    %v1321 = vsel %vm968, %v882, 0
    %v1324 = vsel %vm968, %v883, 0
    %v1327 = vsel %vm968, %v884, 0
    %v1330 = vsel %vm968, %v885, 0
    %v1333 = vsel %vm968, %v886, 0
    %v1336 = vsel %vm968, %v887, 0
    %v1339 = vsel %vm968, %v888, 0
    %v1342 = vsel %vm968, %v889, 0
    %v1345 = vsel %vm968, %v890, 0
    %v1348 = vsel %vm968, %v891, 0
    %v1351 = vsel %vm968, %v892, 0
    %v1354 = vsel %vm968, %v893, 0
    %v1357 = vsel %vm968, %v894, 0
    %v1360 = vsel %vm968, %v895, 0
    %v1363 = vsel %vm968, %v896, 0
    %v1366 = vsel %vm968, %v897, 0
    %v1369 = vsel %vm968, %v898, 0
    %v1372 = vsel %vm968, %v899, 0
    %v1375 = vsel %vm968, %v900, 0
    %v1378 = vsel %vm968, %v901, 0
    %v1381 = vsel %vm968, %v902, 0
    %v1384 = vsel %vm968, %v903, 0
    %v1387 = vsel %vm968, %v904, 0
    %v1390 = vsel %vm968, %v905, 0
    %v1393 = vsel %vm968, %v906, 0
    %v1396 = vsel %vm968, %v907, 0
    %v1399 = vsel %vm968, %v908, 0
    %v1402 = vsel %vm968, %v909, 0
    %v1405 = vsel %vm968, %v910, 0
    %v1408 = vsel %vm968, %v911, 0
    %v1411 = vsel %vm968, %v912, 0
    %v1414 = vsel %vm968, %v913, 0
    %v1417 = vsel %vm968, %v914, 0
    %v1420 = vsel %vm968, %v915, 0
    %v1423 = vsel %vm968, %v916, 0
    %v1426 = vsel %vm968, %v917, 0
    %v1429 = vsel %vm968, %v918, 0
    %v1432 = vsel %vm968, %v919, 0
    %v1435 = vsel %vm968, %v920, 0
    %v1438 = vsel %vm968, %v921, 0
    %v1441 = vsel %vm968, %v922, 0
    %v1444 = vsel %vm968, %v923, 0
    %v1447 = vsel %vm968, %v924, 0
    %v1450 = vsel %vm968, %v925, 0
    %v1453 = vsel %vm968, %v926, 0
    %v1456 = vsel %vm968, %v927, 0
    %v1459 = vsel %vm968, %v928, 0
    %v1462 = vsel %vm968, %v929, 0
    %v1465 = vsel %vm968, %v930, 0
    %v1468 = vsel %vm968, %v931, 0
    %v1471 = vsel %vm968, %v932, 0
    %v1474 = vsel %vm968, %v933, 0
    %v1477 = vsel %vm968, %v934, 0
    %v1480 = vsel %vm968, %v935, 0
    %v1483 = vsel %vm968, %v936, 0
    %v1486 = vsel %vm968, %v937, 0
    %v1489 = vsel %vm968, %v938, 0
    %v1492 = vsel %vm968, %v939, 0
    %v1495 = vsel %vm968, %v940, 0
    %v1498 = vsel %vm968, %v941, 0
    %v1501 = vsel %vm968, %v942, 0
    %v1504 = vsel %vm968, %v943, 0
    %v1507 = vsel %vm968, %v944, 0
    %v1510 = vsel %vm968, %v945, 0
    %v1513 = vsel %vm968, %v946, 0
    %v1516 = vsel %vm968, %v947, 0
    %v1519 = vsel %vm968, %v948, 0
    %v1522 = vsel %vm968, %v949, 0
    %v1525 = vsel %vm968, %v950, 0
    %v1528 = vsel %vm968, %v951, 0
    %v1531 = vsel %vm968, %v952, 0
    %v1534 = vsel %vm968, %v953, 0
    %v1537 = vsel %vm968, %v954, 0
    %v1540 = vsel %vm968, %v955, 0
    %v1543 = vsel %vm968, %v956, 0
    %vm1545 = vcmask 1042432
    %v1546 = vsel %vm1545, %v966, 0
    %v1548 = vsel %vm1545, %v967, 0
    %1550 = vmatpush.msra.mxu0 0.0
    %1551 = vmatpush.msra.mxu0 0.0
    %1552 = vmatpush.msra.mxu0 0.0
    %1553 = vmatpush.msra.mxu0 0.0
    %1554 = vmatpush.msra.mxu0 0.0
    %1555 = vmatpush.msra.mxu0 0.0
    %1556 = vmatpush.msra.mxu0 0.0
    %1557 = vmatpush.msra.mxu0 0.0
    %1558 = vmatpush.msra.mxu0 0.0
    %1559 = vmatpush.msra.mxu0 0.0
    %1560 = vmatpush.msra.mxu0 0.0
    %1561 = vmatpush.msra.mxu0 0.0
    %1562 = vmatpush.msra.mxu0 0.0
    %1563 = vmatpush.msra.mxu0 0.0
    %1564 = vmatpush.msra.mxu0 0.0
    %1565 = vmatpush.msra.mxu0 %v1546
    %1566 = vmatmul.f32.gmra.mxu0 %v970
    %v1567 = vpop.f32.mrf.mxu0
    %v1568 = vadd.f32 %v960, %v1567
    %1569 = vmatmul.f32.gmra.mxu0 %v973
    %v1570 = vpop.f32.mrf.mxu0
    %v1571 = vadd.f32 %v960, %v1570
    %1572 = vmatmul.f32.gmra.mxu0 %v976
    %v1573 = vpop.f32.mrf.mxu0
    %v1574 = vadd.f32 %v960, %v1573
    %1575 = vmatmul.f32.gmra.mxu0 %v979
    %v1576 = vpop.f32.mrf.mxu0
    %v1577 = vadd.f32 %v960, %v1576
    %1578 = vmatmul.f32.gmra.mxu0 %v982
    %v1579 = vpop.f32.mrf.mxu0
    %v1580 = vadd.f32 %v960, %v1579
    %1581 = vmatmul.f32.gmra.mxu0 %v985
    %v1582 = vpop.f32.mrf.mxu0
    %v1583 = vadd.f32 %v960, %v1582
    %1584 = vmatmul.f32.gmra.mxu0 %v988
    %v1585 = vpop.f32.mrf.mxu0
    %v1586 = vadd.f32 %v960, %v1585
    %1587 = vmatmul.f32.gmra.mxu0 %v991
    %v1588 = vpop.f32.mrf.mxu0
    %v1589 = vadd.f32 %v960, %v1588
    %1590 = vmatmul.f32.gmra.mxu0 %v994
    %v1591 = vpop.f32.mrf.mxu0
    %v1592 = vadd.f32 %v960, %v1591
    %1593 = vmatmul.f32.gmra.mxu0 %v997
    %v1594 = vpop.f32.mrf.mxu0
    %v1595 = vadd.f32 %v960, %v1594
    %1596 = vmatmul.f32.gmra.mxu0 %v1000
    %v1597 = vpop.f32.mrf.mxu0
    %v1598 = vadd.f32 %v960, %v1597
    %1599 = vmatmul.f32.gmra.mxu0 %v1003
    %v1600 = vpop.f32.mrf.mxu0
    %v1601 = vadd.f32 %v960, %v1600
    %1602 = vmatmul.f32.gmra.mxu0 %v1006
    %v1603 = vpop.f32.mrf.mxu0
    %v1604 = vadd.f32 %v960, %v1603
    %1605 = vmatmul.f32.gmra.mxu0 %v1009
    %v1606 = vpop.f32.mrf.mxu0
    %v1607 = vadd.f32 %v960, %v1606
    %1608 = vmatmul.f32.gmra.mxu0 %v1012
    %v1609 = vpop.f32.mrf.mxu0
    %v1610 = vadd.f32 %v960, %v1609
    %1611 = vmatmul.f32.gmra.mxu0 %v1015
    %v1612 = vpop.f32.mrf.mxu0
    %v1613 = vadd.f32 %v960, %v1612
    %1614 = vmatmul.f32.gmra.mxu0 %v1018
    %v1615 = vpop.f32.mrf.mxu0
    %v1616 = vadd.f32 %v960, %v1615
    %1617 = vmatmul.f32.gmra.mxu0 %v1021
    %v1618 = vpop.f32.mrf.mxu0
    %v1619 = vadd.f32 %v960, %v1618
    %1620 = vmatmul.f32.gmra.mxu0 %v1024
    %v1621 = vpop.f32.mrf.mxu0
    %v1622 = vadd.f32 %v960, %v1621
    %1623 = vmatmul.f32.gmra.mxu0 %v1027
    %v1624 = vpop.f32.mrf.mxu0
    %v1625 = vadd.f32 %v960, %v1624
    %1626 = vmatmul.f32.gmra.mxu0 %v1030
    %v1627 = vpop.f32.mrf.mxu0
    %v1628 = vadd.f32 %v960, %v1627
    %1629 = vmatmul.f32.gmra.mxu0 %v1033
    %v1630 = vpop.f32.mrf.mxu0
    %v1631 = vadd.f32 %v960, %v1630
    %1632 = vmatmul.f32.gmra.mxu0 %v1036
    %v1633 = vpop.f32.mrf.mxu0
    %v1634 = vadd.f32 %v960, %v1633
    %1635 = vmatmul.f32.gmra.mxu0 %v1039
    %v1636 = vpop.f32.mrf.mxu0
    %v1637 = vadd.f32 %v960, %v1636
    %1638 = vmatmul.f32.gmra.mxu0 %v1042
    %v1639 = vpop.f32.mrf.mxu0
    %v1640 = vadd.f32 %v960, %v1639
    %1641 = vmatmul.f32.gmra.mxu0 %v1045
    %v1642 = vpop.f32.mrf.mxu0
    %v1643 = vadd.f32 %v960, %v1642
    %1644 = vmatmul.f32.gmra.mxu0 %v1048
    %v1645 = vpop.f32.mrf.mxu0
    %v1646 = vadd.f32 %v960, %v1645
    %1647 = vmatmul.f32.gmra.mxu0 %v1051
    %v1648 = vpop.f32.mrf.mxu0
    %v1649 = vadd.f32 %v960, %v1648
    %1650 = vmatmul.f32.gmra.mxu0 %v1054
    %v1651 = vpop.f32.mrf.mxu0
    %v1652 = vadd.f32 %v960, %v1651
    %1653 = vmatmul.f32.gmra.mxu0 %v1057
    %v1654 = vpop.f32.mrf.mxu0
    %v1655 = vadd.f32 %v960, %v1654
    %1656 = vmatmul.f32.gmra.mxu0 %v1060
    %v1657 = vpop.f32.mrf.mxu0
    %v1658 = vadd.f32 %v960, %v1657
    %1659 = vmatmul.f32.gmra.mxu0 %v1063
    %v1660 = vpop.f32.mrf.mxu0
    %v1661 = vadd.f32 %v960, %v1660
    %1662 = vmatmul.f32.gmra.mxu0 %v1066
    %v1663 = vpop.f32.mrf.mxu0
    %v1664 = vadd.f32 %v960, %v1663
    %1665 = vmatmul.f32.gmra.mxu0 %v1069
    %v1666 = vpop.f32.mrf.mxu0
    %v1667 = vadd.f32 %v960, %v1666
    %1668 = vmatmul.f32.gmra.mxu0 %v1072
    %v1669 = vpop.f32.mrf.mxu0
    %v1670 = vadd.f32 %v960, %v1669
    %1671 = vmatmul.f32.gmra.mxu0 %v1075
    %v1672 = vpop.f32.mrf.mxu0
    %v1673 = vadd.f32 %v960, %v1672
    %1674 = vmatmul.f32.gmra.mxu0 %v1078
    %v1675 = vpop.f32.mrf.mxu0
    %v1676 = vadd.f32 %v960, %v1675
    %1677 = vmatmul.f32.gmra.mxu0 %v1081
    %v1678 = vpop.f32.mrf.mxu0
    %v1679 = vadd.f32 %v960, %v1678
    %1680 = vmatmul.f32.gmra.mxu0 %v1084
    %v1681 = vpop.f32.mrf.mxu0
    %v1682 = vadd.f32 %v960, %v1681
    %1683 = vmatmul.f32.gmra.mxu0 %v1087
    %v1684 = vpop.f32.mrf.mxu0
    %v1685 = vadd.f32 %v960, %v1684
    %1686 = vmatmul.f32.gmra.mxu0 %v1090
    %v1687 = vpop.f32.mrf.mxu0
    %v1688 = vadd.f32 %v960, %v1687
    %1689 = vmatmul.f32.gmra.mxu0 %v1093
    %v1690 = vpop.f32.mrf.mxu0
    %v1691 = vadd.f32 %v960, %v1690
    %1692 = vmatmul.f32.gmra.mxu0 %v1096
    %v1693 = vpop.f32.mrf.mxu0
    %v1694 = vadd.f32 %v960, %v1693
    %1695 = vmatmul.f32.gmra.mxu0 %v1099
    %v1696 = vpop.f32.mrf.mxu0
    %v1697 = vadd.f32 %v960, %v1696
    %1698 = vmatmul.f32.gmra.mxu0 %v1102
    %v1699 = vpop.f32.mrf.mxu0
    %v1700 = vadd.f32 %v960, %v1699
    %1701 = vmatmul.f32.gmra.mxu0 %v1105
    %v1702 = vpop.f32.mrf.mxu0
    %v1703 = vadd.f32 %v960, %v1702
    %1704 = vmatmul.f32.gmra.mxu0 %v1108
    %v1705 = vpop.f32.mrf.mxu0
    %v1706 = vadd.f32 %v960, %v1705
    %1707 = vmatmul.f32.gmra.mxu0 %v1111
    %v1708 = vpop.f32.mrf.mxu0
    %v1709 = vadd.f32 %v960, %v1708
    %1710 = vmatmul.f32.gmra.mxu0 %v1114
    %v1711 = vpop.f32.mrf.mxu0
    %v1712 = vadd.f32 %v960, %v1711
    %1713 = vmatmul.f32.gmra.mxu0 %v1117
    %v1714 = vpop.f32.mrf.mxu0
    %v1715 = vadd.f32 %v960, %v1714
    %1716 = vmatmul.f32.gmra.mxu0 %v1120
    %v1717 = vpop.f32.mrf.mxu0
    %v1718 = vadd.f32 %v960, %v1717
    %1719 = vmatmul.f32.gmra.mxu0 %v1123
    %v1720 = vpop.f32.mrf.mxu0
    %v1721 = vadd.f32 %v960, %v1720
    %1722 = vmatmul.f32.gmra.mxu0 %v1126
    %v1723 = vpop.f32.mrf.mxu0
    %v1724 = vadd.f32 %v960, %v1723
    %1725 = vmatmul.f32.gmra.mxu0 %v1129
    %v1726 = vpop.f32.mrf.mxu0
    %v1727 = vadd.f32 %v960, %v1726
    %1728 = vmatmul.f32.gmra.mxu0 %v1132
    %v1729 = vpop.f32.mrf.mxu0
    %v1730 = vadd.f32 %v960, %v1729
    %1731 = vmatmul.f32.gmra.mxu0 %v1135
    %v1732 = vpop.f32.mrf.mxu0
    %v1733 = vadd.f32 %v960, %v1732
    %1734 = vmatmul.f32.gmra.mxu0 %v1138
    %v1735 = vpop.f32.mrf.mxu0
    %v1736 = vadd.f32 %v960, %v1735
    %1737 = vmatmul.f32.gmra.mxu0 %v1141
    %v1738 = vpop.f32.mrf.mxu0
    %v1739 = vadd.f32 %v960, %v1738
    %1740 = vmatmul.f32.gmra.mxu0 %v1144
    %v1741 = vpop.f32.mrf.mxu0
    %v1742 = vadd.f32 %v960, %v1741
    %1743 = vmatmul.f32.gmra.mxu0 %v1147
    %v1744 = vpop.f32.mrf.mxu0
    %v1745 = vadd.f32 %v960, %v1744
    %1746 = vmatmul.f32.gmra.mxu0 %v1150
    %v1747 = vpop.f32.mrf.mxu0
    %v1748 = vadd.f32 %v960, %v1747
    %1749 = vmatmul.f32.gmra.mxu0 %v1153
    %v1750 = vpop.f32.mrf.mxu0
    %v1751 = vadd.f32 %v960, %v1750
    %1752 = vmatmul.f32.gmra.mxu0 %v1156
    %v1753 = vpop.f32.mrf.mxu0
    %v1754 = vadd.f32 %v960, %v1753
    %1755 = vmatmul.f32.gmra.mxu0 %v1159
    %v1756 = vpop.f32.mrf.mxu0
    %v1757 = vadd.f32 %v960, %v1756
    %1758 = vmatmul.f32.gmra.mxu0 %v1162
    %v1759 = vpop.f32.mrf.mxu0
    %v1760 = vadd.f32 %v960, %v1759
    %1761 = vmatmul.f32.gmra.mxu0 %v1165
    %v1762 = vpop.f32.mrf.mxu0
    %v1763 = vadd.f32 %v960, %v1762
    %1764 = vmatmul.f32.gmra.mxu0 %v1168
    %v1765 = vpop.f32.mrf.mxu0
    %v1766 = vadd.f32 %v960, %v1765
    %1767 = vmatmul.f32.gmra.mxu0 %v1171
    %v1768 = vpop.f32.mrf.mxu0
    %v1769 = vadd.f32 %v960, %v1768
    %1770 = vmatmul.f32.gmra.mxu0 %v1174
    %v1771 = vpop.f32.mrf.mxu0
    %v1772 = vadd.f32 %v960, %v1771
    %1773 = vmatmul.f32.gmra.mxu0 %v1177
    %v1774 = vpop.f32.mrf.mxu0
    %v1775 = vadd.f32 %v960, %v1774
    %1776 = vmatmul.f32.gmra.mxu0 %v1180
    %v1777 = vpop.f32.mrf.mxu0
    %v1778 = vadd.f32 %v960, %v1777
    %1779 = vmatmul.f32.gmra.mxu0 %v1183
    %v1780 = vpop.f32.mrf.mxu0
    %v1781 = vadd.f32 %v960, %v1780
    %1782 = vmatmul.f32.gmra.mxu0 %v1186
    %v1783 = vpop.f32.mrf.mxu0
    %v1784 = vadd.f32 %v960, %v1783
    %1785 = vmatmul.f32.gmra.mxu0 %v1189
    %v1786 = vpop.f32.mrf.mxu0
    %v1787 = vadd.f32 %v960, %v1786
    %1788 = vmatmul.f32.gmra.mxu0 %v1192
    %v1789 = vpop.f32.mrf.mxu0
    %v1790 = vadd.f32 %v960, %v1789
    %1791 = vmatmul.f32.gmra.mxu0 %v1195
    %v1792 = vpop.f32.mrf.mxu0
    %v1793 = vadd.f32 %v960, %v1792
    %1794 = vmatmul.f32.gmra.mxu0 %v1198
    %v1795 = vpop.f32.mrf.mxu0
    %v1796 = vadd.f32 %v960, %v1795
    %1797 = vmatmul.f32.gmra.mxu0 %v1201
    %v1798 = vpop.f32.mrf.mxu0
    %v1799 = vadd.f32 %v960, %v1798
    %1800 = vmatmul.f32.gmra.mxu0 %v1204
    %v1801 = vpop.f32.mrf.mxu0
    %v1802 = vadd.f32 %v960, %v1801
    %1803 = vmatmul.f32.gmra.mxu0 %v1207
    %v1804 = vpop.f32.mrf.mxu0
    %v1805 = vadd.f32 %v960, %v1804
    %1806 = vmatmul.f32.gmra.mxu0 %v1210
    %v1807 = vpop.f32.mrf.mxu0
    %v1808 = vadd.f32 %v960, %v1807
    %1809 = vmatmul.f32.gmra.mxu0 %v1213
    %v1810 = vpop.f32.mrf.mxu0
    %v1811 = vadd.f32 %v960, %v1810
    %1812 = vmatmul.f32.gmra.mxu0 %v1216
    %v1813 = vpop.f32.mrf.mxu0
    %v1814 = vadd.f32 %v960, %v1813
    %1815 = vmatmul.f32.gmra.mxu0 %v1219
    %v1816 = vpop.f32.mrf.mxu0
    %v1817 = vadd.f32 %v960, %v1816
    %1818 = vmatmul.f32.gmra.mxu0 %v1222
    %v1819 = vpop.f32.mrf.mxu0
    %v1820 = vadd.f32 %v960, %v1819
    %1821 = vmatmul.f32.gmra.mxu0 %v1225
    %v1822 = vpop.f32.mrf.mxu0
    %v1823 = vadd.f32 %v960, %v1822
    %1824 = vmatmul.f32.gmra.mxu0 %v1228
    %v1825 = vpop.f32.mrf.mxu0
    %v1826 = vadd.f32 %v960, %v1825
    %1827 = vmatmul.f32.gmra.mxu0 %v1231
    %v1828 = vpop.f32.mrf.mxu0
    %v1829 = vadd.f32 %v960, %v1828
    %1830 = vmatmul.f32.gmra.mxu0 %v1234
    %v1831 = vpop.f32.mrf.mxu0
    %v1832 = vadd.f32 %v960, %v1831
    %1833 = vmatmul.f32.gmra.mxu0 %v1237
    %v1834 = vpop.f32.mrf.mxu0
    %v1835 = vadd.f32 %v960, %v1834
    %1836 = vmatmul.f32.gmra.mxu0 %v1240
    %v1837 = vpop.f32.mrf.mxu0
    %v1838 = vadd.f32 %v960, %v1837
    %1839 = vmatmul.f32.gmra.mxu0 %v1243
    %v1840 = vpop.f32.mrf.mxu0
    %v1841 = vadd.f32 %v960, %v1840
    %1842 = vmatmul.f32.gmra.mxu0 %v1246
    %v1843 = vpop.f32.mrf.mxu0
    %v1844 = vadd.f32 %v960, %v1843
    %1845 = vmatmul.f32.gmra.mxu0 %v1249
    %v1846 = vpop.f32.mrf.mxu0
    %v1847 = vadd.f32 %v960, %v1846
    %1848 = vmatmul.f32.gmra.mxu0 %v1252
    %v1849 = vpop.f32.mrf.mxu0
    %v1850 = vadd.f32 %v960, %v1849
    %1851 = vmatmul.f32.gmra.mxu0 %v1255
    %v1852 = vpop.f32.mrf.mxu0
    %v1853 = vadd.f32 %v960, %v1852
    %1854 = vmatmul.f32.gmra.mxu0 %v1258
    %v1855 = vpop.f32.mrf.mxu0
    %v1856 = vadd.f32 %v960, %v1855
    %1857 = vmatmul.f32.gmra.mxu0 %v1261
    %v1858 = vpop.f32.mrf.mxu0
    %v1859 = vadd.f32 %v960, %v1858
    %1860 = vmatmul.f32.gmra.mxu0 %v1264
    %v1861 = vpop.f32.mrf.mxu0
    %v1862 = vadd.f32 %v960, %v1861
    %1863 = vmatmul.f32.gmra.mxu0 %v1267
    %v1864 = vpop.f32.mrf.mxu0
    %v1865 = vadd.f32 %v960, %v1864
    %1866 = vmatmul.f32.gmra.mxu0 %v1270
    %v1867 = vpop.f32.mrf.mxu0
    %v1868 = vadd.f32 %v960, %v1867
    %1869 = vmatmul.f32.gmra.mxu0 %v1273
    %v1870 = vpop.f32.mrf.mxu0
    %v1871 = vadd.f32 %v960, %v1870
    %1872 = vmatmul.f32.gmra.mxu0 %v1276
    %v1873 = vpop.f32.mrf.mxu0
    %v1874 = vadd.f32 %v960, %v1873
    %1875 = vmatmul.f32.gmra.mxu0 %v1279
    %v1876 = vpop.f32.mrf.mxu0
    %v1877 = vadd.f32 %v960, %v1876
    %1878 = vmatmul.f32.gmra.mxu0 %v1282
    %v1879 = vpop.f32.mrf.mxu0
    %v1880 = vadd.f32 %v960, %v1879
    %1881 = vmatmul.f32.gmra.mxu0 %v1285
    %v1882 = vpop.f32.mrf.mxu0
    %v1883 = vadd.f32 %v960, %v1882
    %1884 = vmatmul.f32.gmra.mxu0 %v1288
    %v1885 = vpop.f32.mrf.mxu0
    %v1886 = vadd.f32 %v960, %v1885
    %1887 = vmatmul.f32.gmra.mxu0 %v1291
    %v1888 = vpop.f32.mrf.mxu0
    %v1889 = vadd.f32 %v960, %v1888
    %1890 = vmatmul.f32.gmra.mxu0 %v1294
    %v1891 = vpop.f32.mrf.mxu0
    %v1892 = vadd.f32 %v960, %v1891
    %1893 = vmatmul.f32.gmra.mxu0 %v1297
    %v1894 = vpop.f32.mrf.mxu0
    %v1895 = vadd.f32 %v960, %v1894
    %1896 = vmatmul.f32.gmra.mxu0 %v1300
    %v1897 = vpop.f32.mrf.mxu0
    %v1898 = vadd.f32 %v960, %v1897
    %1899 = vmatmul.f32.gmra.mxu0 %v1303
    %v1900 = vpop.f32.mrf.mxu0
    %v1901 = vadd.f32 %v960, %v1900
    %1902 = vmatmul.f32.gmra.mxu0 %v1306
    %v1903 = vpop.f32.mrf.mxu0
    %v1904 = vadd.f32 %v960, %v1903
    %1905 = vmatmul.f32.gmra.mxu0 %v1309
    %v1906 = vpop.f32.mrf.mxu0
    %v1907 = vadd.f32 %v960, %v1906
    %1908 = vmatmul.f32.gmra.mxu0 %v1312
    %v1909 = vpop.f32.mrf.mxu0
    %v1910 = vadd.f32 %v960, %v1909
    %1911 = vmatmul.f32.gmra.mxu0 %v1315
    %v1912 = vpop.f32.mrf.mxu0
    %v1913 = vadd.f32 %v960, %v1912
    %1914 = vmatmul.f32.gmra.mxu0 %v1318
    %v1915 = vpop.f32.mrf.mxu0
    %v1916 = vadd.f32 %v960, %v1915
    %1917 = vmatmul.f32.gmra.mxu0 %v1321
    %v1918 = vpop.f32.mrf.mxu0
    %v1919 = vadd.f32 %v960, %v1918
    %1920 = vmatmul.f32.gmra.mxu0 %v1324
    %v1921 = vpop.f32.mrf.mxu0
    %v1922 = vadd.f32 %v960, %v1921
    %1923 = vmatmul.f32.gmra.mxu0 %v1327
    %v1924 = vpop.f32.mrf.mxu0
    %v1925 = vadd.f32 %v960, %v1924
    %1926 = vmatmul.f32.gmra.mxu0 %v1330
    %v1927 = vpop.f32.mrf.mxu0
    %v1928 = vadd.f32 %v960, %v1927
    %1929 = vmatmul.f32.gmra.mxu0 %v1333
    %v1930 = vpop.f32.mrf.mxu0
    %v1931 = vadd.f32 %v960, %v1930
    %1932 = vmatmul.f32.gmra.mxu0 %v1336
    %v1933 = vpop.f32.mrf.mxu0
    %v1934 = vadd.f32 %v960, %v1933
    %1935 = vmatmul.f32.gmra.mxu0 %v1339
    %v1936 = vpop.f32.mrf.mxu0
    %v1937 = vadd.f32 %v960, %v1936
    %1938 = vmatmul.f32.gmra.mxu0 %v1342
    %v1939 = vpop.f32.mrf.mxu0
    %v1940 = vadd.f32 %v960, %v1939
    %1941 = vmatmul.f32.gmra.mxu0 %v1345
    %v1942 = vpop.f32.mrf.mxu0
    %v1943 = vadd.f32 %v960, %v1942
    %1944 = vmatmul.f32.gmra.mxu0 %v1348
    %v1945 = vpop.f32.mrf.mxu0
    %v1946 = vadd.f32 %v960, %v1945
    %1947 = vmatmul.f32.gmra.mxu0 %v1351
    %v1948 = vpop.f32.mrf.mxu0
    %v1949 = vadd.f32 %v960, %v1948
    %1950 = vmatmul.f32.gmra.mxu0 %v1354
    %v1951 = vpop.f32.mrf.mxu0
    %v1952 = vadd.f32 %v960, %v1951
    %1953 = vmatmul.f32.gmra.mxu0 %v1357
    %v1954 = vpop.f32.mrf.mxu0
    %v1955 = vadd.f32 %v960, %v1954
    %1956 = vmatmul.f32.gmra.mxu0 %v1360
    %v1957 = vpop.f32.mrf.mxu0
    %v1958 = vadd.f32 %v960, %v1957
    %1959 = vmatmul.f32.gmra.mxu0 %v1363
    %v1960 = vpop.f32.mrf.mxu0
    %v1961 = vadd.f32 %v960, %v1960
    %1962 = vmatmul.f32.gmra.mxu0 %v1366
    %v1963 = vpop.f32.mrf.mxu0
    %v1964 = vadd.f32 %v960, %v1963
    %1965 = vmatmul.f32.gmra.mxu0 %v1369
    %v1966 = vpop.f32.mrf.mxu0
    %v1967 = vadd.f32 %v960, %v1966
    %1968 = vmatmul.f32.gmra.mxu0 %v1372
    %v1969 = vpop.f32.mrf.mxu0
    %v1970 = vadd.f32 %v960, %v1969
    %1971 = vmatmul.f32.gmra.mxu0 %v1375
    %v1972 = vpop.f32.mrf.mxu0
    %v1973 = vadd.f32 %v960, %v1972
    %1974 = vmatmul.f32.gmra.mxu0 %v1378
    %v1975 = vpop.f32.mrf.mxu0
    %v1976 = vadd.f32 %v960, %v1975
    %1977 = vmatmul.f32.gmra.mxu0 %v1381
    %v1978 = vpop.f32.mrf.mxu0
    %v1979 = vadd.f32 %v960, %v1978
    %1980 = vmatmul.f32.gmra.mxu0 %v1384
    %v1981 = vpop.f32.mrf.mxu0
    %v1982 = vadd.f32 %v960, %v1981
    %1983 = vmatmul.f32.gmra.mxu0 %v1387
    %v1984 = vpop.f32.mrf.mxu0
    %v1985 = vadd.f32 %v960, %v1984
    %1986 = vmatmul.f32.gmra.mxu0 %v1390
    %v1987 = vpop.f32.mrf.mxu0
    %v1988 = vadd.f32 %v960, %v1987
    %1989 = vmatmul.f32.gmra.mxu0 %v1393
    %v1990 = vpop.f32.mrf.mxu0
    %v1991 = vadd.f32 %v960, %v1990
    %1992 = vmatmul.f32.gmra.mxu0 %v1396
    %v1993 = vpop.f32.mrf.mxu0
    %v1994 = vadd.f32 %v960, %v1993
    %1995 = vmatmul.f32.gmra.mxu0 %v1399
    %v1996 = vpop.f32.mrf.mxu0
    %v1997 = vadd.f32 %v960, %v1996
    %1998 = vmatmul.f32.gmra.mxu0 %v1402
    %v1999 = vpop.f32.mrf.mxu0
    %v2000 = vadd.f32 %v960, %v1999
    %2001 = vmatmul.f32.gmra.mxu0 %v1405
    %v2002 = vpop.f32.mrf.mxu0
    %v2003 = vadd.f32 %v960, %v2002
    %2004 = vmatmul.f32.gmra.mxu0 %v1408
    %v2005 = vpop.f32.mrf.mxu0
    %v2006 = vadd.f32 %v960, %v2005
    %2007 = vmatmul.f32.gmra.mxu0 %v1411
    %v2008 = vpop.f32.mrf.mxu0
    %v2009 = vadd.f32 %v960, %v2008
    %2010 = vmatmul.f32.gmra.mxu0 %v1414
    %v2011 = vpop.f32.mrf.mxu0
    %v2012 = vadd.f32 %v960, %v2011
    %2013 = vmatmul.f32.gmra.mxu0 %v1417
    %v2014 = vpop.f32.mrf.mxu0
    %v2015 = vadd.f32 %v960, %v2014
    %2016 = vmatmul.f32.gmra.mxu0 %v1420
    %v2017 = vpop.f32.mrf.mxu0
    %v2018 = vadd.f32 %v960, %v2017
    %2019 = vmatmul.f32.gmra.mxu0 %v1423
    %v2020 = vpop.f32.mrf.mxu0
    %v2021 = vadd.f32 %v960, %v2020
    %2022 = vmatmul.f32.gmra.mxu0 %v1426
    %v2023 = vpop.f32.mrf.mxu0
    %v2024 = vadd.f32 %v960, %v2023
    %2025 = vmatmul.f32.gmra.mxu0 %v1429
    %v2026 = vpop.f32.mrf.mxu0
    %v2027 = vadd.f32 %v960, %v2026
    %2028 = vmatmul.f32.gmra.mxu0 %v1432
    %v2029 = vpop.f32.mrf.mxu0
    %v2030 = vadd.f32 %v960, %v2029
    %2031 = vmatmul.f32.gmra.mxu0 %v1435
    %v2032 = vpop.f32.mrf.mxu0
    %v2033 = vadd.f32 %v960, %v2032
    %2034 = vmatmul.f32.gmra.mxu0 %v1438
    %v2035 = vpop.f32.mrf.mxu0
    %v2036 = vadd.f32 %v960, %v2035
    %2037 = vmatmul.f32.gmra.mxu0 %v1441
    %v2038 = vpop.f32.mrf.mxu0
    %v2039 = vadd.f32 %v960, %v2038
    %2040 = vmatmul.f32.gmra.mxu0 %v1444
    %v2041 = vpop.f32.mrf.mxu0
    %v2042 = vadd.f32 %v960, %v2041
    %2043 = vmatmul.f32.gmra.mxu0 %v1447
    %v2044 = vpop.f32.mrf.mxu0
    %v2045 = vadd.f32 %v960, %v2044
    %2046 = vmatmul.f32.gmra.mxu0 %v1450
    %v2047 = vpop.f32.mrf.mxu0
    %v2048 = vadd.f32 %v960, %v2047
    %2049 = vmatmul.f32.gmra.mxu0 %v1453
    %v2050 = vpop.f32.mrf.mxu0
    %v2051 = vadd.f32 %v960, %v2050
    %2052 = vmatmul.f32.gmra.mxu0 %v1456
    %v2053 = vpop.f32.mrf.mxu0
    %v2054 = vadd.f32 %v960, %v2053
    %2055 = vmatmul.f32.gmra.mxu0 %v1459
    %v2056 = vpop.f32.mrf.mxu0
    %v2057 = vadd.f32 %v960, %v2056
    %2058 = vmatmul.f32.gmra.mxu0 %v1462
    %v2059 = vpop.f32.mrf.mxu0
    %v2060 = vadd.f32 %v960, %v2059
    %2061 = vmatmul.f32.gmra.mxu0 %v1465
    %v2062 = vpop.f32.mrf.mxu0
    %v2063 = vadd.f32 %v960, %v2062
    %2064 = vmatmul.f32.gmra.mxu0 %v1468
    %v2065 = vpop.f32.mrf.mxu0
    %v2066 = vadd.f32 %v960, %v2065
    %2067 = vmatmul.f32.gmra.mxu0 %v1471
    %v2068 = vpop.f32.mrf.mxu0
    %v2069 = vadd.f32 %v960, %v2068
    %2070 = vmatmul.f32.gmra.mxu0 %v1474
    %v2071 = vpop.f32.mrf.mxu0
    %v2072 = vadd.f32 %v960, %v2071
    %2073 = vmatmul.f32.gmra.mxu0 %v1477
    %v2074 = vpop.f32.mrf.mxu0
    %v2075 = vadd.f32 %v960, %v2074
    %2076 = vmatmul.f32.gmra.mxu0 %v1480
    %v2077 = vpop.f32.mrf.mxu0
    %v2078 = vadd.f32 %v960, %v2077
    %2079 = vmatmul.f32.gmra.mxu0 %v1483
    %v2080 = vpop.f32.mrf.mxu0
    %v2081 = vadd.f32 %v960, %v2080
    %2082 = vmatmul.f32.gmra.mxu0 %v1486
    %v2083 = vpop.f32.mrf.mxu0
    %v2084 = vadd.f32 %v960, %v2083
    %2085 = vmatmul.f32.gmra.mxu0 %v1489
    %v2086 = vpop.f32.mrf.mxu0
    %v2087 = vadd.f32 %v960, %v2086
    %2088 = vmatmul.f32.gmra.mxu0 %v1492
    %v2089 = vpop.f32.mrf.mxu0
    %v2090 = vadd.f32 %v960, %v2089
    %2091 = vmatmul.f32.gmra.mxu0 %v1495
    %v2092 = vpop.f32.mrf.mxu0
    %v2093 = vadd.f32 %v960, %v2092
    %2094 = vmatmul.f32.gmra.mxu0 %v1498
    %v2095 = vpop.f32.mrf.mxu0
    %v2096 = vadd.f32 %v960, %v2095
    %2097 = vmatmul.f32.gmra.mxu0 %v1501
    %v2098 = vpop.f32.mrf.mxu0
    %v2099 = vadd.f32 %v960, %v2098
    %2100 = vmatmul.f32.gmra.mxu0 %v1504
    %v2101 = vpop.f32.mrf.mxu0
    %v2102 = vadd.f32 %v960, %v2101
    %2103 = vmatmul.f32.gmra.mxu0 %v1507
    %v2104 = vpop.f32.mrf.mxu0
    %v2105 = vadd.f32 %v960, %v2104
    %2106 = vmatmul.f32.gmra.mxu0 %v1510
    %v2107 = vpop.f32.mrf.mxu0
    %v2108 = vadd.f32 %v960, %v2107
    %2109 = vmatmul.f32.gmra.mxu0 %v1513
    %v2110 = vpop.f32.mrf.mxu0
    %v2111 = vadd.f32 %v960, %v2110
    %2112 = vmatmul.f32.gmra.mxu0 %v1516
    %v2113 = vpop.f32.mrf.mxu0
    %v2114 = vadd.f32 %v960, %v2113
    %2115 = vmatmul.f32.gmra.mxu0 %v1519
    %v2116 = vpop.f32.mrf.mxu0
    %v2117 = vadd.f32 %v960, %v2116
    %2118 = vmatmul.f32.gmra.mxu0 %v1522
    %v2119 = vpop.f32.mrf.mxu0
    %v2120 = vadd.f32 %v960, %v2119
    %2121 = vmatmul.f32.gmra.mxu0 %v1525
    %v2122 = vpop.f32.mrf.mxu0
    %v2123 = vadd.f32 %v960, %v2122
    %2124 = vmatmul.f32.gmra.mxu0 %v1528
    %v2125 = vpop.f32.mrf.mxu0
    %v2126 = vadd.f32 %v960, %v2125
    %2127 = vmatmul.f32.gmra.mxu0 %v1531
    %v2128 = vpop.f32.mrf.mxu0
    %v2129 = vadd.f32 %v960, %v2128
    %2130 = vmatmul.f32.gmra.mxu0 %v1534
    %v2131 = vpop.f32.mrf.mxu0
    %v2132 = vadd.f32 %v960, %v2131
    %2133 = vmatmul.f32.gmra.mxu0 %v1537
    %v2134 = vpop.f32.mrf.mxu0
    %v2135 = vadd.f32 %v960, %v2134
    %2136 = vmatmul.f32.gmra.mxu0 %v1540
    %v2137 = vpop.f32.mrf.mxu0
    %v2138 = vadd.f32 %v960, %v2137
    %2139 = vmatmul.f32.gmra.mxu0 %v1543
    %v2140 = vpop.f32.mrf.mxu0
    %v2141 = vadd.f32 %v960, %v2140
    %2142 = vdwg.mxu0
    %2143 = vmatpush.msra.mxu0 0.0
    %2144 = vmatpush.msra.mxu0 0.0
    %2145 = vmatpush.msra.mxu0 0.0
    %2146 = vmatpush.msra.mxu0 0.0
    %2147 = vmatpush.msra.mxu0 0.0
    %2148 = vmatpush.msra.mxu0 0.0
    %2149 = vmatpush.msra.mxu0 0.0
    %2150 = vmatpush.msra.mxu0 0.0
    %2151 = vmatpush.msra.mxu0 0.0
    %2152 = vmatpush.msra.mxu0 0.0
    %2153 = vmatpush.msra.mxu0 0.0
    %2154 = vmatpush.msra.mxu0 0.0
    %2155 = vmatpush.msra.mxu0 0.0
    %2156 = vmatpush.msra.mxu0 0.0
    %2157 = vmatpush.msra.mxu0 0.0
    %2158 = vmatpush.msra.mxu0 %v1548
    %2159 = vmatmul.f32.gmra.mxu0 %v970
    %v2160 = vpop.f32.mrf.mxu0
    %v2161 = vadd.f32 %v961, %v2160
    %2162 = vmatmul.f32.gmra.mxu0 %v973
    %v2163 = vpop.f32.mrf.mxu0
    %v2164 = vadd.f32 %v961, %v2163
    %2165 = vmatmul.f32.gmra.mxu0 %v976
    %v2166 = vpop.f32.mrf.mxu0
    %v2167 = vadd.f32 %v961, %v2166
    %2168 = vmatmul.f32.gmra.mxu0 %v979
    %v2169 = vpop.f32.mrf.mxu0
    %v2170 = vadd.f32 %v961, %v2169
    %2171 = vmatmul.f32.gmra.mxu0 %v982
    %v2172 = vpop.f32.mrf.mxu0
    %v2173 = vadd.f32 %v961, %v2172
    %2174 = vmatmul.f32.gmra.mxu0 %v985
    %v2175 = vpop.f32.mrf.mxu0
    %v2176 = vadd.f32 %v961, %v2175
    %2177 = vmatmul.f32.gmra.mxu0 %v988
    %v2178 = vpop.f32.mrf.mxu0
    %v2179 = vadd.f32 %v961, %v2178
    %2180 = vmatmul.f32.gmra.mxu0 %v991
    %v2181 = vpop.f32.mrf.mxu0
    %v2182 = vadd.f32 %v961, %v2181
    %2183 = vmatmul.f32.gmra.mxu0 %v994
    %v2184 = vpop.f32.mrf.mxu0
    %v2185 = vadd.f32 %v961, %v2184
    %2186 = vmatmul.f32.gmra.mxu0 %v997
    %v2187 = vpop.f32.mrf.mxu0
    %v2188 = vadd.f32 %v961, %v2187
    %2189 = vmatmul.f32.gmra.mxu0 %v1000
    %v2190 = vpop.f32.mrf.mxu0
    %v2191 = vadd.f32 %v961, %v2190
    %2192 = vmatmul.f32.gmra.mxu0 %v1003
    %v2193 = vpop.f32.mrf.mxu0
    %v2194 = vadd.f32 %v961, %v2193
    %2195 = vmatmul.f32.gmra.mxu0 %v1006
    %v2196 = vpop.f32.mrf.mxu0
    %v2197 = vadd.f32 %v961, %v2196
    %2198 = vmatmul.f32.gmra.mxu0 %v1009
    %v2199 = vpop.f32.mrf.mxu0
    %v2200 = vadd.f32 %v961, %v2199
    %2201 = vmatmul.f32.gmra.mxu0 %v1012
    %v2202 = vpop.f32.mrf.mxu0
    %v2203 = vadd.f32 %v961, %v2202
    %2204 = vmatmul.f32.gmra.mxu0 %v1015
    %v2205 = vpop.f32.mrf.mxu0
    %v2206 = vadd.f32 %v961, %v2205
    %2207 = vmatmul.f32.gmra.mxu0 %v1018
    %v2208 = vpop.f32.mrf.mxu0
    %v2209 = vadd.f32 %v961, %v2208
    %2210 = vmatmul.f32.gmra.mxu0 %v1021
    %v2211 = vpop.f32.mrf.mxu0
    %v2212 = vadd.f32 %v961, %v2211
    %2213 = vmatmul.f32.gmra.mxu0 %v1024
    %v2214 = vpop.f32.mrf.mxu0
    %v2215 = vadd.f32 %v961, %v2214
    %2216 = vmatmul.f32.gmra.mxu0 %v1027
    %v2217 = vpop.f32.mrf.mxu0
    %v2218 = vadd.f32 %v961, %v2217
    %2219 = vmatmul.f32.gmra.mxu0 %v1030
    %v2220 = vpop.f32.mrf.mxu0
    %v2221 = vadd.f32 %v961, %v2220
    %2222 = vmatmul.f32.gmra.mxu0 %v1033
    %v2223 = vpop.f32.mrf.mxu0
    %v2224 = vadd.f32 %v961, %v2223
    %2225 = vmatmul.f32.gmra.mxu0 %v1036
    %v2226 = vpop.f32.mrf.mxu0
    %v2227 = vadd.f32 %v961, %v2226
    %2228 = vmatmul.f32.gmra.mxu0 %v1039
    %v2229 = vpop.f32.mrf.mxu0
    %v2230 = vadd.f32 %v961, %v2229
    %2231 = vmatmul.f32.gmra.mxu0 %v1042
    %v2232 = vpop.f32.mrf.mxu0
    %v2233 = vadd.f32 %v961, %v2232
    %2234 = vmatmul.f32.gmra.mxu0 %v1045
    %v2235 = vpop.f32.mrf.mxu0
    %v2236 = vadd.f32 %v961, %v2235
    %2237 = vmatmul.f32.gmra.mxu0 %v1048
    %v2238 = vpop.f32.mrf.mxu0
    %v2239 = vadd.f32 %v961, %v2238
    %2240 = vmatmul.f32.gmra.mxu0 %v1051
    %v2241 = vpop.f32.mrf.mxu0
    %v2242 = vadd.f32 %v961, %v2241
    %2243 = vmatmul.f32.gmra.mxu0 %v1054
    %v2244 = vpop.f32.mrf.mxu0
    %v2245 = vadd.f32 %v961, %v2244
    %2246 = vmatmul.f32.gmra.mxu0 %v1057
    %v2247 = vpop.f32.mrf.mxu0
    %v2248 = vadd.f32 %v961, %v2247
    %2249 = vmatmul.f32.gmra.mxu0 %v1060
    %v2250 = vpop.f32.mrf.mxu0
    %v2251 = vadd.f32 %v961, %v2250
    %2252 = vmatmul.f32.gmra.mxu0 %v1063
    %v2253 = vpop.f32.mrf.mxu0
    %v2254 = vadd.f32 %v961, %v2253
    %2255 = vmatmul.f32.gmra.mxu0 %v1066
    %v2256 = vpop.f32.mrf.mxu0
    %v2257 = vadd.f32 %v961, %v2256
    %2258 = vmatmul.f32.gmra.mxu0 %v1069
    %v2259 = vpop.f32.mrf.mxu0
    %v2260 = vadd.f32 %v961, %v2259
    %2261 = vmatmul.f32.gmra.mxu0 %v1072
    %v2262 = vpop.f32.mrf.mxu0
    %v2263 = vadd.f32 %v961, %v2262
    %2264 = vmatmul.f32.gmra.mxu0 %v1075
    %v2265 = vpop.f32.mrf.mxu0
    %v2266 = vadd.f32 %v961, %v2265
    %2267 = vmatmul.f32.gmra.mxu0 %v1078
    %v2268 = vpop.f32.mrf.mxu0
    %v2269 = vadd.f32 %v961, %v2268
    %2270 = vmatmul.f32.gmra.mxu0 %v1081
    %v2271 = vpop.f32.mrf.mxu0
    %v2272 = vadd.f32 %v961, %v2271
    %2273 = vmatmul.f32.gmra.mxu0 %v1084
    %v2274 = vpop.f32.mrf.mxu0
    %v2275 = vadd.f32 %v961, %v2274
    %2276 = vmatmul.f32.gmra.mxu0 %v1087
    %v2277 = vpop.f32.mrf.mxu0
    %v2278 = vadd.f32 %v961, %v2277
    %2279 = vmatmul.f32.gmra.mxu0 %v1090
    %v2280 = vpop.f32.mrf.mxu0
    %v2281 = vadd.f32 %v961, %v2280
    %2282 = vmatmul.f32.gmra.mxu0 %v1093
    %v2283 = vpop.f32.mrf.mxu0
    %v2284 = vadd.f32 %v961, %v2283
    %2285 = vmatmul.f32.gmra.mxu0 %v1096
    %v2286 = vpop.f32.mrf.mxu0
    %v2287 = vadd.f32 %v961, %v2286
    %2288 = vmatmul.f32.gmra.mxu0 %v1099
    %v2289 = vpop.f32.mrf.mxu0
    %v2290 = vadd.f32 %v961, %v2289
    %2291 = vmatmul.f32.gmra.mxu0 %v1102
    %v2292 = vpop.f32.mrf.mxu0
    %v2293 = vadd.f32 %v961, %v2292
    %2294 = vmatmul.f32.gmra.mxu0 %v1105
    %v2295 = vpop.f32.mrf.mxu0
    %v2296 = vadd.f32 %v961, %v2295
    %2297 = vmatmul.f32.gmra.mxu0 %v1108
    %v2298 = vpop.f32.mrf.mxu0
    %v2299 = vadd.f32 %v961, %v2298
    %2300 = vmatmul.f32.gmra.mxu0 %v1111
    %v2301 = vpop.f32.mrf.mxu0
    %v2302 = vadd.f32 %v961, %v2301
    %2303 = vmatmul.f32.gmra.mxu0 %v1114
    %v2304 = vpop.f32.mrf.mxu0
    %v2305 = vadd.f32 %v961, %v2304
    %2306 = vmatmul.f32.gmra.mxu0 %v1117
    %v2307 = vpop.f32.mrf.mxu0
    %v2308 = vadd.f32 %v961, %v2307
    %2309 = vmatmul.f32.gmra.mxu0 %v1120
    %v2310 = vpop.f32.mrf.mxu0
    %v2311 = vadd.f32 %v961, %v2310
    %2312 = vmatmul.f32.gmra.mxu0 %v1123
    %v2313 = vpop.f32.mrf.mxu0
    %v2314 = vadd.f32 %v961, %v2313
    %2315 = vmatmul.f32.gmra.mxu0 %v1126
    %v2316 = vpop.f32.mrf.mxu0
    %v2317 = vadd.f32 %v961, %v2316
    %2318 = vmatmul.f32.gmra.mxu0 %v1129
    %v2319 = vpop.f32.mrf.mxu0
    %v2320 = vadd.f32 %v961, %v2319
    %2321 = vmatmul.f32.gmra.mxu0 %v1132
    %v2322 = vpop.f32.mrf.mxu0
    %v2323 = vadd.f32 %v961, %v2322
    %2324 = vmatmul.f32.gmra.mxu0 %v1135
    %v2325 = vpop.f32.mrf.mxu0
    %v2326 = vadd.f32 %v961, %v2325
    %2327 = vmatmul.f32.gmra.mxu0 %v1138
    %v2328 = vpop.f32.mrf.mxu0
    %v2329 = vadd.f32 %v961, %v2328
    %2330 = vmatmul.f32.gmra.mxu0 %v1141
    %v2331 = vpop.f32.mrf.mxu0
    %v2332 = vadd.f32 %v961, %v2331
    %2333 = vmatmul.f32.gmra.mxu0 %v1144
    %v2334 = vpop.f32.mrf.mxu0
    %v2335 = vadd.f32 %v961, %v2334
    %2336 = vmatmul.f32.gmra.mxu0 %v1147
    %v2337 = vpop.f32.mrf.mxu0
    %v2338 = vadd.f32 %v961, %v2337
    %2339 = vmatmul.f32.gmra.mxu0 %v1150
    %v2340 = vpop.f32.mrf.mxu0
    %v2341 = vadd.f32 %v961, %v2340
    %2342 = vmatmul.f32.gmra.mxu0 %v1153
    %v2343 = vpop.f32.mrf.mxu0
    %v2344 = vadd.f32 %v961, %v2343
    %2345 = vmatmul.f32.gmra.mxu0 %v1156
    %v2346 = vpop.f32.mrf.mxu0
    %v2347 = vadd.f32 %v961, %v2346
    %2348 = vmatmul.f32.gmra.mxu0 %v1159
    %v2349 = vpop.f32.mrf.mxu0
    %v2350 = vadd.f32 %v961, %v2349
    %2351 = vmatmul.f32.gmra.mxu0 %v1162
    %v2352 = vpop.f32.mrf.mxu0
    %v2353 = vadd.f32 %v961, %v2352
    %2354 = vmatmul.f32.gmra.mxu0 %v1165
    %v2355 = vpop.f32.mrf.mxu0
    %v2356 = vadd.f32 %v961, %v2355
    %2357 = vmatmul.f32.gmra.mxu0 %v1168
    %v2358 = vpop.f32.mrf.mxu0
    %v2359 = vadd.f32 %v961, %v2358
    %2360 = vmatmul.f32.gmra.mxu0 %v1171
    %v2361 = vpop.f32.mrf.mxu0
    %v2362 = vadd.f32 %v961, %v2361
    %2363 = vmatmul.f32.gmra.mxu0 %v1174
    %v2364 = vpop.f32.mrf.mxu0
    %v2365 = vadd.f32 %v961, %v2364
    %2366 = vmatmul.f32.gmra.mxu0 %v1177
    %v2367 = vpop.f32.mrf.mxu0
    %v2368 = vadd.f32 %v961, %v2367
    %2369 = vmatmul.f32.gmra.mxu0 %v1180
    %v2370 = vpop.f32.mrf.mxu0
    %v2371 = vadd.f32 %v961, %v2370
    %2372 = vmatmul.f32.gmra.mxu0 %v1183
    %v2373 = vpop.f32.mrf.mxu0
    %v2374 = vadd.f32 %v961, %v2373
    %2375 = vmatmul.f32.gmra.mxu0 %v1186
    %v2376 = vpop.f32.mrf.mxu0
    %v2377 = vadd.f32 %v961, %v2376
    %2378 = vmatmul.f32.gmra.mxu0 %v1189
    %v2379 = vpop.f32.mrf.mxu0
    %v2380 = vadd.f32 %v961, %v2379
    %2381 = vmatmul.f32.gmra.mxu0 %v1192
    %v2382 = vpop.f32.mrf.mxu0
    %v2383 = vadd.f32 %v961, %v2382
    %2384 = vmatmul.f32.gmra.mxu0 %v1195
    %v2385 = vpop.f32.mrf.mxu0
    %v2386 = vadd.f32 %v961, %v2385
    %2387 = vmatmul.f32.gmra.mxu0 %v1198
    %v2388 = vpop.f32.mrf.mxu0
    %v2389 = vadd.f32 %v961, %v2388
    %2390 = vmatmul.f32.gmra.mxu0 %v1201
    %v2391 = vpop.f32.mrf.mxu0
    %v2392 = vadd.f32 %v961, %v2391
    %2393 = vmatmul.f32.gmra.mxu0 %v1204
    %v2394 = vpop.f32.mrf.mxu0
    %v2395 = vadd.f32 %v961, %v2394
    %2396 = vmatmul.f32.gmra.mxu0 %v1207
    %v2397 = vpop.f32.mrf.mxu0
    %v2398 = vadd.f32 %v961, %v2397
    %2399 = vmatmul.f32.gmra.mxu0 %v1210
    %v2400 = vpop.f32.mrf.mxu0
    %v2401 = vadd.f32 %v961, %v2400
    %2402 = vmatmul.f32.gmra.mxu0 %v1213
    %v2403 = vpop.f32.mrf.mxu0
    %v2404 = vadd.f32 %v961, %v2403
    %2405 = vmatmul.f32.gmra.mxu0 %v1216
    %v2406 = vpop.f32.mrf.mxu0
    %v2407 = vadd.f32 %v961, %v2406
    %2408 = vmatmul.f32.gmra.mxu0 %v1219
    %v2409 = vpop.f32.mrf.mxu0
    %v2410 = vadd.f32 %v961, %v2409
    %2411 = vmatmul.f32.gmra.mxu0 %v1222
    %v2412 = vpop.f32.mrf.mxu0
    %v2413 = vadd.f32 %v961, %v2412
    %2414 = vmatmul.f32.gmra.mxu0 %v1225
    %v2415 = vpop.f32.mrf.mxu0
    %v2416 = vadd.f32 %v961, %v2415
    %2417 = vmatmul.f32.gmra.mxu0 %v1228
    %v2418 = vpop.f32.mrf.mxu0
    %v2419 = vadd.f32 %v961, %v2418
    %2420 = vmatmul.f32.gmra.mxu0 %v1231
    %v2421 = vpop.f32.mrf.mxu0
    %v2422 = vadd.f32 %v961, %v2421
    %2423 = vmatmul.f32.gmra.mxu0 %v1234
    %v2424 = vpop.f32.mrf.mxu0
    %v2425 = vadd.f32 %v961, %v2424
    %2426 = vmatmul.f32.gmra.mxu0 %v1237
    %v2427 = vpop.f32.mrf.mxu0
    %v2428 = vadd.f32 %v961, %v2427
    %2429 = vmatmul.f32.gmra.mxu0 %v1240
    %v2430 = vpop.f32.mrf.mxu0
    %v2431 = vadd.f32 %v961, %v2430
    %2432 = vmatmul.f32.gmra.mxu0 %v1243
    %v2433 = vpop.f32.mrf.mxu0
    %v2434 = vadd.f32 %v961, %v2433
    %2435 = vmatmul.f32.gmra.mxu0 %v1246
    %v2436 = vpop.f32.mrf.mxu0
    %v2437 = vadd.f32 %v961, %v2436
    %2438 = vmatmul.f32.gmra.mxu0 %v1249
    %v2439 = vpop.f32.mrf.mxu0
    %v2440 = vadd.f32 %v961, %v2439
    %2441 = vmatmul.f32.gmra.mxu0 %v1252
    %v2442 = vpop.f32.mrf.mxu0
    %v2443 = vadd.f32 %v961, %v2442
    %2444 = vmatmul.f32.gmra.mxu0 %v1255
    %v2445 = vpop.f32.mrf.mxu0
    %v2446 = vadd.f32 %v961, %v2445
    %2447 = vmatmul.f32.gmra.mxu0 %v1258
    %v2448 = vpop.f32.mrf.mxu0
    %v2449 = vadd.f32 %v961, %v2448
    %2450 = vmatmul.f32.gmra.mxu0 %v1261
    %v2451 = vpop.f32.mrf.mxu0
    %v2452 = vadd.f32 %v961, %v2451
    %2453 = vmatmul.f32.gmra.mxu0 %v1264
    %v2454 = vpop.f32.mrf.mxu0
    %v2455 = vadd.f32 %v961, %v2454
    %2456 = vmatmul.f32.gmra.mxu0 %v1267
    %v2457 = vpop.f32.mrf.mxu0
    %v2458 = vadd.f32 %v961, %v2457
    %2459 = vmatmul.f32.gmra.mxu0 %v1270
    %v2460 = vpop.f32.mrf.mxu0
    %v2461 = vadd.f32 %v961, %v2460
    %2462 = vmatmul.f32.gmra.mxu0 %v1273
    %v2463 = vpop.f32.mrf.mxu0
    %v2464 = vadd.f32 %v961, %v2463
    %2465 = vmatmul.f32.gmra.mxu0 %v1276
    %v2466 = vpop.f32.mrf.mxu0
    %v2467 = vadd.f32 %v961, %v2466
    %2468 = vmatmul.f32.gmra.mxu0 %v1279
    %v2469 = vpop.f32.mrf.mxu0
    %v2470 = vadd.f32 %v961, %v2469
    %2471 = vmatmul.f32.gmra.mxu0 %v1282
    %v2472 = vpop.f32.mrf.mxu0
    %v2473 = vadd.f32 %v961, %v2472
    %2474 = vmatmul.f32.gmra.mxu0 %v1285
    %v2475 = vpop.f32.mrf.mxu0
    %v2476 = vadd.f32 %v961, %v2475
    %2477 = vmatmul.f32.gmra.mxu0 %v1288
    %v2478 = vpop.f32.mrf.mxu0
    %v2479 = vadd.f32 %v961, %v2478
    %2480 = vmatmul.f32.gmra.mxu0 %v1291
    %v2481 = vpop.f32.mrf.mxu0
    %v2482 = vadd.f32 %v961, %v2481
    %2483 = vmatmul.f32.gmra.mxu0 %v1294
    %v2484 = vpop.f32.mrf.mxu0
    %v2485 = vadd.f32 %v961, %v2484
    %2486 = vmatmul.f32.gmra.mxu0 %v1297
    %v2487 = vpop.f32.mrf.mxu0
    %v2488 = vadd.f32 %v961, %v2487
    %2489 = vmatmul.f32.gmra.mxu0 %v1300
    %v2490 = vpop.f32.mrf.mxu0
    %v2491 = vadd.f32 %v961, %v2490
    %2492 = vmatmul.f32.gmra.mxu0 %v1303
    %v2493 = vpop.f32.mrf.mxu0
    %v2494 = vadd.f32 %v961, %v2493
    %2495 = vmatmul.f32.gmra.mxu0 %v1306
    %v2496 = vpop.f32.mrf.mxu0
    %v2497 = vadd.f32 %v961, %v2496
    %2498 = vmatmul.f32.gmra.mxu0 %v1309
    %v2499 = vpop.f32.mrf.mxu0
    %v2500 = vadd.f32 %v961, %v2499
    %2501 = vmatmul.f32.gmra.mxu0 %v1312
    %v2502 = vpop.f32.mrf.mxu0
    %v2503 = vadd.f32 %v961, %v2502
    %2504 = vmatmul.f32.gmra.mxu0 %v1315
    %v2505 = vpop.f32.mrf.mxu0
    %v2506 = vadd.f32 %v961, %v2505
    %2507 = vmatmul.f32.gmra.mxu0 %v1318
    %v2508 = vpop.f32.mrf.mxu0
    %v2509 = vadd.f32 %v961, %v2508
    %2510 = vmatmul.f32.gmra.mxu0 %v1321
    %v2511 = vpop.f32.mrf.mxu0
    %v2512 = vadd.f32 %v961, %v2511
    %2513 = vmatmul.f32.gmra.mxu0 %v1324
    %v2514 = vpop.f32.mrf.mxu0
    %v2515 = vadd.f32 %v961, %v2514
    %2516 = vmatmul.f32.gmra.mxu0 %v1327
    %v2517 = vpop.f32.mrf.mxu0
    %v2518 = vadd.f32 %v961, %v2517
    %2519 = vmatmul.f32.gmra.mxu0 %v1330
    %v2520 = vpop.f32.mrf.mxu0
    %v2521 = vadd.f32 %v961, %v2520
    %2522 = vmatmul.f32.gmra.mxu0 %v1333
    %v2523 = vpop.f32.mrf.mxu0
    %v2524 = vadd.f32 %v961, %v2523
    %2525 = vmatmul.f32.gmra.mxu0 %v1336
    %v2526 = vpop.f32.mrf.mxu0
    %v2527 = vadd.f32 %v961, %v2526
    %2528 = vmatmul.f32.gmra.mxu0 %v1339
    %v2529 = vpop.f32.mrf.mxu0
    %v2530 = vadd.f32 %v961, %v2529
    %2531 = vmatmul.f32.gmra.mxu0 %v1342
    %v2532 = vpop.f32.mrf.mxu0
    %v2533 = vadd.f32 %v961, %v2532
    %2534 = vmatmul.f32.gmra.mxu0 %v1345
    %v2535 = vpop.f32.mrf.mxu0
    %v2536 = vadd.f32 %v961, %v2535
    %2537 = vmatmul.f32.gmra.mxu0 %v1348
    %v2538 = vpop.f32.mrf.mxu0
    %v2539 = vadd.f32 %v961, %v2538
    %2540 = vmatmul.f32.gmra.mxu0 %v1351
    %v2541 = vpop.f32.mrf.mxu0
    %v2542 = vadd.f32 %v961, %v2541
    %2543 = vmatmul.f32.gmra.mxu0 %v1354
    %v2544 = vpop.f32.mrf.mxu0
    %v2545 = vadd.f32 %v961, %v2544
    %2546 = vmatmul.f32.gmra.mxu0 %v1357
    %v2547 = vpop.f32.mrf.mxu0
    %v2548 = vadd.f32 %v961, %v2547
    %2549 = vmatmul.f32.gmra.mxu0 %v1360
    %v2550 = vpop.f32.mrf.mxu0
    %v2551 = vadd.f32 %v961, %v2550
    %2552 = vmatmul.f32.gmra.mxu0 %v1363
    %v2553 = vpop.f32.mrf.mxu0
    %v2554 = vadd.f32 %v961, %v2553
    %2555 = vmatmul.f32.gmra.mxu0 %v1366
    %v2556 = vpop.f32.mrf.mxu0
    %v2557 = vadd.f32 %v961, %v2556
    %2558 = vmatmul.f32.gmra.mxu0 %v1369
    %v2559 = vpop.f32.mrf.mxu0
    %v2560 = vadd.f32 %v961, %v2559
    %2561 = vmatmul.f32.gmra.mxu0 %v1372
    %v2562 = vpop.f32.mrf.mxu0
    %v2563 = vadd.f32 %v961, %v2562
    %2564 = vmatmul.f32.gmra.mxu0 %v1375
    %v2565 = vpop.f32.mrf.mxu0
    %v2566 = vadd.f32 %v961, %v2565
    %2567 = vmatmul.f32.gmra.mxu0 %v1378
    %v2568 = vpop.f32.mrf.mxu0
    %v2569 = vadd.f32 %v961, %v2568
    %2570 = vmatmul.f32.gmra.mxu0 %v1381
    %v2571 = vpop.f32.mrf.mxu0
    %v2572 = vadd.f32 %v961, %v2571
    %2573 = vmatmul.f32.gmra.mxu0 %v1384
    %v2574 = vpop.f32.mrf.mxu0
    %v2575 = vadd.f32 %v961, %v2574
    %2576 = vmatmul.f32.gmra.mxu0 %v1387
    %v2577 = vpop.f32.mrf.mxu0
    %v2578 = vadd.f32 %v961, %v2577
    %2579 = vmatmul.f32.gmra.mxu0 %v1390
    %v2580 = vpop.f32.mrf.mxu0
    %v2581 = vadd.f32 %v961, %v2580
    %2582 = vmatmul.f32.gmra.mxu0 %v1393
    %v2583 = vpop.f32.mrf.mxu0
    %v2584 = vadd.f32 %v961, %v2583
    %2585 = vmatmul.f32.gmra.mxu0 %v1396
    %v2586 = vpop.f32.mrf.mxu0
    %v2587 = vadd.f32 %v961, %v2586
    %2588 = vmatmul.f32.gmra.mxu0 %v1399
    %v2589 = vpop.f32.mrf.mxu0
    %v2590 = vadd.f32 %v961, %v2589
    %2591 = vmatmul.f32.gmra.mxu0 %v1402
    %v2592 = vpop.f32.mrf.mxu0
    %v2593 = vadd.f32 %v961, %v2592
    %2594 = vmatmul.f32.gmra.mxu0 %v1405
    %v2595 = vpop.f32.mrf.mxu0
    %v2596 = vadd.f32 %v961, %v2595
    %2597 = vmatmul.f32.gmra.mxu0 %v1408
    %v2598 = vpop.f32.mrf.mxu0
    %v2599 = vadd.f32 %v961, %v2598
    %2600 = vmatmul.f32.gmra.mxu0 %v1411
    %v2601 = vpop.f32.mrf.mxu0
    %v2602 = vadd.f32 %v961, %v2601
    %2603 = vmatmul.f32.gmra.mxu0 %v1414
    %v2604 = vpop.f32.mrf.mxu0
    %v2605 = vadd.f32 %v961, %v2604
    %2606 = vmatmul.f32.gmra.mxu0 %v1417
    %v2607 = vpop.f32.mrf.mxu0
    %v2608 = vadd.f32 %v961, %v2607
    %2609 = vmatmul.f32.gmra.mxu0 %v1420
    %v2610 = vpop.f32.mrf.mxu0
    %v2611 = vadd.f32 %v961, %v2610
    %2612 = vmatmul.f32.gmra.mxu0 %v1423
    %v2613 = vpop.f32.mrf.mxu0
    %v2614 = vadd.f32 %v961, %v2613
    %2615 = vmatmul.f32.gmra.mxu0 %v1426
    %v2616 = vpop.f32.mrf.mxu0
    %v2617 = vadd.f32 %v961, %v2616
    %2618 = vmatmul.f32.gmra.mxu0 %v1429
    %v2619 = vpop.f32.mrf.mxu0
    %v2620 = vadd.f32 %v961, %v2619
    %2621 = vmatmul.f32.gmra.mxu0 %v1432
    %v2622 = vpop.f32.mrf.mxu0
    %v2623 = vadd.f32 %v961, %v2622
    %2624 = vmatmul.f32.gmra.mxu0 %v1435
    %v2625 = vpop.f32.mrf.mxu0
    %v2626 = vadd.f32 %v961, %v2625
    %2627 = vmatmul.f32.gmra.mxu0 %v1438
    %v2628 = vpop.f32.mrf.mxu0
    %v2629 = vadd.f32 %v961, %v2628
    %2630 = vmatmul.f32.gmra.mxu0 %v1441
    %v2631 = vpop.f32.mrf.mxu0
    %v2632 = vadd.f32 %v961, %v2631
    %2633 = vmatmul.f32.gmra.mxu0 %v1444
    %v2634 = vpop.f32.mrf.mxu0
    %v2635 = vadd.f32 %v961, %v2634
    %2636 = vmatmul.f32.gmra.mxu0 %v1447
    %v2637 = vpop.f32.mrf.mxu0
    %v2638 = vadd.f32 %v961, %v2637
    %2639 = vmatmul.f32.gmra.mxu0 %v1450
    %v2640 = vpop.f32.mrf.mxu0
    %v2641 = vadd.f32 %v961, %v2640
    %2642 = vmatmul.f32.gmra.mxu0 %v1453
    %v2643 = vpop.f32.mrf.mxu0
    %v2644 = vadd.f32 %v961, %v2643
    %2645 = vmatmul.f32.gmra.mxu0 %v1456
    %v2646 = vpop.f32.mrf.mxu0
    %v2647 = vadd.f32 %v961, %v2646
    %2648 = vmatmul.f32.gmra.mxu0 %v1459
    %v2649 = vpop.f32.mrf.mxu0
    %v2650 = vadd.f32 %v961, %v2649
    %2651 = vmatmul.f32.gmra.mxu0 %v1462
    %v2652 = vpop.f32.mrf.mxu0
    %v2653 = vadd.f32 %v961, %v2652
    %2654 = vmatmul.f32.gmra.mxu0 %v1465
    %v2655 = vpop.f32.mrf.mxu0
    %v2656 = vadd.f32 %v961, %v2655
    %2657 = vmatmul.f32.gmra.mxu0 %v1468
    %v2658 = vpop.f32.mrf.mxu0
    %v2659 = vadd.f32 %v961, %v2658
    %2660 = vmatmul.f32.gmra.mxu0 %v1471
    %v2661 = vpop.f32.mrf.mxu0
    %v2662 = vadd.f32 %v961, %v2661
    %2663 = vmatmul.f32.gmra.mxu0 %v1474
    %v2664 = vpop.f32.mrf.mxu0
    %v2665 = vadd.f32 %v961, %v2664
    %2666 = vmatmul.f32.gmra.mxu0 %v1477
    %v2667 = vpop.f32.mrf.mxu0
    %v2668 = vadd.f32 %v961, %v2667
    %2669 = vmatmul.f32.gmra.mxu0 %v1480
    %v2670 = vpop.f32.mrf.mxu0
    %v2671 = vadd.f32 %v961, %v2670
    %2672 = vmatmul.f32.gmra.mxu0 %v1483
    %v2673 = vpop.f32.mrf.mxu0
    %v2674 = vadd.f32 %v961, %v2673
    %2675 = vmatmul.f32.gmra.mxu0 %v1486
    %v2676 = vpop.f32.mrf.mxu0
    %v2677 = vadd.f32 %v961, %v2676
    %2678 = vmatmul.f32.gmra.mxu0 %v1489
    %v2679 = vpop.f32.mrf.mxu0
    %v2680 = vadd.f32 %v961, %v2679
    %2681 = vmatmul.f32.gmra.mxu0 %v1492
    %v2682 = vpop.f32.mrf.mxu0
    %v2683 = vadd.f32 %v961, %v2682
    %2684 = vmatmul.f32.gmra.mxu0 %v1495
    %v2685 = vpop.f32.mrf.mxu0
    %v2686 = vadd.f32 %v961, %v2685
    %2687 = vmatmul.f32.gmra.mxu0 %v1498
    %v2688 = vpop.f32.mrf.mxu0
    %v2689 = vadd.f32 %v961, %v2688
    %2690 = vmatmul.f32.gmra.mxu0 %v1501
    %v2691 = vpop.f32.mrf.mxu0
    %v2692 = vadd.f32 %v961, %v2691
    %2693 = vmatmul.f32.gmra.mxu0 %v1504
    %v2694 = vpop.f32.mrf.mxu0
    %v2695 = vadd.f32 %v961, %v2694
    %2696 = vmatmul.f32.gmra.mxu0 %v1507
    %v2697 = vpop.f32.mrf.mxu0
    %v2698 = vadd.f32 %v961, %v2697
    %2699 = vmatmul.f32.gmra.mxu0 %v1510
    %v2700 = vpop.f32.mrf.mxu0
    %v2701 = vadd.f32 %v961, %v2700
    %2702 = vmatmul.f32.gmra.mxu0 %v1513
    %v2703 = vpop.f32.mrf.mxu0
    %v2704 = vadd.f32 %v961, %v2703
    %2705 = vmatmul.f32.gmra.mxu0 %v1516
    %v2706 = vpop.f32.mrf.mxu0
    %v2707 = vadd.f32 %v961, %v2706
    %2708 = vmatmul.f32.gmra.mxu0 %v1519
    %v2709 = vpop.f32.mrf.mxu0
    %v2710 = vadd.f32 %v961, %v2709
    %2711 = vmatmul.f32.gmra.mxu0 %v1522
    %v2712 = vpop.f32.mrf.mxu0
    %v2713 = vadd.f32 %v961, %v2712
    %2714 = vmatmul.f32.gmra.mxu0 %v1525
    %v2715 = vpop.f32.mrf.mxu0
    %v2716 = vadd.f32 %v961, %v2715
    %2717 = vmatmul.f32.gmra.mxu0 %v1528
    %v2718 = vpop.f32.mrf.mxu0
    %v2719 = vadd.f32 %v961, %v2718
    %2720 = vmatmul.f32.gmra.mxu0 %v1531
    %v2721 = vpop.f32.mrf.mxu0
    %v2722 = vadd.f32 %v961, %v2721
    %2723 = vmatmul.f32.gmra.mxu0 %v1534
    %v2724 = vpop.f32.mrf.mxu0
    %v2725 = vadd.f32 %v961, %v2724
    %2726 = vmatmul.f32.gmra.mxu0 %v1537
    %v2727 = vpop.f32.mrf.mxu0
    %v2728 = vadd.f32 %v961, %v2727
    %2729 = vmatmul.f32.gmra.mxu0 %v1540
    %v2730 = vpop.f32.mrf.mxu0
    %v2731 = vadd.f32 %v961, %v2730
    %2732 = vmatmul.f32.gmra.mxu0 %v1543
    %v2733 = vpop.f32.mrf.mxu0
    %v2734 = vadd.f32 %v961, %v2733
    %2735 = vdwg.mxu0
    %2736 = vst [vmem:[#allocation17] sm:$0xff] %v1568
    %2737 = vst [vmem:[#allocation17 + $0x8] sm:$0xff] %v2161
    %2738 = vst [vmem:[#allocation17 + $0x10] sm:$0xff] %v1571
    %2739 = vst [vmem:[#allocation17 + $0x18] sm:$0xff] %v2164
    %2740 = vst [vmem:[#allocation17 + $0x20] sm:$0xff] %v1574
    %2741 = vst [vmem:[#allocation17 + $0x28] sm:$0xff] %v2167
    %2742 = vst [vmem:[#allocation17 + $0x30] sm:$0xff] %v1577
    %2743 = vst [vmem:[#allocation17 + $0x38] sm:$0xff] %v2170
    %2744 = vst [vmem:[#allocation17 + $0x40] sm:$0xff] %v1580
    %2745 = vst [vmem:[#allocation17 + $0x48] sm:$0xff] %v2173
    %2746 = vst [vmem:[#allocation17 + $0x50] sm:$0xff] %v1583
    %2747 = vst [vmem:[#allocation17 + $0x58] sm:$0xff] %v2176
    %2748 = vst [vmem:[#allocation17 + $0x60] sm:$0xff] %v1586
    %2749 = vst [vmem:[#allocation17 + $0x68] sm:$0xff] %v2179
    %2750 = vst [vmem:[#allocation17 + $0x70] sm:$0xff] %v1589
    %2751 = vst [vmem:[#allocation17 + $0x78] sm:$0xff] %v2182
    %2752 = vst [vmem:[#allocation17 + $0x80] sm:$0xff] %v1592
    %2753 = vst [vmem:[#allocation17 + $0x88] sm:$0xff] %v2185
    %2754 = vst [vmem:[#allocation17 + $0x90] sm:$0xff] %v1595
    %2755 = vst [vmem:[#allocation17 + $0x98] sm:$0xff] %v2188
    %2756 = vst [vmem:[#allocation17 + $0xa0] sm:$0xff] %v1598
    %2757 = vst [vmem:[#allocation17 + $0xa8] sm:$0xff] %v2191
    %2758 = vst [vmem:[#allocation17 + $0xb0] sm:$0xff] %v1601
    %2759 = vst [vmem:[#allocation17 + $0xb8] sm:$0xff] %v2194
    %2760 = vst [vmem:[#allocation17 + $0xc0] sm:$0xff] %v1604
    %2761 = vst [vmem:[#allocation17 + $0xc8] sm:$0xff] %v2197
    %2762 = vst [vmem:[#allocation17 + $0xd0] sm:$0xff] %v1607
    %2763 = vst [vmem:[#allocation17 + $0xd8] sm:$0xff] %v2200
    %2764 = vst [vmem:[#allocation17 + $0xe0] sm:$0xff] %v1610
    %2765 = vst [vmem:[#allocation17 + $0xe8] sm:$0xff] %v2203
    %2766 = vst [vmem:[#allocation17 + $0xf0] sm:$0xff] %v1613
    %2767 = vst [vmem:[#allocation17 + $0xf8] sm:$0xff] %v2206
    %2768 = vst [vmem:[#allocation17 + $0x100] sm:$0xff] %v1616
    %2769 = vst [vmem:[#allocation17 + $0x108] sm:$0xff] %v2209
    %2770 = vst [vmem:[#allocation17 + $0x110] sm:$0xff] %v1619
    %2771 = vst [vmem:[#allocation17 + $0x118] sm:$0xff] %v2212
    %2772 = vst [vmem:[#allocation17 + $0x120] sm:$0xff] %v1622
    %2773 = vst [vmem:[#allocation17 + $0x128] sm:$0xff] %v2215
    %2774 = vst [vmem:[#allocation17 + $0x130] sm:$0xff] %v1625
    %2775 = vst [vmem:[#allocation17 + $0x138] sm:$0xff] %v2218
    %2776 = vst [vmem:[#allocation17 + $0x140] sm:$0xff] %v1628
    %2777 = vst [vmem:[#allocation17 + $0x148] sm:$0xff] %v2221
    %2778 = vst [vmem:[#allocation17 + $0x150] sm:$0xff] %v1631
    %2779 = vst [vmem:[#allocation17 + $0x158] sm:$0xff] %v2224
    %2780 = vst [vmem:[#allocation17 + $0x160] sm:$0xff] %v1634
    %2781 = vst [vmem:[#allocation17 + $0x168] sm:$0xff] %v2227
    %2782 = vst [vmem:[#allocation17 + $0x170] sm:$0xff] %v1637
    %2783 = vst [vmem:[#allocation17 + $0x178] sm:$0xff] %v2230
    %2784 = vst [vmem:[#allocation17 + $0x180] sm:$0xff] %v1640
    %2785 = vst [vmem:[#allocation17 + $0x188] sm:$0xff] %v2233
    %2786 = vst [vmem:[#allocation17 + $0x190] sm:$0xff] %v1643
    %2787 = vst [vmem:[#allocation17 + $0x198] sm:$0xff] %v2236
    %2788 = vst [vmem:[#allocation17 + $0x1a0] sm:$0xff] %v1646
    %2789 = vst [vmem:[#allocation17 + $0x1a8] sm:$0xff] %v2239
    %2790 = vst [vmem:[#allocation17 + $0x1b0] sm:$0xff] %v1649
    %2791 = vst [vmem:[#allocation17 + $0x1b8] sm:$0xff] %v2242
    %2792 = vst [vmem:[#allocation17 + $0x1c0] sm:$0xff] %v1652
    %2793 = vst [vmem:[#allocation17 + $0x1c8] sm:$0xff] %v2245
    %2794 = vst [vmem:[#allocation17 + $0x1d0] sm:$0xff] %v1655
    %2795 = vst [vmem:[#allocation17 + $0x1d8] sm:$0xff] %v2248
    %2796 = vst [vmem:[#allocation17 + $0x1e0] sm:$0xff] %v1658
    %2797 = vst [vmem:[#allocation17 + $0x1e8] sm:$0xff] %v2251
    %2798 = vst [vmem:[#allocation17 + $0x1f0] sm:$0xff] %v1661
    %2799 = vst [vmem:[#allocation17 + $0x1f8] sm:$0xff] %v2254
    %2800 = vst [vmem:[#allocation17 + $0x200] sm:$0xff] %v1664
    %2801 = vst [vmem:[#allocation17 + $0x208] sm:$0xff] %v2257
    %2802 = vst [vmem:[#allocation17 + $0x210] sm:$0xff] %v1667
    %2803 = vst [vmem:[#allocation17 + $0x218] sm:$0xff] %v2260
    %2804 = vst [vmem:[#allocation17 + $0x220] sm:$0xff] %v1670
    %2805 = vst [vmem:[#allocation17 + $0x228] sm:$0xff] %v2263
    %2806 = vst [vmem:[#allocation17 + $0x230] sm:$0xff] %v1673
    %2807 = vst [vmem:[#allocation17 + $0x238] sm:$0xff] %v2266
    %2808 = vst [vmem:[#allocation17 + $0x240] sm:$0xff] %v1676
    %2809 = vst [vmem:[#allocation17 + $0x248] sm:$0xff] %v2269
    %2810 = vst [vmem:[#allocation17 + $0x250] sm:$0xff] %v1679
    %2811 = vst [vmem:[#allocation17 + $0x258] sm:$0xff] %v2272
    %2812 = vst [vmem:[#allocation17 + $0x260] sm:$0xff] %v1682
    %2813 = vst [vmem:[#allocation17 + $0x268] sm:$0xff] %v2275
    %2814 = vst [vmem:[#allocation17 + $0x270] sm:$0xff] %v1685
    %2815 = vst [vmem:[#allocation17 + $0x278] sm:$0xff] %v2278
    %2816 = vst [vmem:[#allocation17 + $0x280] sm:$0xff] %v1688
    %2817 = vst [vmem:[#allocation17 + $0x288] sm:$0xff] %v2281
    %2818 = vst [vmem:[#allocation17 + $0x290] sm:$0xff] %v1691
    %2819 = vst [vmem:[#allocation17 + $0x298] sm:$0xff] %v2284
    %2820 = vst [vmem:[#allocation17 + $0x2a0] sm:$0xff] %v1694
    %2821 = vst [vmem:[#allocation17 + $0x2a8] sm:$0xff] %v2287
    %2822 = vst [vmem:[#allocation17 + $0x2b0] sm:$0xff] %v1697
    %2823 = vst [vmem:[#allocation17 + $0x2b8] sm:$0xff] %v2290
    %2824 = vst [vmem:[#allocation17 + $0x2c0] sm:$0xff] %v1700
    %2825 = vst [vmem:[#allocation17 + $0x2c8] sm:$0xff] %v2293
    %2826 = vst [vmem:[#allocation17 + $0x2d0] sm:$0xff] %v1703
    %2827 = vst [vmem:[#allocation17 + $0x2d8] sm:$0xff] %v2296
    %2828 = vst [vmem:[#allocation17 + $0x2e0] sm:$0xff] %v1706
    %2829 = vst [vmem:[#allocation17 + $0x2e8] sm:$0xff] %v2299
    %2830 = vst [vmem:[#allocation17 + $0x2f0] sm:$0xff] %v1709
    %2831 = vst [vmem:[#allocation17 + $0x2f8] sm:$0xff] %v2302
    %2832 = vst [vmem:[#allocation17 + $0x300] sm:$0xff] %v1712
    %2833 = vst [vmem:[#allocation17 + $0x308] sm:$0xff] %v2305
    %2834 = vst [vmem:[#allocation17 + $0x310] sm:$0xff] %v1715
    %2835 = vst [vmem:[#allocation17 + $0x318] sm:$0xff] %v2308
    %2836 = vst [vmem:[#allocation17 + $0x320] sm:$0xff] %v1718
    %2837 = vst [vmem:[#allocation17 + $0x328] sm:$0xff] %v2311
    %2838 = vst [vmem:[#allocation17 + $0x330] sm:$0xff] %v1721
    %2839 = vst [vmem:[#allocation17 + $0x338] sm:$0xff] %v2314
    %2840 = vst [vmem:[#allocation17 + $0x340] sm:$0xff] %v1724
    %2841 = vst [vmem:[#allocation17 + $0x348] sm:$0xff] %v2317
    %2842 = vst [vmem:[#allocation17 + $0x350] sm:$0xff] %v1727
    %2843 = vst [vmem:[#allocation17 + $0x358] sm:$0xff] %v2320
    %2844 = vst [vmem:[#allocation17 + $0x360] sm:$0xff] %v1730
    %2845 = vst [vmem:[#allocation17 + $0x368] sm:$0xff] %v2323
    %2846 = vst [vmem:[#allocation17 + $0x370] sm:$0xff] %v1733
    %2847 = vst [vmem:[#allocation17 + $0x378] sm:$0xff] %v2326
    %2848 = vst [vmem:[#allocation17 + $0x380] sm:$0xff] %v1736
    %2849 = vst [vmem:[#allocation17 + $0x388] sm:$0xff] %v2329
    %2850 = vst [vmem:[#allocation17 + $0x390] sm:$0xff] %v1739
    %2851 = vst [vmem:[#allocation17 + $0x398] sm:$0xff] %v2332
    %2852 = vst [vmem:[#allocation17 + $0x3a0] sm:$0xff] %v1742
    %2853 = vst [vmem:[#allocation17 + $0x3a8] sm:$0xff] %v2335
    %2854 = vst [vmem:[#allocation17 + $0x3b0] sm:$0xff] %v1745
    %2855 = vst [vmem:[#allocation17 + $0x3b8] sm:$0xff] %v2338
    %2856 = vst [vmem:[#allocation17 + $0x3c0] sm:$0xff] %v1748
    %2857 = vst [vmem:[#allocation17 + $0x3c8] sm:$0xff] %v2341
    %2858 = vst [vmem:[#allocation17 + $0x3d0] sm:$0xff] %v1751
    %2859 = vst [vmem:[#allocation17 + $0x3d8] sm:$0xff] %v2344
    %2860 = vst [vmem:[#allocation17 + $0x3e0] sm:$0xff] %v1754
    %2861 = vst [vmem:[#allocation17 + $0x3e8] sm:$0xff] %v2347
    %2862 = vst [vmem:[#allocation17 + $0x3f0] sm:$0xff] %v1757
    %2863 = vst [vmem:[#allocation17 + $0x3f8] sm:$0xff] %v2350
    %2864 = vst [vmem:[#allocation17 + $0x400] sm:$0xff] %v1760
    %2865 = vst [vmem:[#allocation17 + $0x408] sm:$0xff] %v2353
    %2866 = vst [vmem:[#allocation17 + $0x410] sm:$0xff] %v1763
    %2867 = vst [vmem:[#allocation17 + $0x418] sm:$0xff] %v2356
    %2868 = vst [vmem:[#allocation17 + $0x420] sm:$0xff] %v1766
    %2869 = vst [vmem:[#allocation17 + $0x428] sm:$0xff] %v2359
    %2870 = vst [vmem:[#allocation17 + $0x430] sm:$0xff] %v1769
    %2871 = vst [vmem:[#allocation17 + $0x438] sm:$0xff] %v2362
    %2872 = vst [vmem:[#allocation17 + $0x440] sm:$0xff] %v1772
    %2873 = vst [vmem:[#allocation17 + $0x448] sm:$0xff] %v2365
    %2874 = vst [vmem:[#allocation17 + $0x450] sm:$0xff] %v1775
    %2875 = vst [vmem:[#allocation17 + $0x458] sm:$0xff] %v2368
    %2876 = vst [vmem:[#allocation17 + $0x460] sm:$0xff] %v1778
    %2877 = vst [vmem:[#allocation17 + $0x468] sm:$0xff] %v2371
    %2878 = vst [vmem:[#allocation17 + $0x470] sm:$0xff] %v1781
    %2879 = vst [vmem:[#allocation17 + $0x478] sm:$0xff] %v2374
    %2880 = vst [vmem:[#allocation17 + $0x480] sm:$0xff] %v1784
    %2881 = vst [vmem:[#allocation17 + $0x488] sm:$0xff] %v2377
    %2882 = vst [vmem:[#allocation17 + $0x490] sm:$0xff] %v1787
    %2883 = vst [vmem:[#allocation17 + $0x498] sm:$0xff] %v2380
    %2884 = vst [vmem:[#allocation17 + $0x4a0] sm:$0xff] %v1790
    %2885 = vst [vmem:[#allocation17 + $0x4a8] sm:$0xff] %v2383
    %2886 = vst [vmem:[#allocation17 + $0x4b0] sm:$0xff] %v1793
    %2887 = vst [vmem:[#allocation17 + $0x4b8] sm:$0xff] %v2386
    %2888 = vst [vmem:[#allocation17 + $0x4c0] sm:$0xff] %v1796
    %2889 = vst [vmem:[#allocation17 + $0x4c8] sm:$0xff] %v2389
    %2890 = vst [vmem:[#allocation17 + $0x4d0] sm:$0xff] %v1799
    %2891 = vst [vmem:[#allocation17 + $0x4d8] sm:$0xff] %v2392
    %2892 = vst [vmem:[#allocation17 + $0x4e0] sm:$0xff] %v1802
    %2893 = vst [vmem:[#allocation17 + $0x4e8] sm:$0xff] %v2395
    %2894 = vst [vmem:[#allocation17 + $0x4f0] sm:$0xff] %v1805
    %2895 = vst [vmem:[#allocation17 + $0x4f8] sm:$0xff] %v2398
    %2896 = vst [vmem:[#allocation17 + $0x500] sm:$0xff] %v1808
    %2897 = vst [vmem:[#allocation17 + $0x508] sm:$0xff] %v2401
    %2898 = vst [vmem:[#allocation17 + $0x510] sm:$0xff] %v1811
    %2899 = vst [vmem:[#allocation17 + $0x518] sm:$0xff] %v2404
    %2900 = vst [vmem:[#allocation17 + $0x520] sm:$0xff] %v1814
    %2901 = vst [vmem:[#allocation17 + $0x528] sm:$0xff] %v2407
    %2902 = vst [vmem:[#allocation17 + $0x530] sm:$0xff] %v1817
    %2903 = vst [vmem:[#allocation17 + $0x538] sm:$0xff] %v2410
    %2904 = vst [vmem:[#allocation17 + $0x540] sm:$0xff] %v1820
    %2905 = vst [vmem:[#allocation17 + $0x548] sm:$0xff] %v2413
    %2906 = vst [vmem:[#allocation17 + $0x550] sm:$0xff] %v1823
    %2907 = vst [vmem:[#allocation17 + $0x558] sm:$0xff] %v2416
    %2908 = vst [vmem:[#allocation17 + $0x560] sm:$0xff] %v1826
    %2909 = vst [vmem:[#allocation17 + $0x568] sm:$0xff] %v2419
    %2910 = vst [vmem:[#allocation17 + $0x570] sm:$0xff] %v1829
    %2911 = vst [vmem:[#allocation17 + $0x578] sm:$0xff] %v2422
    %2912 = vst [vmem:[#allocation17 + $0x580] sm:$0xff] %v1832
    %2913 = vst [vmem:[#allocation17 + $0x588] sm:$0xff] %v2425
    %2914 = vst [vmem:[#allocation17 + $0x590] sm:$0xff] %v1835
    %2915 = vst [vmem:[#allocation17 + $0x598] sm:$0xff] %v2428
    %2916 = vst [vmem:[#allocation17 + $0x5a0] sm:$0xff] %v1838
    %2917 = vst [vmem:[#allocation17 + $0x5a8] sm:$0xff] %v2431
    %2918 = vst [vmem:[#allocation17 + $0x5b0] sm:$0xff] %v1841
    %2919 = vst [vmem:[#allocation17 + $0x5b8] sm:$0xff] %v2434
    %2920 = vst [vmem:[#allocation17 + $0x5c0] sm:$0xff] %v1844
    %2921 = vst [vmem:[#allocation17 + $0x5c8] sm:$0xff] %v2437
    %2922 = vst [vmem:[#allocation17 + $0x5d0] sm:$0xff] %v1847
    %2923 = vst [vmem:[#allocation17 + $0x5d8] sm:$0xff] %v2440
    %2924 = vst [vmem:[#allocation17 + $0x5e0] sm:$0xff] %v1850
    %2925 = vst [vmem:[#allocation17 + $0x5e8] sm:$0xff] %v2443
    %2926 = vst [vmem:[#allocation17 + $0x5f0] sm:$0xff] %v1853
    %2927 = vst [vmem:[#allocation17 + $0x5f8] sm:$0xff] %v2446
    %2928 = vst [vmem:[#allocation17 + $0x600] sm:$0xff] %v1856
    %2929 = vst [vmem:[#allocation17 + $0x608] sm:$0xff] %v2449
    %2930 = vst [vmem:[#allocation17 + $0x610] sm:$0xff] %v1859
    %2931 = vst [vmem:[#allocation17 + $0x618] sm:$0xff] %v2452
    %2932 = vst [vmem:[#allocation17 + $0x620] sm:$0xff] %v1862
    %2933 = vst [vmem:[#allocation17 + $0x628] sm:$0xff] %v2455
    %2934 = vst [vmem:[#allocation17 + $0x630] sm:$0xff] %v1865
    %2935 = vst [vmem:[#allocation17 + $0x638] sm:$0xff] %v2458
    %2936 = vst [vmem:[#allocation17 + $0x640] sm:$0xff] %v1868
    %2937 = vst [vmem:[#allocation17 + $0x648] sm:$0xff] %v2461
    %2938 = vst [vmem:[#allocation17 + $0x650] sm:$0xff] %v1871
    %2939 = vst [vmem:[#allocation17 + $0x658] sm:$0xff] %v2464
    %2940 = vst [vmem:[#allocation17 + $0x660] sm:$0xff] %v1874
    %2941 = vst [vmem:[#allocation17 + $0x668] sm:$0xff] %v2467
    %2942 = vst [vmem:[#allocation17 + $0x670] sm:$0xff] %v1877
    %2943 = vst [vmem:[#allocation17 + $0x678] sm:$0xff] %v2470
    %2944 = vst [vmem:[#allocation17 + $0x680] sm:$0xff] %v1880
    %2945 = vst [vmem:[#allocation17 + $0x688] sm:$0xff] %v2473
    %2946 = vst [vmem:[#allocation17 + $0x690] sm:$0xff] %v1883
    %2947 = vst [vmem:[#allocation17 + $0x698] sm:$0xff] %v2476
    %2948 = vst [vmem:[#allocation17 + $0x6a0] sm:$0xff] %v1886
    %2949 = vst [vmem:[#allocation17 + $0x6a8] sm:$0xff] %v2479
    %2950 = vst [vmem:[#allocation17 + $0x6b0] sm:$0xff] %v1889
    %2951 = vst [vmem:[#allocation17 + $0x6b8] sm:$0xff] %v2482
    %2952 = vst [vmem:[#allocation17 + $0x6c0] sm:$0xff] %v1892
    %2953 = vst [vmem:[#allocation17 + $0x6c8] sm:$0xff] %v2485
    %2954 = vst [vmem:[#allocation17 + $0x6d0] sm:$0xff] %v1895
    %2955 = vst [vmem:[#allocation17 + $0x6d8] sm:$0xff] %v2488
    %2956 = vst [vmem:[#allocation17 + $0x6e0] sm:$0xff] %v1898
    %2957 = vst [vmem:[#allocation17 + $0x6e8] sm:$0xff] %v2491
    %2958 = vst [vmem:[#allocation17 + $0x6f0] sm:$0xff] %v1901
    %2959 = vst [vmem:[#allocation17 + $0x6f8] sm:$0xff] %v2494
    %2960 = vst [vmem:[#allocation17 + $0x700] sm:$0xff] %v1904
    %2961 = vst [vmem:[#allocation17 + $0x708] sm:$0xff] %v2497
    %2962 = vst [vmem:[#allocation17 + $0x710] sm:$0xff] %v1907
    %2963 = vst [vmem:[#allocation17 + $0x718] sm:$0xff] %v2500
    %2964 = vst [vmem:[#allocation17 + $0x720] sm:$0xff] %v1910
    %2965 = vst [vmem:[#allocation17 + $0x728] sm:$0xff] %v2503
    %2966 = vst [vmem:[#allocation17 + $0x730] sm:$0xff] %v1913
    %2967 = vst [vmem:[#allocation17 + $0x738] sm:$0xff] %v2506
    %2968 = vst [vmem:[#allocation17 + $0x740] sm:$0xff] %v1916
    %2969 = vst [vmem:[#allocation17 + $0x748] sm:$0xff] %v2509
    %2970 = vst [vmem:[#allocation17 + $0x750] sm:$0xff] %v1919
    %2971 = vst [vmem:[#allocation17 + $0x758] sm:$0xff] %v2512
    %2972 = vst [vmem:[#allocation17 + $0x760] sm:$0xff] %v1922
    %2973 = vst [vmem:[#allocation17 + $0x768] sm:$0xff] %v2515
    %2974 = vst [vmem:[#allocation17 + $0x770] sm:$0xff] %v1925
    %2975 = vst [vmem:[#allocation17 + $0x778] sm:$0xff] %v2518
    %2976 = vst [vmem:[#allocation17 + $0x780] sm:$0xff] %v1928
    %2977 = vst [vmem:[#allocation17 + $0x788] sm:$0xff] %v2521
    %2978 = vst [vmem:[#allocation17 + $0x790] sm:$0xff] %v1931
    %2979 = vst [vmem:[#allocation17 + $0x798] sm:$0xff] %v2524
    %2980 = vst [vmem:[#allocation17 + $0x7a0] sm:$0xff] %v1934
    %2981 = vst [vmem:[#allocation17 + $0x7a8] sm:$0xff] %v2527
    %2982 = vst [vmem:[#allocation17 + $0x7b0] sm:$0xff] %v1937
    %2983 = vst [vmem:[#allocation17 + $0x7b8] sm:$0xff] %v2530
    %2984 = vst [vmem:[#allocation17 + $0x7c0] sm:$0xff] %v1940
    %2985 = vst [vmem:[#allocation17 + $0x7c8] sm:$0xff] %v2533
    %2986 = vst [vmem:[#allocation17 + $0x7d0] sm:$0xff] %v1943
    %2987 = vst [vmem:[#allocation17 + $0x7d8] sm:$0xff] %v2536
    %2988 = vst [vmem:[#allocation17 + $0x7e0] sm:$0xff] %v1946
    %2989 = vst [vmem:[#allocation17 + $0x7e8] sm:$0xff] %v2539
    %2990 = vst [vmem:[#allocation17 + $0x7f0] sm:$0xff] %v1949
    %2991 = vst [vmem:[#allocation17 + $0x7f8] sm:$0xff] %v2542
    %2992 = vst [vmem:[#allocation17 + $0x800] sm:$0xff] %v1952
    %2993 = vst [vmem:[#allocation17 + $0x808] sm:$0xff] %v2545
    %2994 = vst [vmem:[#allocation17 + $0x810] sm:$0xff] %v1955
    %2995 = vst [vmem:[#allocation17 + $0x818] sm:$0xff] %v2548
    %2996 = vst [vmem:[#allocation17 + $0x820] sm:$0xff] %v1958
    %2997 = vst [vmem:[#allocation17 + $0x828] sm:$0xff] %v2551
    %2998 = vst [vmem:[#allocation17 + $0x830] sm:$0xff] %v1961
    %2999 = vst [vmem:[#allocation17 + $0x838] sm:$0xff] %v2554
    %3000 = vst [vmem:[#allocation17 + $0x840] sm:$0xff] %v1964
    %3001 = vst [vmem:[#allocation17 + $0x848] sm:$0xff] %v2557
    %3002 = vst [vmem:[#allocation17 + $0x850] sm:$0xff] %v1967
    %3003 = vst [vmem:[#allocation17 + $0x858] sm:$0xff] %v2560
    %3004 = vst [vmem:[#allocation17 + $0x860] sm:$0xff] %v1970
    %3005 = vst [vmem:[#allocation17 + $0x868] sm:$0xff] %v2563
    %3006 = vst [vmem:[#allocation17 + $0x870] sm:$0xff] %v1973
    %3007 = vst [vmem:[#allocation17 + $0x878] sm:$0xff] %v2566
    %3008 = vst [vmem:[#allocation17 + $0x880] sm:$0xff] %v1976
    %3009 = vst [vmem:[#allocation17 + $0x888] sm:$0xff] %v2569
    %3010 = vst [vmem:[#allocation17 + $0x890] sm:$0xff] %v1979
    %3011 = vst [vmem:[#allocation17 + $0x898] sm:$0xff] %v2572
    %3012 = vst [vmem:[#allocation17 + $0x8a0] sm:$0xff] %v1982
    %3013 = vst [vmem:[#allocation17 + $0x8a8] sm:$0xff] %v2575
    %3014 = vst [vmem:[#allocation17 + $0x8b0] sm:$0xff] %v1985
    %3015 = vst [vmem:[#allocation17 + $0x8b8] sm:$0xff] %v2578
    %3016 = vst [vmem:[#allocation17 + $0x8c0] sm:$0xff] %v1988
    %3017 = vst [vmem:[#allocation17 + $0x8c8] sm:$0xff] %v2581
    %3018 = vst [vmem:[#allocation17 + $0x8d0] sm:$0xff] %v1991
    %3019 = vst [vmem:[#allocation17 + $0x8d8] sm:$0xff] %v2584
    %3020 = vst [vmem:[#allocation17 + $0x8e0] sm:$0xff] %v1994
    %3021 = vst [vmem:[#allocation17 + $0x8e8] sm:$0xff] %v2587
    %3022 = vst [vmem:[#allocation17 + $0x8f0] sm:$0xff] %v1997
    %3023 = vst [vmem:[#allocation17 + $0x8f8] sm:$0xff] %v2590
    %3024 = vst [vmem:[#allocation17 + $0x900] sm:$0xff] %v2000
    %3025 = vst [vmem:[#allocation17 + $0x908] sm:$0xff] %v2593
    %3026 = vst [vmem:[#allocation17 + $0x910] sm:$0xff] %v2003
    %3027 = vst [vmem:[#allocation17 + $0x918] sm:$0xff] %v2596
    %3028 = vst [vmem:[#allocation17 + $0x920] sm:$0xff] %v2006
    %3029 = vst [vmem:[#allocation17 + $0x928] sm:$0xff] %v2599
    %3030 = vst [vmem:[#allocation17 + $0x930] sm:$0xff] %v2009
    %3031 = vst [vmem:[#allocation17 + $0x938] sm:$0xff] %v2602
    %3032 = vst [vmem:[#allocation17 + $0x940] sm:$0xff] %v2012
    %3033 = vst [vmem:[#allocation17 + $0x948] sm:$0xff] %v2605
    %3034 = vst [vmem:[#allocation17 + $0x950] sm:$0xff] %v2015
    %3035 = vst [vmem:[#allocation17 + $0x958] sm:$0xff] %v2608
    %3036 = vst [vmem:[#allocation17 + $0x960] sm:$0xff] %v2018
    %3037 = vst [vmem:[#allocation17 + $0x968] sm:$0xff] %v2611
    %3038 = vst [vmem:[#allocation17 + $0x970] sm:$0xff] %v2021
    %3039 = vst [vmem:[#allocation17 + $0x978] sm:$0xff] %v2614
    %3040 = vst [vmem:[#allocation17 + $0x980] sm:$0xff] %v2024
    %3041 = vst [vmem:[#allocation17 + $0x988] sm:$0xff] %v2617
    %3042 = vst [vmem:[#allocation17 + $0x990] sm:$0xff] %v2027
    %3043 = vst [vmem:[#allocation17 + $0x998] sm:$0xff] %v2620
    %3044 = vst [vmem:[#allocation17 + $0x9a0] sm:$0xff] %v2030
    %3045 = vst [vmem:[#allocation17 + $0x9a8] sm:$0xff] %v2623
    %3046 = vst [vmem:[#allocation17 + $0x9b0] sm:$0xff] %v2033
    %3047 = vst [vmem:[#allocation17 + $0x9b8] sm:$0xff] %v2626
    %3048 = vst [vmem:[#allocation17 + $0x9c0] sm:$0xff] %v2036
    %3049 = vst [vmem:[#allocation17 + $0x9c8] sm:$0xff] %v2629
    %3050 = vst [vmem:[#allocation17 + $0x9d0] sm:$0xff] %v2039
    %3051 = vst [vmem:[#allocation17 + $0x9d8] sm:$0xff] %v2632
    %3052 = vst [vmem:[#allocation17 + $0x9e0] sm:$0xff] %v2042
    %3053 = vst [vmem:[#allocation17 + $0x9e8] sm:$0xff] %v2635
    %3054 = vst [vmem:[#allocation17 + $0x9f0] sm:$0xff] %v2045
    %3055 = vst [vmem:[#allocation17 + $0x9f8] sm:$0xff] %v2638
    %3056 = vst [vmem:[#allocation17 + $0xa00] sm:$0xff] %v2048
    %3057 = vst [vmem:[#allocation17 + $0xa08] sm:$0xff] %v2641
    %3058 = vst [vmem:[#allocation17 + $0xa10] sm:$0xff] %v2051
    %3059 = vst [vmem:[#allocation17 + $0xa18] sm:$0xff] %v2644
    %3060 = vst [vmem:[#allocation17 + $0xa20] sm:$0xff] %v2054
    %3061 = vst [vmem:[#allocation17 + $0xa28] sm:$0xff] %v2647
    %3062 = vst [vmem:[#allocation17 + $0xa30] sm:$0xff] %v2057
    %3063 = vst [vmem:[#allocation17 + $0xa38] sm:$0xff] %v2650
    %3064 = vst [vmem:[#allocation17 + $0xa40] sm:$0xff] %v2060
    %3065 = vst [vmem:[#allocation17 + $0xa48] sm:$0xff] %v2653
    %3066 = vst [vmem:[#allocation17 + $0xa50] sm:$0xff] %v2063
    %3067 = vst [vmem:[#allocation17 + $0xa58] sm:$0xff] %v2656
    %3068 = vst [vmem:[#allocation17 + $0xa60] sm:$0xff] %v2066
    %3069 = vst [vmem:[#allocation17 + $0xa68] sm:$0xff] %v2659
    %3070 = vst [vmem:[#allocation17 + $0xa70] sm:$0xff] %v2069
    %3071 = vst [vmem:[#allocation17 + $0xa78] sm:$0xff] %v2662
    %3072 = vst [vmem:[#allocation17 + $0xa80] sm:$0xff] %v2072
    %3073 = vst [vmem:[#allocation17 + $0xa88] sm:$0xff] %v2665
    %3074 = vst [vmem:[#allocation17 + $0xa90] sm:$0xff] %v2075
    %3075 = vst [vmem:[#allocation17 + $0xa98] sm:$0xff] %v2668
    %3076 = vst [vmem:[#allocation17 + $0xaa0] sm:$0xff] %v2078
    %3077 = vst [vmem:[#allocation17 + $0xaa8] sm:$0xff] %v2671
    %3078 = vst [vmem:[#allocation17 + $0xab0] sm:$0xff] %v2081
    %3079 = vst [vmem:[#allocation17 + $0xab8] sm:$0xff] %v2674
    %3080 = vst [vmem:[#allocation17 + $0xac0] sm:$0xff] %v2084
    %3081 = vst [vmem:[#allocation17 + $0xac8] sm:$0xff] %v2677
    %3082 = vst [vmem:[#allocation17 + $0xad0] sm:$0xff] %v2087
    %3083 = vst [vmem:[#allocation17 + $0xad8] sm:$0xff] %v2680
    %3084 = vst [vmem:[#allocation17 + $0xae0] sm:$0xff] %v2090
    %3085 = vst [vmem:[#allocation17 + $0xae8] sm:$0xff] %v2683
    %3086 = vst [vmem:[#allocation17 + $0xaf0] sm:$0xff] %v2093
    %3087 = vst [vmem:[#allocation17 + $0xaf8] sm:$0xff] %v2686
    %3088 = vst [vmem:[#allocation17 + $0xb00] sm:$0xff] %v2096
    %3089 = vst [vmem:[#allocation17 + $0xb08] sm:$0xff] %v2689
    %3090 = vst [vmem:[#allocation17 + $0xb10] sm:$0xff] %v2099
    %3091 = vst [vmem:[#allocation17 + $0xb18] sm:$0xff] %v2692
    %3092 = vst [vmem:[#allocation17 + $0xb20] sm:$0xff] %v2102
    %3093 = vst [vmem:[#allocation17 + $0xb28] sm:$0xff] %v2695
    %3094 = vst [vmem:[#allocation17 + $0xb30] sm:$0xff] %v2105
    %3095 = vst [vmem:[#allocation17 + $0xb38] sm:$0xff] %v2698
    %3096 = vst [vmem:[#allocation17 + $0xb40] sm:$0xff] %v2108
    %3097 = vst [vmem:[#allocation17 + $0xb48] sm:$0xff] %v2701
    %3098 = vst [vmem:[#allocation17 + $0xb50] sm:$0xff] %v2111
    %3099 = vst [vmem:[#allocation17 + $0xb58] sm:$0xff] %v2704
    %3100 = vst [vmem:[#allocation17 + $0xb60] sm:$0xff] %v2114
    %3101 = vst [vmem:[#allocation17 + $0xb68] sm:$0xff] %v2707
    %3102 = vst [vmem:[#allocation17 + $0xb70] sm:$0xff] %v2117
    %3103 = vst [vmem:[#allocation17 + $0xb78] sm:$0xff] %v2710
    %3104 = vst [vmem:[#allocation17 + $0xb80] sm:$0xff] %v2120
    %3105 = vst [vmem:[#allocation17 + $0xb88] sm:$0xff] %v2713
    %3106 = vst [vmem:[#allocation17 + $0xb90] sm:$0xff] %v2123
    %3107 = vst [vmem:[#allocation17 + $0xb98] sm:$0xff] %v2716
    %3108 = vst [vmem:[#allocation17 + $0xba0] sm:$0xff] %v2126
    %3109 = vst [vmem:[#allocation17 + $0xba8] sm:$0xff] %v2719
    %3110 = vst [vmem:[#allocation17 + $0xbb0] sm:$0xff] %v2129
    %3111 = vst [vmem:[#allocation17 + $0xbb8] sm:$0xff] %v2722
    %3112 = vst [vmem:[#allocation17 + $0xbc0] sm:$0xff] %v2132
    %3113 = vst [vmem:[#allocation17 + $0xbc8] sm:$0xff] %v2725
    %3114 = vst [vmem:[#allocation17 + $0xbd0] sm:$0xff] %v2135
    %3115 = vst [vmem:[#allocation17 + $0xbd8] sm:$0xff] %v2728
    %3116 = vst [vmem:[#allocation17 + $0xbe0] sm:$0xff] %v2138
    %3117 = vst [vmem:[#allocation17 + $0xbe8] sm:$0xff] %v2731
    %3118 = vst [vmem:[#allocation17 + $0xbf0] sm:$0xff] %v2141
    %3119 = vst [vmem:[#allocation17 + $0xbf8] sm:$0xff] %v2734
    // Predicated region
    $region74: #{tpu_custom_call.1} parent=1 // pred_check
      _
    $region75: #{tpu_custom_call.1} parent=1 // pred_check_branch
      %3121 = sbr.rel (0) target = $region77
    $region76: #{tpu_custom_call.1} parent=1 // pred_region
      %3123 = vsyncadd [#allocation4], 0
      %s3124 = sshll.u32 [#allocation16], 4
      %s3125 = int_to_ptr.vmem [resolvable:$true] %s3124
      %s3126 = sshll.u32 %s10, 4
      %s3127 = int_to_ptr.hbm [resolvable:$true] %s3126
      %3132 = dma.vmem_to_hbm [thread:$0]  %s3125, 2048, %s3127, [#allocation4], 64, 64, 4
    $region77: #{tpu_custom_call.1} parent=1 // pred_fallthru
      _
    // Predicated region
    $region78: #{tpu_custom_call.1} parent=1 // pred_check
      _
    $region79: #{tpu_custom_call.1} parent=1 // pred_check_branch
      %3134 = sbr.rel (0) target = $region81
    $region80: #{tpu_custom_call.1} parent=1 // pred_region
      %3136 = vsyncadd [#allocation18], 0
      %s3137 = sshll.u32 [#allocation17], 4
      %s3138 = int_to_ptr.vmem [resolvable:$true] %s3137
      %s3139 = sshll.u32 %s11, 4
      %s3140 = int_to_ptr.hbm [resolvable:$true] %s3139
      %3145 = dma.vmem_to_hbm [thread:$0]  %s3138, 49152, %s3140, [#allocation18], 256, 256, 16
    $region81: #{tpu_custom_call.1} parent=1 // pred_fallthru
      _
    // Predicated region
    $region82: #{tpu_custom_call.1} parent=1 // pred_check
      _
    $region83: #{tpu_custom_call.1} parent=1 // pred_check_branch
      %3147 = sbr.rel (0) target = $region85
    $region84: #{tpu_custom_call.1} parent=1 // pred_region
      %3149 = dma.done [#allocation4], 2048
    $region85: #{tpu_custom_call.1} parent=1 // pred_fallthru
      _
    // Predicated region
    $region86: #{tpu_custom_call.1} parent=1 // pred_check
      _
    $region87: #{tpu_custom_call.1} parent=1 // pred_check_branch
      %3151 = sbr.rel (0) target = $region89
    $region88: #{tpu_custom_call.1} parent=1 // pred_region
      %3153 = dma.done [#allocation18], 49152
    $region89: #{tpu_custom_call.1} parent=1 // pred_fallthru
      _
    %3154 = vsyncpa [#allocation3], 1
    %3155 = vsyncpa [#allocation6], 1
    %3156 = vsyncpa [#allocation9], 1
    %3157 = vsyncpa [#allocation12], 1
    %3158 = vsyncpa [#allocation15], 1
    %3159 = vsyncpa [#allocation4], 1
    %3160 = vsyncpa [#allocation18], 1

</llo_original>
